<compile_context>
chip_gen: v7x
topology: tpu7x:2x2x1
jax: 0.10.0
libtpu: 0.0.40
codegen_flags: <defaults>
</compile_context>

<pallas_src>
import math

import jax
import jax.numpy as jnp
from jax.experimental import pallas as pl
from jax.experimental.pallas import tpu as pltpu

PATCH_SIZE = 8
# TODO(synk): deterministic stand-ins for the module's random.choice of the
# smoothing factor and the Canny thresholds.
SMOOTH_FACTOR = 3            # random.choice([1, 3, 5, 7])
CANNY_LOW = 50               # random.choice(range(50, 100))
CANNY_HIGH = CANNY_LOW + 50  # self.canny = [c, c + 50]

PAD = SMOOTH_FACTOR // 2 + 1   # blur halo + Sobel halo, rows/cols each side
HALO_ROWS = 2 * PAD            # extra bottom rows a row tile needs
HALO_BLOCK = 16                # sublane-aligned (bf16) halo block, >= HALO_ROWS
assert HALO_ROWS <= HALO_BLOCK


def _round_up(x, m):
    return (x + m - 1) // m * m


def _gaussian_kernel_1d(ksize):
    """OpenCV-style 1D Gaussian weights (sigma derived from ksize, sigma=0)."""
    sigma = 0.3 * ((ksize - 1) * 0.5 - 1) + 0.8
    half = (ksize - 1) / 2.0
    xs = [i - half for i in range(ksize)]
    w = [math.exp(-(x * x) / (2.0 * sigma * sigma)) for x in xs]
    s = sum(w)
    return [v / s for v in w]


GAUSS_W = _gaussian_kernel_1d(SMOOTH_FACTOR)


def _separable_blur(x, w):
    """Separable Gaussian blur, 'valid' conv, exploiting kernel symmetry.

    Symmetric taps are paired as w[d]*(left + right) to save one vmul per tap
    pair per pass (v6e/v7x have no f32 FMA), per the perf review.
    """
    k = len(w)
    c = k // 2
    bw = x.shape[1] - (k - 1)
    tmp = w[c] * x[:, c:c + bw]
    for d in range(c):
        tmp = tmp + w[d] * (x[:, d:d + bw] + x[:, k - 1 - d:k - 1 - d + bw])
    bh = x.shape[0] - (k - 1)
    blur = w[c] * tmp[c:c + bh, :]
    for d in range(c):
        blur = blur + w[d] * (tmp[d:d + bh, :] + tmp[k - 1 - d:k - 1 - d + bh, :])
    return blur


def _blur_sobel_edges(x):
    """Gaussian blur -> separable Sobel -> L1 magnitude -> high threshold.

    x: (R, C) f32 plane, reflect-padded by PAD on each side of the valid
    region.  Returns (R - 2*PAD, C - 2*PAD) int32 edge map (0 / 255).
    Shared by the Pallas kernel body and the plain-JAX reference check.
    """
    blur = _separable_blur(x, GAUSS_W)
    # Separable Sobel 3x3 ('valid'); 2*x written as x + x (no f32 FMA on VPU).
    dxh = blur[:, 2:] - blur[:, :-2]                                  # [-1,0,1] horiz
    gx = (dxh[:-2, :] + dxh[2:, :]) + (dxh[1:-1, :] + dxh[1:-1, :])   # [ 1,2,1] vert
    syh = (blur[:, :-2] + blur[:, 2:]) + (blur[:, 1:-1] + blur[:, 1:-1])
    gy = syh[2:, :] - syh[:-2, :]                                     # [-1,0,1] vert
    mag = jnp.abs(gx) + jnp.abs(gy)   # cv2.Canny default L1 gradient norm
    # TODO(synk): full Canny non-max suppression + hysteresis tracking is a
    # data-dependent flood fill with no clean Pallas equivalent; a single high
    # threshold on the gradient magnitude is used instead.
    return jnp.where(mag > float(CANNY_HIGH), 255, 0)


# ----------------------------------------------------------------------------
# Kernel: blur + edge detection on one row block of the padded gray plane
# ----------------------------------------------------------------------------
def edge_kernel(body_ref, halo_ref, out_ref):
    # body_ref: (TH, WP) bf16        padded-gray rows [i*TH, (i+1)*TH)
    # halo_ref: (HALO_BLOCK, WP) bf16 padded-gray rows [(i+1)*TH, (i+1)*TH+16)
    # out_ref:  (TH, W) uint8
    th = out_ref.shape[0]
    w_out = out_ref.shape[1]
    # Tile-aligned concat (TH % 32 == 0, HALO_BLOCK == 16): the bottom halo is
    # appended whole; the few extra rows/cols of compute are discarded below.
    x = jnp.concatenate([body_ref[...], halo_ref[...]], axis=0).astype(jnp.float32)
    # TODO(synk): optional v7x/v6e follow-up: offload the separable conv passes
    # to the idle MXU via small banded shift-and-weight matmuls.
    edges = _blur_sobel_edges(x)                 # (TH + HALO_BLOCK - 2*PAD, WP - 2*PAD)
    out_ref[...] = edges[:th, :w_out].astype(jnp.uint8)


def _padded_gray(img_hwc):
    """BGR-luma grayscale, reflect-padded by PAD, stored as bf16."""
    x = img_hwc.astype(jnp.float32)
    # OpenCV arrays are BGR: channel 0 = blue (0.114), 1 = green, 2 = red.
    gray = 0.114 * x[..., 0] + 0.587 * x[..., 1] + 0.299 * x[..., 2]
    gp = jnp.pad(gray, ((PAD, PAD), (PAD, PAD)), mode="reflect")
    return gp.astype(jnp.bfloat16)


def _choose_tile_rows(height, width, vmem_budget_bytes):
    """Largest 32-aligned row tile dividing H that fits the VMEM budget.

    Working set per row ~= 2 double-buffered bf16 input rows + 2 uint8 output
    rows + ~7 live f32 intermediate planes of width wp.  Prefers an even tile
    count (keeps both v7x TensorCores busy) when multiple tiles are needed.
    """
    wp = _round_up(width + 2 * PAD, 128)
    bytes_per_row = 2 * 2 * wp + 2 * width + 7 * 4 * wp
    max_rows = max(32, (vmem_budget_bytes // bytes_per_row) // 32 * 32)
    if height <= max_rows:
        return height
    best_odd = None
    for th in range(max_rows, 31, -32):
        if height % th == 0:
            if (height // th) % 2 == 0:
                return th
            if best_odd is None:
                best_odd = th
    return best_odd if best_odd is not None else height


def compute_edges(img_hwc, tile_rows=None, vmem_budget_bytes=40 * 1024 * 1024):
    H, W, _ = img_hwc.shape
    assert H % 32 == 0, "TODO(synk): ragged heights need a padded final tile"
    th = tile_rows if tile_rows is not None else _choose_tile_rows(H, W, vmem_budget_bytes)
    assert H % th == 0 and th % 32 == 0, (H, th)
    n_tiles = H // th

    wp = _round_up(W + 2 * PAD, 128)      # lane-dense (multiple-of-128) row width
    gp = _padded_gray(img_hwc)            # (H + 2*PAD, W + 2*PAD) bf16
    # Zero-fill to the lane multiple on the right and to a full halo block at
    # the bottom; the filler is read but never influences emitted pixels.
    plane = jnp.pad(gp, ((0, HALO_BLOCK - 2 * PAD), (0, wp - (W + 2 * PAD))))
    # plane: (H + HALO_BLOCK, wp) bf16 -- fed directly to pallas_call, no
    # materialized overlapping strips.

    return pl.pallas_call(
        edge_kernel,
        out_shape=jax.ShapeDtypeStruct((H, W), jnp.uint8),
        grid=(n_tiles,),
        in_specs=[
            # Non-overlapping row block i (the top halo is already folded in by
            # the global +PAD row shift of the padded plane).
            pl.BlockSpec((th, wp), lambda i: (i, 0)),
            # Sublane-aligned bottom-halo block starting at row (i+1)*th of the
            # same plane (same operand passed twice).
            pl.BlockSpec((HALO_BLOCK, wp),
                         lambda i: ((i + 1) * (th // HALO_BLOCK), 0)),
        ],
        out_specs=pl.BlockSpec((th, W), lambda i: (i, 0)),
        compiler_params=pltpu.CompilerParams(
            # Row tiles are independent: shard across v7x's 2 TensorCores
            # (harmless no-op on single-core v5e/v6e).
            dimension_semantics=("parallel",),
            # Tiles are sized against ~40 MiB; 48 MiB stays under v7x's 64 MiB
            # physical VMEM while overriding the 16/32 MiB scoped defaults on
            # v5e/v6e (raise vmem_budget_bytes there for even larger tiles).
            vmem_limit_bytes=48 * 1024 * 1024,
        ),
    )(plane, plane)


def _edges_reference(img_hwc):
    """Plain-JAX reference with identical math (used only by the self-check)."""
    gp = _padded_gray(img_hwc).astype(jnp.float32)
    return _blur_sobel_edges(gp).astype(jnp.uint8)


# ----------------------------------------------------------------------------
# Patch serialization (pure data movement -> plain JAX, per perf review)
# ----------------------------------------------------------------------------
def serialize_patches(x, patch_size):
    """Raster-order stand-in for FixedQuadTree.serialize + np.reshape."""
    H, W, C = x.shape
    ps = patch_size
    nH, nW = H // ps, W // ps
    patches = (
        x.reshape(nH, ps, nW, ps, C)
        .transpose(0, 2, 1, 3, 4)          # (nH, nW, ps, ps, C), raster patch order
        .reshape(nH * nW, ps, ps, C)
    )
    # identical to np.reshape(np.asarray(list_of_patches), [patch_size, -1, C])
    return patches.reshape(ps, -1, C)


# ----------------------------------------------------------------------------
# Forward pass equivalent of Patchify.forward(img, target)
# ----------------------------------------------------------------------------
def patchify_forward(img, target, patch_size=PATCH_SIZE):
    edges = compute_edges(img)
    # TODO(synk): FixedQuadTree adaptive subdivision (data-dependent recursion
    # over edge density) and cv2.resize of variable-size quadtree cells have no
    # Pallas equivalent; patches are serialized in uniform raster order at
    # patch_size.  The edge map that would have seeded the quadtree is returned
    # in place of the qdt object.
    seq_img = serialize_patches(img, patch_size)
    seq_mask = serialize_patches(target, patch_size)
    return seq_img, seq_mask, edges


if __name__ == "__main__":
    key = jax.random.PRNGKey(0)
    k_img, k_msk = jax.random.split(key)

    H, W = 256, 256
    img = jax.random.uniform(k_img, (H, W, 3), jnp.float32, 0.0, 255.0)
    target = (jax.random.uniform(k_msk, (H, W, 1), jnp.float32) > 0.5).astype(
        jnp.float32
    ) * 255.0

    fwd = jax.jit(patchify_forward)
    seq_img, seq_mask, edges = fwd(img, target)
    jax.block_until_ready((seq_img, seq_mask, edges))

    ps = PATCH_SIZE
    nH, nW = H // ps, W // ps
    n_patches = nH * nW
    assert seq_img.shape == (ps, n_patches * ps, 3), seq_img.shape
    assert seq_mask.shape == (ps, n_patches * ps, 1), seq_mask.shape
    assert edges.shape == (H, W) and edges.dtype == jnp.uint8, (edges.shape, edges.dtype)

    # Edge-kernel self-check against identical plain-JAX math.
    ref_edges = _edges_reference(img)
    mismatch = float(jnp.mean((edges != ref_edges).astype(jnp.float32)))
    assert mismatch < 1e-3, f"edge mismatch fraction {mismatch}"

    # Multi-tile path (halo BlockSpec, 4 tiles) with an explicit small row tile.
    edges_tiled = jax.jit(lambda x: compute_edges(x, tile_rows=64))(img)
    jax.block_until_ready(edges_tiled)
    mismatch_t = float(jnp.mean((edges_tiled != ref_edges).astype(jnp.float32)))
    assert mismatch_t < 1e-3, f"tiled edge mismatch fraction {mismatch_t}"

    # Patch-serialization self-check on a few patches.
    patches = seq_img.reshape(n_patches, ps, ps, 3)
    for p in (0, 1, nW, n_patches - 1):
        r, c = p // nW, p % nW
        expected = img[r * ps:(r + 1) * ps, c * ps:(c + 1) * ps, :]
        assert bool(jnp.array_equal(patches[p], expected)), p

    print("KERNEL_OK")
</pallas_src>

<mosaic_0001>
module attributes {stable_mosaic.version = 11 : i64} {
  func.func @edge_kernel(%arg0: i32, %arg1: memref<256x384xbf16, #tpu.memory_space<vmem>>, %arg2: memref<16x384xbf16, #tpu.memory_space<vmem>>, %arg3: memref<256x256xi8, #tpu.memory_space<vmem>>) attributes {dimension_semantics = [#tpu.dimension_semantics<parallel>], iteration_bounds = array<i64: 1>, scalar_prefetch = 0 : i64, scratch_operands = 0 : i64, tpu.core_type = #tpu.core_type<tc>, window_params = [{transform_indices = @transform_0, window_bounds = array<i64: 256, 384>}, {transform_indices = @transform_1, window_bounds = array<i64: 16, 384>}, {transform_indices = @transform_2, window_bounds = array<i64: 256, 256>}]} {
    %c0 = arith.constant 0 : index
    %c0_0 = arith.constant 0 : index
    %0 = vector.load %arg1[%c0, %c0_0] : memref<256x384xbf16, #tpu.memory_space<vmem>>, vector<256x384xbf16>
    %c0_1 = arith.constant 0 : index
    %c0_2 = arith.constant 0 : index
    %1 = vector.load %arg2[%c0_1, %c0_2] : memref<16x384xbf16, #tpu.memory_space<vmem>>, vector<16x384xbf16>
    %2 = tpu.concatenate %0, %1 in 0 : vector<256x384xbf16>, vector<16x384xbf16> -> vector<272x384xbf16>
    %3 = arith.extf %2 : vector<272x384xbf16> to vector<272x384xf32>
    %4 = vector.extract_strided_slice %3 {offsets = [0, 1], sizes = [272, 382], strides = [1, 1]} : vector<272x384xf32> to vector<272x382xf32>
    %cst = arith.constant 0.522011459 : f32
    %5 = vector.broadcast %cst : f32 to vector<272x382xf32>
    %6 = arith.mulf %5, %4 : vector<272x382xf32>
    %7 = vector.extract_strided_slice %3 {offsets = [0, 0], sizes = [272, 382], strides = [1, 1]} : vector<272x384xf32> to vector<272x382xf32>
    %8 = vector.extract_strided_slice %3 {offsets = [0, 2], sizes = [272, 382], strides = [1, 1]} : vector<272x384xf32> to vector<272x382xf32>
    %9 = arith.addf %7, %8 : vector<272x382xf32>
    %cst_3 = arith.constant 0.238994271 : f32
    %10 = vector.broadcast %cst_3 : f32 to vector<272x382xf32>
    %11 = arith.mulf %10, %9 : vector<272x382xf32>
    %12 = arith.addf %6, %11 : vector<272x382xf32>
    %13 = vector.extract_strided_slice %12 {offsets = [1, 0], sizes = [270, 382], strides = [1, 1]} : vector<272x382xf32> to vector<270x382xf32>
    %cst_4 = arith.constant 0.522011459 : f32
    %14 = vector.broadcast %cst_4 : f32 to vector<270x382xf32>
    %15 = arith.mulf %14, %13 : vector<270x382xf32>
    %16 = vector.extract_strided_slice %12 {offsets = [0, 0], sizes = [270, 382], strides = [1, 1]} : vector<272x382xf32> to vector<270x382xf32>
    %17 = vector.extract_strided_slice %12 {offsets = [2, 0], sizes = [270, 382], strides = [1, 1]} : vector<272x382xf32> to vector<270x382xf32>
    %18 = arith.addf %16, %17 : vector<270x382xf32>
    %cst_5 = arith.constant 0.238994271 : f32
    %19 = vector.broadcast %cst_5 : f32 to vector<270x382xf32>
    %20 = arith.mulf %19, %18 : vector<270x382xf32>
    %21 = arith.addf %15, %20 : vector<270x382xf32>
    %22 = vector.extract_strided_slice %21 {offsets = [0, 2], sizes = [270, 380], strides = [1, 1]} : vector<270x382xf32> to vector<270x380xf32>
    %23 = vector.extract_strided_slice %21 {offsets = [0, 0], sizes = [270, 380], strides = [1, 1]} : vector<270x382xf32> to vector<270x380xf32>
    %24 = arith.subf %22, %23 : vector<270x380xf32>
    %25 = vector.extract_strided_slice %24 {offsets = [0, 0], sizes = [268, 380], strides = [1, 1]} : vector<270x380xf32> to vector<268x380xf32>
    %26 = vector.extract_strided_slice %24 {offsets = [2, 0], sizes = [268, 380], strides = [1, 1]} : vector<270x380xf32> to vector<268x380xf32>
    %27 = arith.addf %25, %26 : vector<268x380xf32>
    %28 = vector.extract_strided_slice %24 {offsets = [1, 0], sizes = [268, 380], strides = [1, 1]} : vector<270x380xf32> to vector<268x380xf32>
    %29 = vector.extract_strided_slice %24 {offsets = [1, 0], sizes = [268, 380], strides = [1, 1]} : vector<270x380xf32> to vector<268x380xf32>
    %30 = arith.addf %28, %29 : vector<268x380xf32>
    %31 = arith.addf %27, %30 : vector<268x380xf32>
    %32 = vector.extract_strided_slice %21 {offsets = [0, 0], sizes = [270, 380], strides = [1, 1]} : vector<270x382xf32> to vector<270x380xf32>
    %33 = vector.extract_strided_slice %21 {offsets = [0, 2], sizes = [270, 380], strides = [1, 1]} : vector<270x382xf32> to vector<270x380xf32>
    %34 = arith.addf %32, %33 : vector<270x380xf32>
    %35 = vector.extract_strided_slice %21 {offsets = [0, 1], sizes = [270, 380], strides = [1, 1]} : vector<270x382xf32> to vector<270x380xf32>
    %36 = vector.extract_strided_slice %21 {offsets = [0, 1], sizes = [270, 380], strides = [1, 1]} : vector<270x382xf32> to vector<270x380xf32>
    %37 = arith.addf %35, %36 : vector<270x380xf32>
    %38 = arith.addf %34, %37 : vector<270x380xf32>
    %39 = vector.extract_strided_slice %38 {offsets = [2, 0], sizes = [268, 380], strides = [1, 1]} : vector<270x380xf32> to vector<268x380xf32>
    %40 = vector.extract_strided_slice %38 {offsets = [0, 0], sizes = [268, 380], strides = [1, 1]} : vector<270x380xf32> to vector<268x380xf32>
    %41 = arith.subf %39, %40 : vector<268x380xf32>
    %42 = math.absf %31 : vector<268x380xf32>
    %43 = math.absf %41 : vector<268x380xf32>
    %44 = arith.addf %42, %43 : vector<268x380xf32>
    %cst_6 = arith.constant 1.000000e+02 : f32
    %45 = vector.broadcast %cst_6 : f32 to vector<268x380xf32>
    %46 = arith.cmpf ogt, %44, %45 : vector<268x380xf32>
    %c255_i32 = arith.constant 255 : i32
    %c0_i32 = arith.constant 0 : i32
    %47 = vector.broadcast %c255_i32 : i32 to vector<268x380xi32>
    %48 = vector.broadcast %c0_i32 : i32 to vector<268x380xi32>
    %49 = arith.select %46, %47, %48 : vector<268x380xi1>, vector<268x380xi32>
    %50 = vector.extract_strided_slice %49 {offsets = [0, 0], sizes = [256, 256], strides = [1, 1]} : vector<268x380xi32> to vector<256x256xi32>
    %51 = arith.trunci %50 : vector<256x256xi32> to vector<256x256xi8>
    %c0_7 = arith.constant 0 : index
    %c0_8 = arith.constant 0 : index
    %52 = vector.load %arg3[%c0_7, %c0_8] : memref<256x256xi8, #tpu.memory_space<vmem>>, vector<256x256xi8>
    tpu.vector_store %arg3[%c0_7, %c0_8], %51 {strides = array<i32>} : memref<256x256xi8, #tpu.memory_space<vmem>>, vector<256x256xi8>,
    return
  }
  func.func @transform_0(%arg0: i32) -> (i32, i32) {
    %c0_i32 = arith.constant 0 : i32
    %c0_i32_0 = arith.constant 0 : i32
    return %arg0, %c0_i32 : i32, i32
  }
  func.func @transform_1(%arg0: i32) -> (i32, i32) {
    %c1_i32 = arith.constant 1 : i32
    %0 = arith.addi %arg0, %c1_i32 : i32
    %c16_i32 = arith.constant 16 : i32
    %1 = arith.muli %0, %c16_i32 : i32
    %c0_i32 = arith.constant 0 : i32
    %c0_i32_0 = arith.constant 0 : i32
    return %1, %c0_i32 : i32, i32
  }
  func.func @transform_2(%arg0: i32) -> (i32, i32) {
    %c0_i32 = arith.constant 0 : i32
    %c0_i32_0 = arith.constant 0 : i32
    return %arg0, %c0_i32 : i32, i32
  }
}

</mosaic_0001>

<llo_original>
// kernel: patchify_forward.1
$region0: #{patchify_forward.1}
  #allocation0 [shape = 'u32[]', space=smem, size = 0x4, offset = 0x4, fixed_abs, tag = 'smem constant byte address 0x4 - core index']
  #allocation1 [shape = 'u32[144,128]{1,0:T(1,128)}', space=vmem, size = 0x12000, scoped, tag = 'internal scratch']
  %s0 = inlined_call_operand.vmem [shape: bf16[272,384], index: 0, kind: input, shape index: {}, may-alias: {0,1}]
  %s1 = inlined_call_operand.vmem [shape: bf16[272,384], index: 1, kind: input, shape index: {}, may-alias: {0,1}]
  %s2 = inlined_call_operand.hbm [shape: u8[256,256], index: 2, kind: output, shape index: {}]
  %s3 = sld [smem:[#allocation0]]
  $region18: #{patchify_forward.1} parent=0
    _
  %s5 = ssub.s32 1, %s3
  %s6 = scalar_select 0, %s5, %s3
  $region1: #{patchify_forward.1} parent=0
    #allocation2 [shape = 'u8[65536]{0}', space=vmem, size = 0x10000, scoped, tag = 'output window, operand 0, single buffered']
    #allocation3 [shape = 's32[1]{0}', space=sflag, size = 0x4, scoped, tag = 'scoped memory for patchify_forward.1']
    %7 = vsyncpa [#allocation3], 0
    // Predicated region
    $region2: #{patchify_forward.1} parent=1 // pred_check
      _
    $region3: #{patchify_forward.1} parent=1 // pred_check_branch
      %9 = sbr.rel (0) target = $region5
    $region4: #{patchify_forward.1} parent=1 // pred_region
      _
    $region5: #{patchify_forward.1} parent=1 // pred_fallthru
      _
    // Predicated region
    $region6: #{patchify_forward.1} parent=1 // pred_check
      _
    $region7: #{patchify_forward.1} parent=1 // pred_check_branch
      %11 = sbr.rel (0) target = $region9
    $region8: #{patchify_forward.1} parent=1 // pred_region
      %s12 = sadd.s32 0, 1
      %s13 = smul.u32 %s12, 16
      %s14 = smul.u32 2, %s13
      %p15 = scmp.lt.s32.totalorder %s14, 33
      %s16 = scalar_select %p15, %s14, 33
      %s17 = smul.addr %s16, 3
      %s18 = smul.addr %s17, 4
      %s19 = scalar_lea.vmem %s1, %s18
      %s20 = sadd.s32 0, 1
      %s21 = smul.u32 %s20, 16
      %s22 = smul.u32 2, %s21
    $region9: #{patchify_forward.1} parent=1 // pred_fallthru
      _
    %s23 = sadd.s32 0, 1
    %s24 = smul.u32 %s23, 16
    %s25 = smul.u32 2, %s24
    %p26 = scmp.lt.s32.totalorder %s25, 33
    %s27 = scalar_select %p26, %s25, 33
    %s28 = smul.addr %s27, 3
    %s29 = smul.addr %s28, 4
    %s30 = scalar_lea.vmem %s1, %s29
    %s31 = sadd.s32 0, 1
    %s32 = smul.u32 %s31, 16
    %s33 = smul.u32 2, %s32
    %p34 = scmp.lt.s32.totalorder %s33, 33
    %s35 = scalar_select %p34, %s33, 33
    %s36 = smul.addr %s35, 3
    %s37 = smul.addr %s36, 4
    %s38 = scalar_lea.vmem %s1, %s37
    %s39 = sadd.s32 0, 1
    %s40 = smul.u32 %s39, 16
    %s41 = smul.u32 2, %s40
    %v42 = vld [vmem:[%s0] sm:$0xff]
    %v43 = vld [vmem:[%s0 + $0x8] sm:$0xf]
    %v44 = vld [vmem:[%s0 + $0xc] sm:$0xff]
    %v45 = vld [vmem:[%s0 + $0x14] sm:$0xf]
    %v46 = vld [vmem:[%s0 + $0x18] sm:$0xff]
    %v47 = vld [vmem:[%s0 + $0x20] sm:$0xf]
    %v48 = vld [vmem:[%s0 + $0x24] sm:$0xff]
    %v49 = vld [vmem:[%s0 + $0x2c] sm:$0xf]
    %v50 = vld [vmem:[%s0 + $0x30] sm:$0xff]
    %v51 = vld [vmem:[%s0 + $0x38] sm:$0xf]
    %v52 = vld [vmem:[%s0 + $0x3c] sm:$0xff]
    %v53 = vld [vmem:[%s0 + $0x44] sm:$0xf]
    %v54 = vld [vmem:[%s0 + $0x48] sm:$0xff]
    %v55 = vld [vmem:[%s0 + $0x50] sm:$0xf]
    %v56 = vld [vmem:[%s0 + $0x54] sm:$0xff]
    %v57 = vld [vmem:[%s0 + $0x5c] sm:$0xf]
    %v58 = vld [vmem:[%s0 + $0x60] sm:$0xff]
    %v59 = vld [vmem:[%s0 + $0x68] sm:$0xf]
    %v60 = vld [vmem:[%s0 + $0x6c] sm:$0xff]
    %v61 = vld [vmem:[%s0 + $0x74] sm:$0xf]
    %v62 = vld [vmem:[%s0 + $0x78] sm:$0xff]
    %v63 = vld [vmem:[%s0 + $0x80] sm:$0xf]
    %v64 = vld [vmem:[%s0 + $0x84] sm:$0xff]
    %v65 = vld [vmem:[%s0 + $0x8c] sm:$0xf]
    %v66 = vld [vmem:[%s0 + $0x90] sm:$0xff]
    %v67 = vld [vmem:[%s0 + $0x98] sm:$0xf]
    %v68 = vld [vmem:[%s0 + $0x9c] sm:$0xff]
    %v69 = vld [vmem:[%s0 + $0xa4] sm:$0xf]
    %v70 = vld [vmem:[%s0 + $0xa8] sm:$0xff]
    %v71 = vld [vmem:[%s0 + $0xb0] sm:$0xf]
    %v72 = vld [vmem:[%s0 + $0xb4] sm:$0xff]
    %v73 = vld [vmem:[%s0 + $0xbc] sm:$0xf]
    %v74 = vld [vmem:[%s0 + $0xc0] sm:$0xff]
    %v75 = vld [vmem:[%s0 + $0xc8] sm:$0xf]
    %v76 = vld [vmem:[%s0 + $0xcc] sm:$0xff]
    %v77 = vld [vmem:[%s0 + $0xd4] sm:$0xf]
    %v78 = vld [vmem:[%s0 + $0xd8] sm:$0xff]
    %v79 = vld [vmem:[%s0 + $0xe0] sm:$0xf]
    %v80 = vld [vmem:[%s0 + $0xe4] sm:$0xff]
    %v81 = vld [vmem:[%s0 + $0xec] sm:$0xf]
    %v82 = vld [vmem:[%s0 + $0xf0] sm:$0xff]
    %v83 = vld [vmem:[%s0 + $0xf8] sm:$0xf]
    %v84 = vld [vmem:[%s0 + $0xfc] sm:$0xff]
    %v85 = vld [vmem:[%s0 + $0x104] sm:$0xf]
    %v86 = vld [vmem:[%s0 + $0x108] sm:$0xff]
    %v87 = vld [vmem:[%s0 + $0x110] sm:$0xf]
    %v88 = vld [vmem:[%s0 + $0x114] sm:$0xff]
    %v89 = vld [vmem:[%s0 + $0x11c] sm:$0xf]
    %v90 = vld [vmem:[%s0 + $0x120] sm:$0xff]
    %v91 = vld [vmem:[%s0 + $0x128] sm:$0xf]
    %v92 = vld [vmem:[%s0 + $0x12c] sm:$0xff]
    %v93 = vld [vmem:[%s0 + $0x134] sm:$0xf]
    %v94 = vld [vmem:[%s0 + $0x138] sm:$0xff]
    %v95 = vld [vmem:[%s0 + $0x140] sm:$0xf]
    %v96 = vld [vmem:[%s0 + $0x144] sm:$0xff]
    %v97 = vld [vmem:[%s0 + $0x14c] sm:$0xf]
    %v98 = vld [vmem:[%s0 + $0x150] sm:$0xff]
    %v99 = vld [vmem:[%s0 + $0x158] sm:$0xf]
    %v100 = vld [vmem:[%s0 + $0x15c] sm:$0xff]
    %v101 = vld [vmem:[%s0 + $0x164] sm:$0xf]
    %v102 = vld [vmem:[%s0 + $0x168] sm:$0xff]
    %v103 = vld [vmem:[%s0 + $0x170] sm:$0xf]
    %v104 = vld [vmem:[%s0 + $0x174] sm:$0xff]
    %v105 = vld [vmem:[%s0 + $0x17c] sm:$0xf]
    %v106 = vld [vmem:[%s38] sm:$0xff]
    %v107 = vld [vmem:[%s38 + $0x8] sm:$0xf]
    %v108 = vld [vmem:[%s38 + $0xc] sm:$0xff]
    %v109 = vld [vmem:[%s38 + $0x14] sm:$0xf]
    %v174 = vunpack.c.l.b16 %v42
    %v175 = vunpack.c.h.b16 %v42
    %v176 = vunpack.c.l.b16 %v43
    %v177 = vunpack.c.l.b16 %v44
    %v178 = vunpack.c.h.b16 %v44
    %v179 = vunpack.c.l.b16 %v45
    %v180 = vunpack.c.l.b16 %v46
    %v181 = vunpack.c.h.b16 %v46
    %v182 = vunpack.c.l.b16 %v47
    %v183 = vunpack.c.l.b16 %v48
    %v184 = vunpack.c.h.b16 %v48
    %v185 = vunpack.c.l.b16 %v49
    %v186 = vunpack.c.l.b16 %v50
    %v187 = vunpack.c.h.b16 %v50
    %v188 = vunpack.c.l.b16 %v51
    %v189 = vunpack.c.l.b16 %v52
    %v190 = vunpack.c.h.b16 %v52
    %v191 = vunpack.c.l.b16 %v53
    %v192 = vunpack.c.l.b16 %v54
    %v193 = vunpack.c.h.b16 %v54
    %v194 = vunpack.c.l.b16 %v55
    %v195 = vunpack.c.l.b16 %v56
    %v196 = vunpack.c.h.b16 %v56
    %v197 = vunpack.c.l.b16 %v57
    %v198 = vunpack.c.l.b16 %v58
    %v199 = vunpack.c.h.b16 %v58
    %v200 = vunpack.c.l.b16 %v59
    %v201 = vunpack.c.l.b16 %v60
    %v202 = vunpack.c.h.b16 %v60
    %v203 = vunpack.c.l.b16 %v61
    %v204 = vunpack.c.l.b16 %v62
    %v205 = vunpack.c.h.b16 %v62
    %v206 = vunpack.c.l.b16 %v63
    %v207 = vunpack.c.l.b16 %v64
    %v208 = vunpack.c.h.b16 %v64
    %v209 = vunpack.c.l.b16 %v65
    %v210 = vunpack.c.l.b16 %v66
    %v211 = vunpack.c.h.b16 %v66
    %v212 = vunpack.c.l.b16 %v67
    %v213 = vunpack.c.l.b16 %v68
    %v214 = vunpack.c.h.b16 %v68
    %v215 = vunpack.c.l.b16 %v69
    %v216 = vunpack.c.l.b16 %v70
    %v217 = vunpack.c.h.b16 %v70
    %v218 = vunpack.c.l.b16 %v71
    %v219 = vunpack.c.l.b16 %v72
    %v220 = vunpack.c.h.b16 %v72
    %v221 = vunpack.c.l.b16 %v73
    %v222 = vunpack.c.l.b16 %v74
    %v223 = vunpack.c.h.b16 %v74
    %v224 = vunpack.c.l.b16 %v75
    %v225 = vunpack.c.l.b16 %v76
    %v226 = vunpack.c.h.b16 %v76
    %v227 = vunpack.c.l.b16 %v77
    %v228 = vunpack.c.l.b16 %v78
    %v229 = vunpack.c.h.b16 %v78
    %v230 = vunpack.c.l.b16 %v79
    %v231 = vunpack.c.l.b16 %v80
    %v232 = vunpack.c.h.b16 %v80
    %v233 = vunpack.c.l.b16 %v81
    %v234 = vunpack.c.l.b16 %v82
    %v235 = vunpack.c.h.b16 %v82
    %v236 = vunpack.c.l.b16 %v83
    %v237 = vunpack.c.l.b16 %v84
    %v238 = vunpack.c.h.b16 %v84
    %v239 = vunpack.c.l.b16 %v85
    %v240 = vunpack.c.l.b16 %v86
    %v241 = vunpack.c.h.b16 %v86
    %v242 = vunpack.c.l.b16 %v87
    %v243 = vunpack.c.l.b16 %v88
    %v244 = vunpack.c.h.b16 %v88
    %v245 = vunpack.c.l.b16 %v89
    %v246 = vunpack.c.l.b16 %v90
    %v247 = vunpack.c.h.b16 %v90
    %v248 = vunpack.c.l.b16 %v91
    %v249 = vunpack.c.l.b16 %v92
    %v250 = vunpack.c.h.b16 %v92
    %v251 = vunpack.c.l.b16 %v93
    %v252 = vunpack.c.l.b16 %v94
    %v253 = vunpack.c.h.b16 %v94
    %v254 = vunpack.c.l.b16 %v95
    %v255 = vunpack.c.l.b16 %v96
    %v256 = vunpack.c.h.b16 %v96
    %v257 = vunpack.c.l.b16 %v97
    %v258 = vunpack.c.l.b16 %v98
    %v259 = vunpack.c.h.b16 %v98
    %v260 = vunpack.c.l.b16 %v99
    %v261 = vunpack.c.l.b16 %v100
    %v262 = vunpack.c.h.b16 %v100
    %v263 = vunpack.c.l.b16 %v101
    %v264 = vunpack.c.l.b16 %v102
    %v265 = vunpack.c.h.b16 %v102
    %v266 = vunpack.c.l.b16 %v103
    %v267 = vunpack.c.l.b16 %v104
    %v268 = vunpack.c.h.b16 %v104
    %v269 = vunpack.c.l.b16 %v105
    %v270 = vpack.c.b16 %v177, %v174
    %v271 = vpack.c.b16 %v178, %v175
    %v272 = vpack.c.b16 %v179, %v176
    %v273 = vpack.c.b16 %v183, %v180
    %v274 = vpack.c.b16 %v184, %v181
    %v275 = vpack.c.b16 %v185, %v182
    %v276 = vpack.c.b16 %v189, %v186
    %v277 = vpack.c.b16 %v190, %v187
    %v278 = vpack.c.b16 %v191, %v188
    %v279 = vpack.c.b16 %v195, %v192
    %v280 = vpack.c.b16 %v196, %v193
    %v281 = vpack.c.b16 %v197, %v194
    %v282 = vpack.c.b16 %v201, %v198
    %v283 = vpack.c.b16 %v202, %v199
    %v284 = vpack.c.b16 %v203, %v200
    %v285 = vpack.c.b16 %v207, %v204
    %v286 = vpack.c.b16 %v208, %v205
    %v287 = vpack.c.b16 %v209, %v206
    %v288 = vpack.c.b16 %v213, %v210
    %v289 = vpack.c.b16 %v214, %v211
    %v290 = vpack.c.b16 %v215, %v212
    %v291 = vpack.c.b16 %v219, %v216
    %v292 = vpack.c.b16 %v220, %v217
    %v293 = vpack.c.b16 %v221, %v218
    %v294 = vpack.c.b16 %v225, %v222
    %v295 = vpack.c.b16 %v226, %v223
    %v296 = vpack.c.b16 %v227, %v224
    %v297 = vpack.c.b16 %v231, %v228
    %v298 = vpack.c.b16 %v232, %v229
    %v299 = vpack.c.b16 %v233, %v230
    %v300 = vpack.c.b16 %v237, %v234
    %v301 = vpack.c.b16 %v238, %v235
    %v302 = vpack.c.b16 %v239, %v236
    %v303 = vpack.c.b16 %v243, %v240
    %v304 = vpack.c.b16 %v244, %v241
    %v305 = vpack.c.b16 %v245, %v242
    %v306 = vpack.c.b16 %v249, %v246
    %v307 = vpack.c.b16 %v250, %v247
    %v308 = vpack.c.b16 %v251, %v248
    %v309 = vpack.c.b16 %v255, %v252
    %v310 = vpack.c.b16 %v256, %v253
    %v311 = vpack.c.b16 %v257, %v254
    %v312 = vpack.c.b16 %v261, %v258
    %v313 = vpack.c.b16 %v262, %v259
    %v314 = vpack.c.b16 %v263, %v260
    %v315 = vpack.c.b16 %v267, %v264
    %v316 = vpack.c.b16 %v268, %v265
    %v317 = vpack.c.b16 %v269, %v266
    %v370 = vunpack.c.l.b16 %v106
    %v371 = vunpack.c.h.b16 %v106
    %v372 = vunpack.c.l.b16 %v107
    %v373 = vunpack.c.l.b16 %v108
    %v374 = vunpack.c.h.b16 %v108
    %v375 = vunpack.c.l.b16 %v109
    %v376 = vpack.c.b16 %v373, %v370
    %v377 = vpack.c.b16 %v374, %v371
    %v378 = vpack.c.b16 %v375, %v372
    %v382 = vunpack.c.l.bf16 %v270
    %v383 = vunpack.c.l.bf16 %v271
    %v384 = vunpack.c.l.bf16 %v272
    %v385 = vunpack.c.h.bf16 %v270
    %v386 = vunpack.c.h.bf16 %v271
    %v387 = vunpack.c.h.bf16 %v272
    %v388 = vunpack.c.l.bf16 %v273
    %v389 = vunpack.c.l.bf16 %v274
    %v390 = vunpack.c.l.bf16 %v275
    %v391 = vunpack.c.h.bf16 %v273
    %v392 = vunpack.c.h.bf16 %v274
    %v393 = vunpack.c.h.bf16 %v275
    %v394 = vunpack.c.l.bf16 %v276
    %v395 = vunpack.c.l.bf16 %v277
    %v396 = vunpack.c.l.bf16 %v278
    %v397 = vunpack.c.h.bf16 %v276
    %v398 = vunpack.c.h.bf16 %v277
    %v399 = vunpack.c.h.bf16 %v278
    %v400 = vunpack.c.l.bf16 %v279
    %v401 = vunpack.c.l.bf16 %v280
    %v402 = vunpack.c.l.bf16 %v281
    %v403 = vunpack.c.h.bf16 %v279
    %v404 = vunpack.c.h.bf16 %v280
    %v405 = vunpack.c.h.bf16 %v281
    %v406 = vunpack.c.l.bf16 %v282
    %v407 = vunpack.c.l.bf16 %v283
    %v408 = vunpack.c.l.bf16 %v284
    %v409 = vunpack.c.h.bf16 %v282
    %v410 = vunpack.c.h.bf16 %v283
    %v411 = vunpack.c.h.bf16 %v284
    %v412 = vunpack.c.l.bf16 %v285
    %v413 = vunpack.c.l.bf16 %v286
    %v414 = vunpack.c.l.bf16 %v287
    %v415 = vunpack.c.h.bf16 %v285
    %v416 = vunpack.c.h.bf16 %v286
    %v417 = vunpack.c.h.bf16 %v287
    %v418 = vunpack.c.l.bf16 %v288
    %v419 = vunpack.c.l.bf16 %v289
    %v420 = vunpack.c.l.bf16 %v290
    %v421 = vunpack.c.h.bf16 %v288
    %v422 = vunpack.c.h.bf16 %v289
    %v423 = vunpack.c.h.bf16 %v290
    %v424 = vunpack.c.l.bf16 %v291
    %v425 = vunpack.c.l.bf16 %v292
    %v426 = vunpack.c.l.bf16 %v293
    %v427 = vunpack.c.h.bf16 %v291
    %v428 = vunpack.c.h.bf16 %v292
    %v429 = vunpack.c.h.bf16 %v293
    %v430 = vunpack.c.l.bf16 %v294
    %v431 = vunpack.c.l.bf16 %v295
    %v432 = vunpack.c.l.bf16 %v296
    %v433 = vunpack.c.h.bf16 %v294
    %v434 = vunpack.c.h.bf16 %v295
    %v435 = vunpack.c.h.bf16 %v296
    %v436 = vunpack.c.l.bf16 %v297
    %v437 = vunpack.c.l.bf16 %v298
    %v438 = vunpack.c.l.bf16 %v299
    %v439 = vunpack.c.h.bf16 %v297
    %v440 = vunpack.c.h.bf16 %v298
    %v441 = vunpack.c.h.bf16 %v299
    %v442 = vunpack.c.l.bf16 %v300
    %v443 = vunpack.c.l.bf16 %v301
    %v444 = vunpack.c.l.bf16 %v302
    %v445 = vunpack.c.h.bf16 %v300
    %v446 = vunpack.c.h.bf16 %v301
    %v447 = vunpack.c.h.bf16 %v302
    %v448 = vunpack.c.l.bf16 %v303
    %v449 = vunpack.c.l.bf16 %v304
    %v450 = vunpack.c.l.bf16 %v305
    %v451 = vunpack.c.h.bf16 %v303
    %v452 = vunpack.c.h.bf16 %v304
    %v453 = vunpack.c.h.bf16 %v305
    %v454 = vunpack.c.l.bf16 %v306
    %v455 = vunpack.c.l.bf16 %v307
    %v456 = vunpack.c.l.bf16 %v308
    %v457 = vunpack.c.h.bf16 %v306
    %v458 = vunpack.c.h.bf16 %v307
    %v459 = vunpack.c.h.bf16 %v308
    %v460 = vunpack.c.l.bf16 %v309
    %v461 = vunpack.c.l.bf16 %v310
    %v462 = vunpack.c.l.bf16 %v311
    %v463 = vunpack.c.h.bf16 %v309
    %v464 = vunpack.c.h.bf16 %v310
    %v465 = vunpack.c.h.bf16 %v311
    %v466 = vunpack.c.l.bf16 %v312
    %v467 = vunpack.c.l.bf16 %v313
    %v468 = vunpack.c.l.bf16 %v314
    %v469 = vunpack.c.h.bf16 %v312
    %v470 = vunpack.c.h.bf16 %v313
    %v471 = vunpack.c.h.bf16 %v314
    %v472 = vunpack.c.l.bf16 %v315
    %v473 = vunpack.c.l.bf16 %v316
    %v474 = vunpack.c.l.bf16 %v317
    %v475 = vunpack.c.h.bf16 %v315
    %v476 = vunpack.c.h.bf16 %v316
    %v477 = vunpack.c.h.bf16 %v317
    %v478 = vunpack.c.l.bf16 %v376
    %v479 = vunpack.c.l.bf16 %v377
    %v480 = vunpack.c.l.bf16 %v378
    %v481 = vunpack.c.h.bf16 %v376
    %v482 = vunpack.c.h.bf16 %v377
    %v483 = vunpack.c.h.bf16 %v378
    %v484 = vmul.f32 %v382, 0.52201146
    %v485 = vmul.f32 %v383, 0.52201146
    %v486 = vmul.f32 %v384, 0.52201146
    %v487 = vmul.f32 %v385, 0.52201146
    %v488 = vmul.f32 %v386, 0.52201146
    %v489 = vmul.f32 %v387, 0.52201146
    %v490 = vmul.f32 %v388, 0.52201146
    %v491 = vmul.f32 %v389, 0.52201146
    %v492 = vmul.f32 %v390, 0.52201146
    %v493 = vmul.f32 %v391, 0.52201146
    %v494 = vmul.f32 %v392, 0.52201146
    %v495 = vmul.f32 %v393, 0.52201146
    %v496 = vmul.f32 %v394, 0.52201146
    %v497 = vmul.f32 %v395, 0.52201146
    %v498 = vmul.f32 %v396, 0.52201146
    %v499 = vmul.f32 %v397, 0.52201146
    %v500 = vmul.f32 %v398, 0.52201146
    %v501 = vmul.f32 %v399, 0.52201146
    %v502 = vmul.f32 %v400, 0.52201146
    %v503 = vmul.f32 %v401, 0.52201146
    %v504 = vmul.f32 %v402, 0.52201146
    %v505 = vmul.f32 %v403, 0.52201146
    %v506 = vmul.f32 %v404, 0.52201146
    %v507 = vmul.f32 %v405, 0.52201146
    %v508 = vmul.f32 %v406, 0.52201146
    %v509 = vmul.f32 %v407, 0.52201146
    %v510 = vmul.f32 %v408, 0.52201146
    %v511 = vmul.f32 %v409, 0.52201146
    %v512 = vmul.f32 %v410, 0.52201146
    %v513 = vmul.f32 %v411, 0.52201146
    %v514 = vmul.f32 %v412, 0.52201146
    %v515 = vmul.f32 %v413, 0.52201146
    %v516 = vmul.f32 %v414, 0.52201146
    %v517 = vmul.f32 %v415, 0.52201146
    %v518 = vmul.f32 %v416, 0.52201146
    %v519 = vmul.f32 %v417, 0.52201146
    %v520 = vmul.f32 %v418, 0.52201146
    %v521 = vmul.f32 %v419, 0.52201146
    %v522 = vmul.f32 %v420, 0.52201146
    %v523 = vmul.f32 %v421, 0.52201146
    %v524 = vmul.f32 %v422, 0.52201146
    %v525 = vmul.f32 %v423, 0.52201146
    %v526 = vmul.f32 %v424, 0.52201146
    %v527 = vmul.f32 %v425, 0.52201146
    %v528 = vmul.f32 %v426, 0.52201146
    %v529 = vmul.f32 %v427, 0.52201146
    %v530 = vmul.f32 %v428, 0.52201146
    %v531 = vmul.f32 %v429, 0.52201146
    %v532 = vmul.f32 %v430, 0.52201146
    %v533 = vmul.f32 %v431, 0.52201146
    %v534 = vmul.f32 %v432, 0.52201146
    %v535 = vmul.f32 %v433, 0.52201146
    %v536 = vmul.f32 %v434, 0.52201146
    %v537 = vmul.f32 %v435, 0.52201146
    %v538 = vmul.f32 %v436, 0.52201146
    %v539 = vmul.f32 %v437, 0.52201146
    %v540 = vmul.f32 %v438, 0.52201146
    %v541 = vmul.f32 %v439, 0.52201146
    %v542 = vmul.f32 %v440, 0.52201146
    %v543 = vmul.f32 %v441, 0.52201146
    %v544 = vmul.f32 %v442, 0.52201146
    %v545 = vmul.f32 %v443, 0.52201146
    %v546 = vmul.f32 %v444, 0.52201146
    %v547 = vmul.f32 %v445, 0.52201146
    %v548 = vmul.f32 %v446, 0.52201146
    %v549 = vmul.f32 %v447, 0.52201146
    %v550 = vmul.f32 %v448, 0.52201146
    %v551 = vmul.f32 %v449, 0.52201146
    %v552 = vmul.f32 %v450, 0.52201146
    %v553 = vmul.f32 %v451, 0.52201146
    %v554 = vmul.f32 %v452, 0.52201146
    %v555 = vmul.f32 %v453, 0.52201146
    %v556 = vmul.f32 %v454, 0.52201146
    %v557 = vmul.f32 %v455, 0.52201146
    %v558 = vmul.f32 %v456, 0.52201146
    %v559 = vmul.f32 %v457, 0.52201146
    %v560 = vmul.f32 %v458, 0.52201146
    %v561 = vmul.f32 %v459, 0.52201146
    %v562 = vmul.f32 %v460, 0.52201146
    %v563 = vmul.f32 %v461, 0.52201146
    %v564 = vmul.f32 %v462, 0.52201146
    %v565 = vmul.f32 %v463, 0.52201146
    %v566 = vmul.f32 %v464, 0.52201146
    %v567 = vmul.f32 %v465, 0.52201146
    %v568 = vmul.f32 %v466, 0.52201146
    %v569 = vmul.f32 %v467, 0.52201146
    %v570 = vmul.f32 %v468, 0.52201146
    %v571 = vmul.f32 %v469, 0.52201146
    %v572 = vmul.f32 %v470, 0.52201146
    %v573 = vmul.f32 %v471, 0.52201146
    %v574 = vmul.f32 %v472, 0.52201146
    %v575 = vmul.f32 %v473, 0.52201146
    %v576 = vmul.f32 %v474, 0.52201146
    %v577 = vmul.f32 %v475, 0.52201146
    %v578 = vmul.f32 %v476, 0.52201146
    %v579 = vmul.f32 %v477, 0.52201146
    %v580 = vmul.f32 %v478, 0.52201146
    %v581 = vmul.f32 %v479, 0.52201146
    %v582 = vmul.f32 %v480, 0.52201146
    %v583 = vmul.f32 %v481, 0.52201146
    %v584 = vmul.f32 %v482, 0.52201146
    %v585 = vmul.f32 %v483, 0.52201146
    %688 = vrot.lane.b32.xlu0 %v382, 126
    %v689 = vpop.permute.xlu0 %688
    %690 = vrot.lane.b32.xlu0 %v383, 126
    %v691 = vpop.permute.xlu0 %690
    %692 = vrot.lane.b32.xlu0 %v384, 126
    %v693 = vpop.permute.xlu0 %692
    %694 = vrot.lane.b32.xlu0 %v385, 126
    %v695 = vpop.permute.xlu0 %694
    %696 = vrot.lane.b32.xlu0 %v386, 126
    %v697 = vpop.permute.xlu0 %696
    %698 = vrot.lane.b32.xlu0 %v387, 126
    %v699 = vpop.permute.xlu0 %698
    %700 = vrot.lane.b32.xlu0 %v388, 126
    %v701 = vpop.permute.xlu0 %700
    %702 = vrot.lane.b32.xlu0 %v389, 126
    %v703 = vpop.permute.xlu0 %702
    %704 = vrot.lane.b32.xlu0 %v390, 126
    %v705 = vpop.permute.xlu0 %704
    %706 = vrot.lane.b32.xlu0 %v391, 126
    %v707 = vpop.permute.xlu0 %706
    %708 = vrot.lane.b32.xlu0 %v392, 126
    %v709 = vpop.permute.xlu0 %708
    %710 = vrot.lane.b32.xlu0 %v393, 126
    %v711 = vpop.permute.xlu0 %710
    %712 = vrot.lane.b32.xlu0 %v394, 126
    %v713 = vpop.permute.xlu0 %712
    %714 = vrot.lane.b32.xlu0 %v395, 126
    %v715 = vpop.permute.xlu0 %714
    %716 = vrot.lane.b32.xlu0 %v396, 126
    %v717 = vpop.permute.xlu0 %716
    %718 = vrot.lane.b32.xlu0 %v397, 126
    %v719 = vpop.permute.xlu0 %718
    %720 = vrot.lane.b32.xlu0 %v398, 126
    %v721 = vpop.permute.xlu0 %720
    %722 = vrot.lane.b32.xlu0 %v399, 126
    %v723 = vpop.permute.xlu0 %722
    %724 = vrot.lane.b32.xlu0 %v400, 126
    %v725 = vpop.permute.xlu0 %724
    %726 = vrot.lane.b32.xlu0 %v401, 126
    %v727 = vpop.permute.xlu0 %726
    %728 = vrot.lane.b32.xlu0 %v402, 126
    %v729 = vpop.permute.xlu0 %728
    %730 = vrot.lane.b32.xlu0 %v403, 126
    %v731 = vpop.permute.xlu0 %730
    %732 = vrot.lane.b32.xlu0 %v404, 126
    %v733 = vpop.permute.xlu0 %732
    %734 = vrot.lane.b32.xlu0 %v405, 126
    %v735 = vpop.permute.xlu0 %734
    %736 = vrot.lane.b32.xlu0 %v406, 126
    %v737 = vpop.permute.xlu0 %736
    %738 = vrot.lane.b32.xlu0 %v407, 126
    %v739 = vpop.permute.xlu0 %738
    %740 = vrot.lane.b32.xlu0 %v408, 126
    %v741 = vpop.permute.xlu0 %740
    %742 = vrot.lane.b32.xlu0 %v409, 126
    %v743 = vpop.permute.xlu0 %742
    %744 = vrot.lane.b32.xlu0 %v410, 126
    %v745 = vpop.permute.xlu0 %744
    %746 = vrot.lane.b32.xlu0 %v411, 126
    %v747 = vpop.permute.xlu0 %746
    %748 = vrot.lane.b32.xlu0 %v412, 126
    %v749 = vpop.permute.xlu0 %748
    %750 = vrot.lane.b32.xlu0 %v413, 126
    %v751 = vpop.permute.xlu0 %750
    %752 = vrot.lane.b32.xlu0 %v414, 126
    %v753 = vpop.permute.xlu0 %752
    %754 = vrot.lane.b32.xlu0 %v415, 126
    %v755 = vpop.permute.xlu0 %754
    %756 = vrot.lane.b32.xlu0 %v416, 126
    %v757 = vpop.permute.xlu0 %756
    %758 = vrot.lane.b32.xlu0 %v417, 126
    %v759 = vpop.permute.xlu0 %758
    %760 = vrot.lane.b32.xlu0 %v418, 126
    %v761 = vpop.permute.xlu0 %760
    %762 = vrot.lane.b32.xlu0 %v419, 126
    %v763 = vpop.permute.xlu0 %762
    %764 = vrot.lane.b32.xlu0 %v420, 126
    %v765 = vpop.permute.xlu0 %764
    %766 = vrot.lane.b32.xlu0 %v421, 126
    %v767 = vpop.permute.xlu0 %766
    %768 = vrot.lane.b32.xlu0 %v422, 126
    %v769 = vpop.permute.xlu0 %768
    %770 = vrot.lane.b32.xlu0 %v423, 126
    %v771 = vpop.permute.xlu0 %770
    %772 = vrot.lane.b32.xlu0 %v424, 126
    %v773 = vpop.permute.xlu0 %772
    %774 = vrot.lane.b32.xlu0 %v425, 126
    %v775 = vpop.permute.xlu0 %774
    %776 = vrot.lane.b32.xlu0 %v426, 126
    %v777 = vpop.permute.xlu0 %776
    %778 = vrot.lane.b32.xlu0 %v427, 126
    %v779 = vpop.permute.xlu0 %778
    %780 = vrot.lane.b32.xlu0 %v428, 126
    %v781 = vpop.permute.xlu0 %780
    %782 = vrot.lane.b32.xlu0 %v429, 126
    %v783 = vpop.permute.xlu0 %782
    %784 = vrot.lane.b32.xlu0 %v430, 126
    %v785 = vpop.permute.xlu0 %784
    %786 = vrot.lane.b32.xlu0 %v431, 126
    %v787 = vpop.permute.xlu0 %786
    %788 = vrot.lane.b32.xlu0 %v432, 126
    %v789 = vpop.permute.xlu0 %788
    %790 = vrot.lane.b32.xlu0 %v433, 126
    %v791 = vpop.permute.xlu0 %790
    %792 = vrot.lane.b32.xlu0 %v434, 126
    %v793 = vpop.permute.xlu0 %792
    %794 = vrot.lane.b32.xlu0 %v435, 126
    %v795 = vpop.permute.xlu0 %794
    %796 = vrot.lane.b32.xlu0 %v436, 126
    %v797 = vpop.permute.xlu0 %796
    %798 = vrot.lane.b32.xlu0 %v437, 126
    %v799 = vpop.permute.xlu0 %798
    %800 = vrot.lane.b32.xlu0 %v438, 126
    %v801 = vpop.permute.xlu0 %800
    %802 = vrot.lane.b32.xlu0 %v439, 126
    %v803 = vpop.permute.xlu0 %802
    %804 = vrot.lane.b32.xlu0 %v440, 126
    %v805 = vpop.permute.xlu0 %804
    %806 = vrot.lane.b32.xlu0 %v441, 126
    %v807 = vpop.permute.xlu0 %806
    %808 = vrot.lane.b32.xlu0 %v442, 126
    %v809 = vpop.permute.xlu0 %808
    %810 = vrot.lane.b32.xlu0 %v443, 126
    %v811 = vpop.permute.xlu0 %810
    %812 = vrot.lane.b32.xlu0 %v444, 126
    %v813 = vpop.permute.xlu0 %812
    %814 = vrot.lane.b32.xlu0 %v445, 126
    %v815 = vpop.permute.xlu0 %814
    %816 = vrot.lane.b32.xlu0 %v446, 126
    %v817 = vpop.permute.xlu0 %816
    %818 = vrot.lane.b32.xlu0 %v447, 126
    %v819 = vpop.permute.xlu0 %818
    %820 = vrot.lane.b32.xlu0 %v448, 126
    %v821 = vpop.permute.xlu0 %820
    %822 = vrot.lane.b32.xlu0 %v449, 126
    %v823 = vpop.permute.xlu0 %822
    %824 = vrot.lane.b32.xlu0 %v450, 126
    %v825 = vpop.permute.xlu0 %824
    %826 = vrot.lane.b32.xlu0 %v451, 126
    %v827 = vpop.permute.xlu0 %826
    %828 = vrot.lane.b32.xlu0 %v452, 126
    %v829 = vpop.permute.xlu0 %828
    %830 = vrot.lane.b32.xlu0 %v453, 126
    %v831 = vpop.permute.xlu0 %830
    %832 = vrot.lane.b32.xlu0 %v454, 126
    %v833 = vpop.permute.xlu0 %832
    %834 = vrot.lane.b32.xlu0 %v455, 126
    %v835 = vpop.permute.xlu0 %834
    %836 = vrot.lane.b32.xlu0 %v456, 126
    %v837 = vpop.permute.xlu0 %836
    %838 = vrot.lane.b32.xlu0 %v457, 126
    %v839 = vpop.permute.xlu0 %838
    %840 = vrot.lane.b32.xlu0 %v458, 126
    %v841 = vpop.permute.xlu0 %840
    %842 = vrot.lane.b32.xlu0 %v459, 126
    %v843 = vpop.permute.xlu0 %842
    %844 = vrot.lane.b32.xlu0 %v460, 126
    %v845 = vpop.permute.xlu0 %844
    %846 = vrot.lane.b32.xlu0 %v461, 126
    %v847 = vpop.permute.xlu0 %846
    %848 = vrot.lane.b32.xlu0 %v462, 126
    %v849 = vpop.permute.xlu0 %848
    %850 = vrot.lane.b32.xlu0 %v463, 126
    %v851 = vpop.permute.xlu0 %850
    %852 = vrot.lane.b32.xlu0 %v464, 126
    %v853 = vpop.permute.xlu0 %852
    %854 = vrot.lane.b32.xlu0 %v465, 126
    %v855 = vpop.permute.xlu0 %854
    %856 = vrot.lane.b32.xlu0 %v466, 126
    %v857 = vpop.permute.xlu0 %856
    %858 = vrot.lane.b32.xlu0 %v467, 126
    %v859 = vpop.permute.xlu0 %858
    %860 = vrot.lane.b32.xlu0 %v468, 126
    %v861 = vpop.permute.xlu0 %860
    %862 = vrot.lane.b32.xlu0 %v469, 126
    %v863 = vpop.permute.xlu0 %862
    %864 = vrot.lane.b32.xlu0 %v470, 126
    %v865 = vpop.permute.xlu0 %864
    %866 = vrot.lane.b32.xlu0 %v471, 126
    %v867 = vpop.permute.xlu0 %866
    %868 = vrot.lane.b32.xlu0 %v472, 126
    %v869 = vpop.permute.xlu0 %868
    %870 = vrot.lane.b32.xlu0 %v473, 126
    %v871 = vpop.permute.xlu0 %870
    %872 = vrot.lane.b32.xlu0 %v474, 126
    %v873 = vpop.permute.xlu0 %872
    %874 = vrot.lane.b32.xlu0 %v475, 126
    %v875 = vpop.permute.xlu0 %874
    %876 = vrot.lane.b32.xlu0 %v476, 126
    %v877 = vpop.permute.xlu0 %876
    %878 = vrot.lane.b32.xlu0 %v477, 126
    %v879 = vpop.permute.xlu0 %878
    %880 = vrot.lane.b32.xlu0 %v478, 126
    %v881 = vpop.permute.xlu0 %880
    %882 = vrot.lane.b32.xlu0 %v479, 126
    %v883 = vpop.permute.xlu0 %882
    %884 = vrot.lane.b32.xlu0 %v480, 126
    %v885 = vpop.permute.xlu0 %884
    %886 = vrot.lane.b32.xlu0 %v481, 126
    %v887 = vpop.permute.xlu0 %886
    %888 = vrot.lane.b32.xlu0 %v482, 126
    %v889 = vpop.permute.xlu0 %888
    %890 = vrot.lane.b32.xlu0 %v483, 126
    %v891 = vpop.permute.xlu0 %890
    %vm892 = vcmask 1031168
    %v893 = vsel %vm892, %v689, %v691
    %v894 = vsel %vm892, %v691, %v693
    %v895 = vsel %vm892, %v695, %v697
    %v896 = vsel %vm892, %v697, %v699
    %v897 = vsel %vm892, %v701, %v703
    %v898 = vsel %vm892, %v703, %v705
    %v899 = vsel %vm892, %v707, %v709
    %v900 = vsel %vm892, %v709, %v711
    %v901 = vsel %vm892, %v713, %v715
    %v902 = vsel %vm892, %v715, %v717
    %v903 = vsel %vm892, %v719, %v721
    %v904 = vsel %vm892, %v721, %v723
    %v905 = vsel %vm892, %v725, %v727
    %v906 = vsel %vm892, %v727, %v729
    %v907 = vsel %vm892, %v731, %v733
    %v908 = vsel %vm892, %v733, %v735
    %v909 = vsel %vm892, %v737, %v739
    %v910 = vsel %vm892, %v739, %v741
    %v911 = vsel %vm892, %v743, %v745
    %v912 = vsel %vm892, %v745, %v747
    %v913 = vsel %vm892, %v749, %v751
    %v914 = vsel %vm892, %v751, %v753
    %v915 = vsel %vm892, %v755, %v757
    %v916 = vsel %vm892, %v757, %v759
    %v917 = vsel %vm892, %v761, %v763
    %v918 = vsel %vm892, %v763, %v765
    %v919 = vsel %vm892, %v767, %v769
    %v920 = vsel %vm892, %v769, %v771
    %v921 = vsel %vm892, %v773, %v775
    %v922 = vsel %vm892, %v775, %v777
    %v923 = vsel %vm892, %v779, %v781
    %v924 = vsel %vm892, %v781, %v783
    %v925 = vsel %vm892, %v785, %v787
    %v926 = vsel %vm892, %v787, %v789
    %v927 = vsel %vm892, %v791, %v793
    %v928 = vsel %vm892, %v793, %v795
    %v929 = vsel %vm892, %v797, %v799
    %v930 = vsel %vm892, %v799, %v801
    %v931 = vsel %vm892, %v803, %v805
    %v932 = vsel %vm892, %v805, %v807
    %v933 = vsel %vm892, %v809, %v811
    %v934 = vsel %vm892, %v811, %v813
    %v935 = vsel %vm892, %v815, %v817
    %v936 = vsel %vm892, %v817, %v819
    %v937 = vsel %vm892, %v821, %v823
    %v938 = vsel %vm892, %v823, %v825
    %v939 = vsel %vm892, %v827, %v829
    %v940 = vsel %vm892, %v829, %v831
    %v941 = vsel %vm892, %v833, %v835
    %v942 = vsel %vm892, %v835, %v837
    %v943 = vsel %vm892, %v839, %v841
    %v944 = vsel %vm892, %v841, %v843
    %v945 = vsel %vm892, %v845, %v847
    %v946 = vsel %vm892, %v847, %v849
    %v947 = vsel %vm892, %v851, %v853
    %v948 = vsel %vm892, %v853, %v855
    %v949 = vsel %vm892, %v857, %v859
    %v950 = vsel %vm892, %v859, %v861
    %v951 = vsel %vm892, %v863, %v865
    %v952 = vsel %vm892, %v865, %v867
    %v953 = vsel %vm892, %v869, %v871
    %v954 = vsel %vm892, %v871, %v873
    %v955 = vsel %vm892, %v875, %v877
    %v956 = vsel %vm892, %v877, %v879
    %v957 = vsel %vm892, %v881, %v883
    %v958 = vsel %vm892, %v883, %v885
    %v959 = vsel %vm892, %v887, %v889
    %v960 = vsel %vm892, %v889, %v891
    %v1063 = vadd.f32 %v382, %v893
    %v1064 = vadd.f32 %v383, %v894
    %v1065 = vadd.f32 %v384, %v693
    %v1066 = vadd.f32 %v385, %v895
    %v1067 = vadd.f32 %v386, %v896
    %v1068 = vadd.f32 %v387, %v699
    %v1069 = vadd.f32 %v388, %v897
    %v1070 = vadd.f32 %v389, %v898
    %v1071 = vadd.f32 %v390, %v705
    %v1072 = vadd.f32 %v391, %v899
    %v1073 = vadd.f32 %v392, %v900
    %v1074 = vadd.f32 %v393, %v711
    %v1075 = vadd.f32 %v394, %v901
    %v1076 = vadd.f32 %v395, %v902
    %v1077 = vadd.f32 %v396, %v717
    %v1078 = vadd.f32 %v397, %v903
    %v1079 = vadd.f32 %v398, %v904
    %v1080 = vadd.f32 %v399, %v723
    %v1081 = vadd.f32 %v400, %v905
    %v1082 = vadd.f32 %v401, %v906
    %v1083 = vadd.f32 %v402, %v729
    %v1084 = vadd.f32 %v403, %v907
    %v1085 = vadd.f32 %v404, %v908
    %v1086 = vadd.f32 %v405, %v735
    %v1087 = vadd.f32 %v406, %v909
    %v1088 = vadd.f32 %v407, %v910
    %v1089 = vadd.f32 %v408, %v741
    %v1090 = vadd.f32 %v409, %v911
    %v1091 = vadd.f32 %v410, %v912
    %v1092 = vadd.f32 %v411, %v747
    %v1093 = vadd.f32 %v412, %v913
    %v1094 = vadd.f32 %v413, %v914
    %v1095 = vadd.f32 %v414, %v753
    %v1096 = vadd.f32 %v415, %v915
    %v1097 = vadd.f32 %v416, %v916
    %v1098 = vadd.f32 %v417, %v759
    %v1099 = vadd.f32 %v418, %v917
    %v1100 = vadd.f32 %v419, %v918
    %v1101 = vadd.f32 %v420, %v765
    %v1102 = vadd.f32 %v421, %v919
    %v1103 = vadd.f32 %v422, %v920
    %v1104 = vadd.f32 %v423, %v771
    %v1105 = vadd.f32 %v424, %v921
    %v1106 = vadd.f32 %v425, %v922
    %v1107 = vadd.f32 %v426, %v777
    %v1108 = vadd.f32 %v427, %v923
    %v1109 = vadd.f32 %v428, %v924
    %v1110 = vadd.f32 %v429, %v783
    %v1111 = vadd.f32 %v430, %v925
    %v1112 = vadd.f32 %v431, %v926
    %v1113 = vadd.f32 %v432, %v789
    %v1114 = vadd.f32 %v433, %v927
    %v1115 = vadd.f32 %v434, %v928
    %v1116 = vadd.f32 %v435, %v795
    %v1117 = vadd.f32 %v436, %v929
    %v1118 = vadd.f32 %v437, %v930
    %v1119 = vadd.f32 %v438, %v801
    %v1120 = vadd.f32 %v439, %v931
    %v1121 = vadd.f32 %v440, %v932
    %v1122 = vadd.f32 %v441, %v807
    %v1123 = vadd.f32 %v442, %v933
    %v1124 = vadd.f32 %v443, %v934
    %v1125 = vadd.f32 %v444, %v813
    %v1126 = vadd.f32 %v445, %v935
    %v1127 = vadd.f32 %v446, %v936
    %v1128 = vadd.f32 %v447, %v819
    %v1129 = vadd.f32 %v448, %v937
    %v1130 = vadd.f32 %v449, %v938
    %v1131 = vadd.f32 %v450, %v825
    %v1132 = vadd.f32 %v451, %v939
    %v1133 = vadd.f32 %v452, %v940
    %v1134 = vadd.f32 %v453, %v831
    %v1135 = vadd.f32 %v454, %v941
    %v1136 = vadd.f32 %v455, %v942
    %v1137 = vadd.f32 %v456, %v837
    %v1138 = vadd.f32 %v457, %v943
    %v1139 = vadd.f32 %v458, %v944
    %v1140 = vadd.f32 %v459, %v843
    %v1141 = vadd.f32 %v460, %v945
    %v1142 = vadd.f32 %v461, %v946
    %v1143 = vadd.f32 %v462, %v849
    %v1144 = vadd.f32 %v463, %v947
    %v1145 = vadd.f32 %v464, %v948
    %v1146 = vadd.f32 %v465, %v855
    %v1147 = vadd.f32 %v466, %v949
    %v1148 = vadd.f32 %v467, %v950
    %v1149 = vadd.f32 %v468, %v861
    %v1150 = vadd.f32 %v469, %v951
    %v1151 = vadd.f32 %v470, %v952
    %v1152 = vadd.f32 %v471, %v867
    %v1153 = vadd.f32 %v472, %v953
    %v1154 = vadd.f32 %v473, %v954
    %v1155 = vadd.f32 %v474, %v873
    %v1156 = vadd.f32 %v475, %v955
    %v1157 = vadd.f32 %v476, %v956
    %v1158 = vadd.f32 %v477, %v879
    %v1159 = vadd.f32 %v478, %v957
    %v1160 = vadd.f32 %v479, %v958
    %v1161 = vadd.f32 %v480, %v885
    %v1162 = vadd.f32 %v481, %v959
    %v1163 = vadd.f32 %v482, %v960
    %v1164 = vadd.f32 %v483, %v891
    %v1165 = vmul.f32 %v1063, 0.23899427
    %v1166 = vmul.f32 %v1064, 0.23899427
    %v1167 = vmul.f32 %v1065, 0.23899427
    %v1168 = vmul.f32 %v1066, 0.23899427
    %v1169 = vmul.f32 %v1067, 0.23899427
    %v1170 = vmul.f32 %v1068, 0.23899427
    %v1171 = vmul.f32 %v1069, 0.23899427
    %v1172 = vmul.f32 %v1070, 0.23899427
    %v1173 = vmul.f32 %v1071, 0.23899427
    %v1174 = vmul.f32 %v1072, 0.23899427
    %v1175 = vmul.f32 %v1073, 0.23899427
    %v1176 = vmul.f32 %v1074, 0.23899427
    %v1177 = vmul.f32 %v1075, 0.23899427
    %v1178 = vmul.f32 %v1076, 0.23899427
    %v1179 = vmul.f32 %v1077, 0.23899427
    %v1180 = vmul.f32 %v1078, 0.23899427
    %v1181 = vmul.f32 %v1079, 0.23899427
    %v1182 = vmul.f32 %v1080, 0.23899427
    %v1183 = vmul.f32 %v1081, 0.23899427
    %v1184 = vmul.f32 %v1082, 0.23899427
    %v1185 = vmul.f32 %v1083, 0.23899427
    %v1186 = vmul.f32 %v1084, 0.23899427
    %v1187 = vmul.f32 %v1085, 0.23899427
    %v1188 = vmul.f32 %v1086, 0.23899427
    %v1189 = vmul.f32 %v1087, 0.23899427
    %v1190 = vmul.f32 %v1088, 0.23899427
    %v1191 = vmul.f32 %v1089, 0.23899427
    %v1192 = vmul.f32 %v1090, 0.23899427
    %v1193 = vmul.f32 %v1091, 0.23899427
    %v1194 = vmul.f32 %v1092, 0.23899427
    %v1195 = vmul.f32 %v1093, 0.23899427
    %v1196 = vmul.f32 %v1094, 0.23899427
    %v1197 = vmul.f32 %v1095, 0.23899427
    %v1198 = vmul.f32 %v1096, 0.23899427
    %v1199 = vmul.f32 %v1097, 0.23899427
    %v1200 = vmul.f32 %v1098, 0.23899427
    %v1201 = vmul.f32 %v1099, 0.23899427
    %v1202 = vmul.f32 %v1100, 0.23899427
    %v1203 = vmul.f32 %v1101, 0.23899427
    %v1204 = vmul.f32 %v1102, 0.23899427
    %v1205 = vmul.f32 %v1103, 0.23899427
    %v1206 = vmul.f32 %v1104, 0.23899427
    %v1207 = vmul.f32 %v1105, 0.23899427
    %v1208 = vmul.f32 %v1106, 0.23899427
    %v1209 = vmul.f32 %v1107, 0.23899427
    %v1210 = vmul.f32 %v1108, 0.23899427
    %v1211 = vmul.f32 %v1109, 0.23899427
    %v1212 = vmul.f32 %v1110, 0.23899427
    %v1213 = vmul.f32 %v1111, 0.23899427
    %v1214 = vmul.f32 %v1112, 0.23899427
    %v1215 = vmul.f32 %v1113, 0.23899427
    %v1216 = vmul.f32 %v1114, 0.23899427
    %v1217 = vmul.f32 %v1115, 0.23899427
    %v1218 = vmul.f32 %v1116, 0.23899427
    %v1219 = vmul.f32 %v1117, 0.23899427
    %v1220 = vmul.f32 %v1118, 0.23899427
    %v1221 = vmul.f32 %v1119, 0.23899427
    %v1222 = vmul.f32 %v1120, 0.23899427
    %v1223 = vmul.f32 %v1121, 0.23899427
    %v1224 = vmul.f32 %v1122, 0.23899427
    %v1225 = vmul.f32 %v1123, 0.23899427
    %v1226 = vmul.f32 %v1124, 0.23899427
    %v1227 = vmul.f32 %v1125, 0.23899427
    %v1228 = vmul.f32 %v1126, 0.23899427
    %v1229 = vmul.f32 %v1127, 0.23899427
    %v1230 = vmul.f32 %v1128, 0.23899427
    %v1231 = vmul.f32 %v1129, 0.23899427
    %v1232 = vmul.f32 %v1130, 0.23899427
    %v1233 = vmul.f32 %v1131, 0.23899427
    %v1234 = vmul.f32 %v1132, 0.23899427
    %v1235 = vmul.f32 %v1133, 0.23899427
    %v1236 = vmul.f32 %v1134, 0.23899427
    %v1237 = vmul.f32 %v1135, 0.23899427
    %v1238 = vmul.f32 %v1136, 0.23899427
    %v1239 = vmul.f32 %v1137, 0.23899427
    %v1240 = vmul.f32 %v1138, 0.23899427
    %v1241 = vmul.f32 %v1139, 0.23899427
    %v1242 = vmul.f32 %v1140, 0.23899427
    %v1243 = vmul.f32 %v1141, 0.23899427
    %v1244 = vmul.f32 %v1142, 0.23899427
    %v1245 = vmul.f32 %v1143, 0.23899427
    %v1246 = vmul.f32 %v1144, 0.23899427
    %v1247 = vmul.f32 %v1145, 0.23899427
    %v1248 = vmul.f32 %v1146, 0.23899427
    %v1249 = vmul.f32 %v1147, 0.23899427
    %v1250 = vmul.f32 %v1148, 0.23899427
    %v1251 = vmul.f32 %v1149, 0.23899427
    %v1252 = vmul.f32 %v1150, 0.23899427
    %v1253 = vmul.f32 %v1151, 0.23899427
    %v1254 = vmul.f32 %v1152, 0.23899427
    %v1255 = vmul.f32 %v1153, 0.23899427
    %v1256 = vmul.f32 %v1154, 0.23899427
    %v1257 = vmul.f32 %v1155, 0.23899427
    %v1258 = vmul.f32 %v1156, 0.23899427
    %v1259 = vmul.f32 %v1157, 0.23899427
    %v1260 = vmul.f32 %v1158, 0.23899427
    %v1261 = vmul.f32 %v1159, 0.23899427
    %v1262 = vmul.f32 %v1160, 0.23899427
    %v1263 = vmul.f32 %v1161, 0.23899427
    %v1264 = vmul.f32 %v1162, 0.23899427
    %v1265 = vmul.f32 %v1163, 0.23899427
    %v1266 = vmul.f32 %v1164, 0.23899427
    %1369 = vrot.lane.b32.xlu0 %v1165, 1
    %v1370 = vpop.permute.xlu0 %1369
    %1371 = vrot.lane.b32.xlu0 %v1166, 1
    %v1372 = vpop.permute.xlu0 %1371
    %1373 = vrot.lane.b32.xlu0 %v1167, 1
    %v1374 = vpop.permute.xlu0 %1373
    %1375 = vrot.lane.b32.xlu0 %v1168, 1
    %v1376 = vpop.permute.xlu0 %1375
    %1377 = vrot.lane.b32.xlu0 %v1169, 1
    %v1378 = vpop.permute.xlu0 %1377
    %1379 = vrot.lane.b32.xlu0 %v1170, 1
    %v1380 = vpop.permute.xlu0 %1379
    %1381 = vrot.lane.b32.xlu0 %v1171, 1
    %v1382 = vpop.permute.xlu0 %1381
    %1383 = vrot.lane.b32.xlu0 %v1172, 1
    %v1384 = vpop.permute.xlu0 %1383
    %1385 = vrot.lane.b32.xlu0 %v1173, 1
    %v1386 = vpop.permute.xlu0 %1385
    %1387 = vrot.lane.b32.xlu0 %v1174, 1
    %v1388 = vpop.permute.xlu0 %1387
    %1389 = vrot.lane.b32.xlu0 %v1175, 1
    %v1390 = vpop.permute.xlu0 %1389
    %1391 = vrot.lane.b32.xlu0 %v1176, 1
    %v1392 = vpop.permute.xlu0 %1391
    %1393 = vrot.lane.b32.xlu0 %v1177, 1
    %v1394 = vpop.permute.xlu0 %1393
    %1395 = vrot.lane.b32.xlu0 %v1178, 1
    %v1396 = vpop.permute.xlu0 %1395
    %1397 = vrot.lane.b32.xlu0 %v1179, 1
    %v1398 = vpop.permute.xlu0 %1397
    %1399 = vrot.lane.b32.xlu0 %v1180, 1
    %v1400 = vpop.permute.xlu0 %1399
    %1401 = vrot.lane.b32.xlu0 %v1181, 1
    %v1402 = vpop.permute.xlu0 %1401
    %1403 = vrot.lane.b32.xlu0 %v1182, 1
    %v1404 = vpop.permute.xlu0 %1403
    %1405 = vrot.lane.b32.xlu0 %v1183, 1
    %v1406 = vpop.permute.xlu0 %1405
    %1407 = vrot.lane.b32.xlu0 %v1184, 1
    %v1408 = vpop.permute.xlu0 %1407
    %1409 = vrot.lane.b32.xlu0 %v1185, 1
    %v1410 = vpop.permute.xlu0 %1409
    %1411 = vrot.lane.b32.xlu0 %v1186, 1
    %v1412 = vpop.permute.xlu0 %1411
    %1413 = vrot.lane.b32.xlu0 %v1187, 1
    %v1414 = vpop.permute.xlu0 %1413
    %1415 = vrot.lane.b32.xlu0 %v1188, 1
    %v1416 = vpop.permute.xlu0 %1415
    %1417 = vrot.lane.b32.xlu0 %v1189, 1
    %v1418 = vpop.permute.xlu0 %1417
    %1419 = vrot.lane.b32.xlu0 %v1190, 1
    %v1420 = vpop.permute.xlu0 %1419
    %1421 = vrot.lane.b32.xlu0 %v1191, 1
    %v1422 = vpop.permute.xlu0 %1421
    %1423 = vrot.lane.b32.xlu0 %v1192, 1
    %v1424 = vpop.permute.xlu0 %1423
    %1425 = vrot.lane.b32.xlu0 %v1193, 1
    %v1426 = vpop.permute.xlu0 %1425
    %1427 = vrot.lane.b32.xlu0 %v1194, 1
    %v1428 = vpop.permute.xlu0 %1427
    %1429 = vrot.lane.b32.xlu0 %v1195, 1
    %v1430 = vpop.permute.xlu0 %1429
    %1431 = vrot.lane.b32.xlu0 %v1196, 1
    %v1432 = vpop.permute.xlu0 %1431
    %1433 = vrot.lane.b32.xlu0 %v1197, 1
    %v1434 = vpop.permute.xlu0 %1433
    %1435 = vrot.lane.b32.xlu0 %v1198, 1
    %v1436 = vpop.permute.xlu0 %1435
    %1437 = vrot.lane.b32.xlu0 %v1199, 1
    %v1438 = vpop.permute.xlu0 %1437
    %1439 = vrot.lane.b32.xlu0 %v1200, 1
    %v1440 = vpop.permute.xlu0 %1439
    %1441 = vrot.lane.b32.xlu0 %v1201, 1
    %v1442 = vpop.permute.xlu0 %1441
    %1443 = vrot.lane.b32.xlu0 %v1202, 1
    %v1444 = vpop.permute.xlu0 %1443
    %1445 = vrot.lane.b32.xlu0 %v1203, 1
    %v1446 = vpop.permute.xlu0 %1445
    %1447 = vrot.lane.b32.xlu0 %v1204, 1
    %v1448 = vpop.permute.xlu0 %1447
    %1449 = vrot.lane.b32.xlu0 %v1205, 1
    %v1450 = vpop.permute.xlu0 %1449
    %1451 = vrot.lane.b32.xlu0 %v1206, 1
    %v1452 = vpop.permute.xlu0 %1451
    %1453 = vrot.lane.b32.xlu0 %v1207, 1
    %v1454 = vpop.permute.xlu0 %1453
    %1455 = vrot.lane.b32.xlu0 %v1208, 1
    %v1456 = vpop.permute.xlu0 %1455
    %1457 = vrot.lane.b32.xlu0 %v1209, 1
    %v1458 = vpop.permute.xlu0 %1457
    %1459 = vrot.lane.b32.xlu0 %v1210, 1
    %v1460 = vpop.permute.xlu0 %1459
    %1461 = vrot.lane.b32.xlu0 %v1211, 1
    %v1462 = vpop.permute.xlu0 %1461
    %1463 = vrot.lane.b32.xlu0 %v1212, 1
    %v1464 = vpop.permute.xlu0 %1463
    %1465 = vrot.lane.b32.xlu0 %v1213, 1
    %v1466 = vpop.permute.xlu0 %1465
    %1467 = vrot.lane.b32.xlu0 %v1214, 1
    %v1468 = vpop.permute.xlu0 %1467
    %1469 = vrot.lane.b32.xlu0 %v1215, 1
    %v1470 = vpop.permute.xlu0 %1469
    %1471 = vrot.lane.b32.xlu0 %v1216, 1
    %v1472 = vpop.permute.xlu0 %1471
    %1473 = vrot.lane.b32.xlu0 %v1217, 1
    %v1474 = vpop.permute.xlu0 %1473
    %1475 = vrot.lane.b32.xlu0 %v1218, 1
    %v1476 = vpop.permute.xlu0 %1475
    %1477 = vrot.lane.b32.xlu0 %v1219, 1
    %v1478 = vpop.permute.xlu0 %1477
    %1479 = vrot.lane.b32.xlu0 %v1220, 1
    %v1480 = vpop.permute.xlu0 %1479
    %1481 = vrot.lane.b32.xlu0 %v1221, 1
    %v1482 = vpop.permute.xlu0 %1481
    %1483 = vrot.lane.b32.xlu0 %v1222, 1
    %v1484 = vpop.permute.xlu0 %1483
    %1485 = vrot.lane.b32.xlu0 %v1223, 1
    %v1486 = vpop.permute.xlu0 %1485
    %1487 = vrot.lane.b32.xlu0 %v1224, 1
    %v1488 = vpop.permute.xlu0 %1487
    %1489 = vrot.lane.b32.xlu0 %v1225, 1
    %v1490 = vpop.permute.xlu0 %1489
    %1491 = vrot.lane.b32.xlu0 %v1226, 1
    %v1492 = vpop.permute.xlu0 %1491
    %1493 = vrot.lane.b32.xlu0 %v1227, 1
    %v1494 = vpop.permute.xlu0 %1493
    %1495 = vrot.lane.b32.xlu0 %v1228, 1
    %v1496 = vpop.permute.xlu0 %1495
    %1497 = vrot.lane.b32.xlu0 %v1229, 1
    %v1498 = vpop.permute.xlu0 %1497
    %1499 = vrot.lane.b32.xlu0 %v1230, 1
    %v1500 = vpop.permute.xlu0 %1499
    %1501 = vrot.lane.b32.xlu0 %v1231, 1
    %v1502 = vpop.permute.xlu0 %1501
    %1503 = vrot.lane.b32.xlu0 %v1232, 1
    %v1504 = vpop.permute.xlu0 %1503
    %1505 = vrot.lane.b32.xlu0 %v1233, 1
    %v1506 = vpop.permute.xlu0 %1505
    %1507 = vrot.lane.b32.xlu0 %v1234, 1
    %v1508 = vpop.permute.xlu0 %1507
    %1509 = vrot.lane.b32.xlu0 %v1235, 1
    %v1510 = vpop.permute.xlu0 %1509
    %1511 = vrot.lane.b32.xlu0 %v1236, 1
    %v1512 = vpop.permute.xlu0 %1511
    %1513 = vrot.lane.b32.xlu0 %v1237, 1
    %v1514 = vpop.permute.xlu0 %1513
    %1515 = vrot.lane.b32.xlu0 %v1238, 1
    %v1516 = vpop.permute.xlu0 %1515
    %1517 = vrot.lane.b32.xlu0 %v1239, 1
    %v1518 = vpop.permute.xlu0 %1517
    %1519 = vrot.lane.b32.xlu0 %v1240, 1
    %v1520 = vpop.permute.xlu0 %1519
    %1521 = vrot.lane.b32.xlu0 %v1241, 1
    %v1522 = vpop.permute.xlu0 %1521
    %1523 = vrot.lane.b32.xlu0 %v1242, 1
    %v1524 = vpop.permute.xlu0 %1523
    %1525 = vrot.lane.b32.xlu0 %v1243, 1
    %v1526 = vpop.permute.xlu0 %1525
    %1527 = vrot.lane.b32.xlu0 %v1244, 1
    %v1528 = vpop.permute.xlu0 %1527
    %1529 = vrot.lane.b32.xlu0 %v1245, 1
    %v1530 = vpop.permute.xlu0 %1529
    %1531 = vrot.lane.b32.xlu0 %v1246, 1
    %v1532 = vpop.permute.xlu0 %1531
    %1533 = vrot.lane.b32.xlu0 %v1247, 1
    %v1534 = vpop.permute.xlu0 %1533
    %1535 = vrot.lane.b32.xlu0 %v1248, 1
    %v1536 = vpop.permute.xlu0 %1535
    %1537 = vrot.lane.b32.xlu0 %v1249, 1
    %v1538 = vpop.permute.xlu0 %1537
    %1539 = vrot.lane.b32.xlu0 %v1250, 1
    %v1540 = vpop.permute.xlu0 %1539
    %1541 = vrot.lane.b32.xlu0 %v1251, 1
    %v1542 = vpop.permute.xlu0 %1541
    %1543 = vrot.lane.b32.xlu0 %v1252, 1
    %v1544 = vpop.permute.xlu0 %1543
    %1545 = vrot.lane.b32.xlu0 %v1253, 1
    %v1546 = vpop.permute.xlu0 %1545
    %1547 = vrot.lane.b32.xlu0 %v1254, 1
    %v1548 = vpop.permute.xlu0 %1547
    %1549 = vrot.lane.b32.xlu0 %v1255, 1
    %v1550 = vpop.permute.xlu0 %1549
    %1551 = vrot.lane.b32.xlu0 %v1256, 1
    %v1552 = vpop.permute.xlu0 %1551
    %1553 = vrot.lane.b32.xlu0 %v1257, 1
    %v1554 = vpop.permute.xlu0 %1553
    %1555 = vrot.lane.b32.xlu0 %v1258, 1
    %v1556 = vpop.permute.xlu0 %1555
    %1557 = vrot.lane.b32.xlu0 %v1259, 1
    %v1558 = vpop.permute.xlu0 %1557
    %1559 = vrot.lane.b32.xlu0 %v1260, 1
    %v1560 = vpop.permute.xlu0 %1559
    %1561 = vrot.lane.b32.xlu0 %v1261, 1
    %v1562 = vpop.permute.xlu0 %1561
    %1563 = vrot.lane.b32.xlu0 %v1262, 1
    %v1564 = vpop.permute.xlu0 %1563
    %1565 = vrot.lane.b32.xlu0 %v1263, 1
    %v1566 = vpop.permute.xlu0 %1565
    %1567 = vrot.lane.b32.xlu0 %v1264, 1
    %v1568 = vpop.permute.xlu0 %1567
    %1569 = vrot.lane.b32.xlu0 %v1265, 1
    %v1570 = vpop.permute.xlu0 %1569
    %1571 = vrot.lane.b32.xlu0 %v1266, 1
    %v1572 = vpop.permute.xlu0 %1571
    %vm1573 = vcmask 7168
    %v1574 = vsel %vm1573, %v1370, %v1372
    %v1575 = vsel %vm1573, %v1372, %v1374
    %v1576 = vsel %vm1573, %v1376, %v1378
    %v1577 = vsel %vm1573, %v1378, %v1380
    %v1578 = vsel %vm1573, %v1382, %v1384
    %v1579 = vsel %vm1573, %v1384, %v1386
    %v1580 = vsel %vm1573, %v1388, %v1390
    %v1581 = vsel %vm1573, %v1390, %v1392
    %v1582 = vsel %vm1573, %v1394, %v1396
    %v1583 = vsel %vm1573, %v1396, %v1398
    %v1584 = vsel %vm1573, %v1400, %v1402
    %v1585 = vsel %vm1573, %v1402, %v1404
    %v1586 = vsel %vm1573, %v1406, %v1408
    %v1587 = vsel %vm1573, %v1408, %v1410
    %v1588 = vsel %vm1573, %v1412, %v1414
    %v1589 = vsel %vm1573, %v1414, %v1416
    %v1590 = vsel %vm1573, %v1418, %v1420
    %v1591 = vsel %vm1573, %v1420, %v1422
    %v1592 = vsel %vm1573, %v1424, %v1426
    %v1593 = vsel %vm1573, %v1426, %v1428
    %v1594 = vsel %vm1573, %v1430, %v1432
    %v1595 = vsel %vm1573, %v1432, %v1434
    %v1596 = vsel %vm1573, %v1436, %v1438
    %v1597 = vsel %vm1573, %v1438, %v1440
    %v1598 = vsel %vm1573, %v1442, %v1444
    %v1599 = vsel %vm1573, %v1444, %v1446
    %v1600 = vsel %vm1573, %v1448, %v1450
    %v1601 = vsel %vm1573, %v1450, %v1452
    %v1602 = vsel %vm1573, %v1454, %v1456
    %v1603 = vsel %vm1573, %v1456, %v1458
    %v1604 = vsel %vm1573, %v1460, %v1462
    %v1605 = vsel %vm1573, %v1462, %v1464
    %v1606 = vsel %vm1573, %v1466, %v1468
    %v1607 = vsel %vm1573, %v1468, %v1470
    %v1608 = vsel %vm1573, %v1472, %v1474
    %v1609 = vsel %vm1573, %v1474, %v1476
    %v1610 = vsel %vm1573, %v1478, %v1480
    %v1611 = vsel %vm1573, %v1480, %v1482
    %v1612 = vsel %vm1573, %v1484, %v1486
    %v1613 = vsel %vm1573, %v1486, %v1488
    %v1614 = vsel %vm1573, %v1490, %v1492
    %v1615 = vsel %vm1573, %v1492, %v1494
    %v1616 = vsel %vm1573, %v1496, %v1498
    %v1617 = vsel %vm1573, %v1498, %v1500
    %v1618 = vsel %vm1573, %v1502, %v1504
    %v1619 = vsel %vm1573, %v1504, %v1506
    %v1620 = vsel %vm1573, %v1508, %v1510
    %v1621 = vsel %vm1573, %v1510, %v1512
    %v1622 = vsel %vm1573, %v1514, %v1516
    %v1623 = vsel %vm1573, %v1516, %v1518
    %v1624 = vsel %vm1573, %v1520, %v1522
    %v1625 = vsel %vm1573, %v1522, %v1524
    %v1626 = vsel %vm1573, %v1526, %v1528
    %v1627 = vsel %vm1573, %v1528, %v1530
    %v1628 = vsel %vm1573, %v1532, %v1534
    %v1629 = vsel %vm1573, %v1534, %v1536
    %v1630 = vsel %vm1573, %v1538, %v1540
    %v1631 = vsel %vm1573, %v1540, %v1542
    %v1632 = vsel %vm1573, %v1544, %v1546
    %v1633 = vsel %vm1573, %v1546, %v1548
    %v1634 = vsel %vm1573, %v1550, %v1552
    %v1635 = vsel %vm1573, %v1552, %v1554
    %v1636 = vsel %vm1573, %v1556, %v1558
    %v1637 = vsel %vm1573, %v1558, %v1560
    %v1638 = vsel %vm1573, %v1562, %v1564
    %v1639 = vsel %vm1573, %v1564, %v1566
    %v1640 = vsel %vm1573, %v1568, %v1570
    %v1641 = vsel %vm1573, %v1570, %v1572
    %v1744 = vadd.f32 %v484, %v1370
    %v1745 = vadd.f32 %v485, %v1574
    %v1746 = vadd.f32 %v486, %v1575
    %v1747 = vadd.f32 %v487, %v1376
    %v1748 = vadd.f32 %v488, %v1576
    %v1749 = vadd.f32 %v489, %v1577
    %v1750 = vadd.f32 %v490, %v1382
    %v1751 = vadd.f32 %v491, %v1578
    %v1752 = vadd.f32 %v492, %v1579
    %v1753 = vadd.f32 %v493, %v1388
    %v1754 = vadd.f32 %v494, %v1580
    %v1755 = vadd.f32 %v495, %v1581
    %v1756 = vadd.f32 %v496, %v1394
    %v1757 = vadd.f32 %v497, %v1582
    %v1758 = vadd.f32 %v498, %v1583
    %v1759 = vadd.f32 %v499, %v1400
    %v1760 = vadd.f32 %v500, %v1584
    %v1761 = vadd.f32 %v501, %v1585
    %v1762 = vadd.f32 %v502, %v1406
    %v1763 = vadd.f32 %v503, %v1586
    %v1764 = vadd.f32 %v504, %v1587
    %v1765 = vadd.f32 %v505, %v1412
    %v1766 = vadd.f32 %v506, %v1588
    %v1767 = vadd.f32 %v507, %v1589
    %v1768 = vadd.f32 %v508, %v1418
    %v1769 = vadd.f32 %v509, %v1590
    %v1770 = vadd.f32 %v510, %v1591
    %v1771 = vadd.f32 %v511, %v1424
    %v1772 = vadd.f32 %v512, %v1592
    %v1773 = vadd.f32 %v513, %v1593
    %v1774 = vadd.f32 %v514, %v1430
    %v1775 = vadd.f32 %v515, %v1594
    %v1776 = vadd.f32 %v516, %v1595
    %v1777 = vadd.f32 %v517, %v1436
    %v1778 = vadd.f32 %v518, %v1596
    %v1779 = vadd.f32 %v519, %v1597
    %v1780 = vadd.f32 %v520, %v1442
    %v1781 = vadd.f32 %v521, %v1598
    %v1782 = vadd.f32 %v522, %v1599
    %v1783 = vadd.f32 %v523, %v1448
    %v1784 = vadd.f32 %v524, %v1600
    %v1785 = vadd.f32 %v525, %v1601
    %v1786 = vadd.f32 %v526, %v1454
    %v1787 = vadd.f32 %v527, %v1602
    %v1788 = vadd.f32 %v528, %v1603
    %v1789 = vadd.f32 %v529, %v1460
    %v1790 = vadd.f32 %v530, %v1604
    %v1791 = vadd.f32 %v531, %v1605
    %v1792 = vadd.f32 %v532, %v1466
    %v1793 = vadd.f32 %v533, %v1606
    %v1794 = vadd.f32 %v534, %v1607
    %v1795 = vadd.f32 %v535, %v1472
    %v1796 = vadd.f32 %v536, %v1608
    %v1797 = vadd.f32 %v537, %v1609
    %v1798 = vadd.f32 %v538, %v1478
    %v1799 = vadd.f32 %v539, %v1610
    %v1800 = vadd.f32 %v540, %v1611
    %v1801 = vadd.f32 %v541, %v1484
    %v1802 = vadd.f32 %v542, %v1612
    %v1803 = vadd.f32 %v543, %v1613
    %v1804 = vadd.f32 %v544, %v1490
    %v1805 = vadd.f32 %v545, %v1614
    %v1806 = vadd.f32 %v546, %v1615
    %v1807 = vadd.f32 %v547, %v1496
    %v1808 = vadd.f32 %v548, %v1616
    %v1809 = vadd.f32 %v549, %v1617
    %v1810 = vadd.f32 %v550, %v1502
    %v1811 = vadd.f32 %v551, %v1618
    %v1812 = vadd.f32 %v552, %v1619
    %v1813 = vadd.f32 %v553, %v1508
    %v1814 = vadd.f32 %v554, %v1620
    %v1815 = vadd.f32 %v555, %v1621
    %v1816 = vadd.f32 %v556, %v1514
    %v1817 = vadd.f32 %v557, %v1622
    %v1818 = vadd.f32 %v558, %v1623
    %v1819 = vadd.f32 %v559, %v1520
    %v1820 = vadd.f32 %v560, %v1624
    %v1821 = vadd.f32 %v561, %v1625
    %v1822 = vadd.f32 %v562, %v1526
    %v1823 = vadd.f32 %v563, %v1626
    %v1824 = vadd.f32 %v564, %v1627
    %v1825 = vadd.f32 %v565, %v1532
    %v1826 = vadd.f32 %v566, %v1628
    %v1827 = vadd.f32 %v567, %v1629
    %v1828 = vadd.f32 %v568, %v1538
    %v1829 = vadd.f32 %v569, %v1630
    %v1830 = vadd.f32 %v570, %v1631
    %v1831 = vadd.f32 %v571, %v1544
    %v1832 = vadd.f32 %v572, %v1632
    %v1833 = vadd.f32 %v573, %v1633
    %v1834 = vadd.f32 %v574, %v1550
    %v1835 = vadd.f32 %v575, %v1634
    %v1836 = vadd.f32 %v576, %v1635
    %v1837 = vadd.f32 %v577, %v1556
    %v1838 = vadd.f32 %v578, %v1636
    %v1839 = vadd.f32 %v579, %v1637
    %v1840 = vadd.f32 %v580, %v1562
    %v1841 = vadd.f32 %v581, %v1638
    %v1842 = vadd.f32 %v582, %v1639
    %v1843 = vadd.f32 %v583, %v1568
    %v1844 = vadd.f32 %v584, %v1640
    %v1845 = vadd.f32 %v585, %v1641
    %v1846 = vmul.f32 %v1744, 0.52201146
    %v1847 = vmul.f32 %v1745, 0.52201146
    %v1848 = vmul.f32 %v1746, 0.52201146
    %v1849 = vmul.f32 %v1747, 0.52201146
    %v1850 = vmul.f32 %v1748, 0.52201146
    %v1851 = vmul.f32 %v1749, 0.52201146
    %v1852 = vmul.f32 %v1750, 0.52201146
    %v1853 = vmul.f32 %v1751, 0.52201146
    %v1854 = vmul.f32 %v1752, 0.52201146
    %v1855 = vmul.f32 %v1753, 0.52201146
    %v1856 = vmul.f32 %v1754, 0.52201146
    %v1857 = vmul.f32 %v1755, 0.52201146
    %v1858 = vmul.f32 %v1756, 0.52201146
    %v1859 = vmul.f32 %v1757, 0.52201146
    %v1860 = vmul.f32 %v1758, 0.52201146
    %v1861 = vmul.f32 %v1759, 0.52201146
    %v1862 = vmul.f32 %v1760, 0.52201146
    %v1863 = vmul.f32 %v1761, 0.52201146
    %v1864 = vmul.f32 %v1762, 0.52201146
    %v1865 = vmul.f32 %v1763, 0.52201146
    %v1866 = vmul.f32 %v1764, 0.52201146
    %v1867 = vmul.f32 %v1765, 0.52201146
    %v1868 = vmul.f32 %v1766, 0.52201146
    %v1869 = vmul.f32 %v1767, 0.52201146
    %v1870 = vmul.f32 %v1768, 0.52201146
    %v1871 = vmul.f32 %v1769, 0.52201146
    %v1872 = vmul.f32 %v1770, 0.52201146
    %v1873 = vmul.f32 %v1771, 0.52201146
    %v1874 = vmul.f32 %v1772, 0.52201146
    %v1875 = vmul.f32 %v1773, 0.52201146
    %v1876 = vmul.f32 %v1774, 0.52201146
    %v1877 = vmul.f32 %v1775, 0.52201146
    %v1878 = vmul.f32 %v1776, 0.52201146
    %v1879 = vmul.f32 %v1777, 0.52201146
    %v1880 = vmul.f32 %v1778, 0.52201146
    %v1881 = vmul.f32 %v1779, 0.52201146
    %v1882 = vmul.f32 %v1780, 0.52201146
    %v1883 = vmul.f32 %v1781, 0.52201146
    %v1884 = vmul.f32 %v1782, 0.52201146
    %v1885 = vmul.f32 %v1783, 0.52201146
    %v1886 = vmul.f32 %v1784, 0.52201146
    %v1887 = vmul.f32 %v1785, 0.52201146
    %v1888 = vmul.f32 %v1786, 0.52201146
    %v1889 = vmul.f32 %v1787, 0.52201146
    %v1890 = vmul.f32 %v1788, 0.52201146
    %v1891 = vmul.f32 %v1789, 0.52201146
    %v1892 = vmul.f32 %v1790, 0.52201146
    %v1893 = vmul.f32 %v1791, 0.52201146
    %v1894 = vmul.f32 %v1792, 0.52201146
    %v1895 = vmul.f32 %v1793, 0.52201146
    %v1896 = vmul.f32 %v1794, 0.52201146
    %v1897 = vmul.f32 %v1795, 0.52201146
    %v1898 = vmul.f32 %v1796, 0.52201146
    %v1899 = vmul.f32 %v1797, 0.52201146
    %v1900 = vmul.f32 %v1798, 0.52201146
    %v1901 = vmul.f32 %v1799, 0.52201146
    %v1902 = vmul.f32 %v1800, 0.52201146
    %v1903 = vmul.f32 %v1801, 0.52201146
    %v1904 = vmul.f32 %v1802, 0.52201146
    %v1905 = vmul.f32 %v1803, 0.52201146
    %v1906 = vmul.f32 %v1804, 0.52201146
    %v1907 = vmul.f32 %v1805, 0.52201146
    %v1908 = vmul.f32 %v1806, 0.52201146
    %v1909 = vmul.f32 %v1807, 0.52201146
    %v1910 = vmul.f32 %v1808, 0.52201146
    %v1911 = vmul.f32 %v1809, 0.52201146
    %v1912 = vmul.f32 %v1810, 0.52201146
    %v1913 = vmul.f32 %v1811, 0.52201146
    %v1914 = vmul.f32 %v1812, 0.52201146
    %v1915 = vmul.f32 %v1813, 0.52201146
    %v1916 = vmul.f32 %v1814, 0.52201146
    %v1917 = vmul.f32 %v1815, 0.52201146
    %v1918 = vmul.f32 %v1816, 0.52201146
    %v1919 = vmul.f32 %v1817, 0.52201146
    %v1920 = vmul.f32 %v1818, 0.52201146
    %v1921 = vmul.f32 %v1819, 0.52201146
    %v1922 = vmul.f32 %v1820, 0.52201146
    %v1923 = vmul.f32 %v1821, 0.52201146
    %v1924 = vmul.f32 %v1822, 0.52201146
    %v1925 = vmul.f32 %v1823, 0.52201146
    %v1926 = vmul.f32 %v1824, 0.52201146
    %v1927 = vmul.f32 %v1825, 0.52201146
    %v1928 = vmul.f32 %v1826, 0.52201146
    %v1929 = vmul.f32 %v1827, 0.52201146
    %v1930 = vmul.f32 %v1828, 0.52201146
    %v1931 = vmul.f32 %v1829, 0.52201146
    %v1932 = vmul.f32 %v1830, 0.52201146
    %v1933 = vmul.f32 %v1831, 0.52201146
    %v1934 = vmul.f32 %v1832, 0.52201146
    %v1935 = vmul.f32 %v1833, 0.52201146
    %v1936 = vmul.f32 %v1834, 0.52201146
    %v1937 = vmul.f32 %v1835, 0.52201146
    %v1938 = vmul.f32 %v1836, 0.52201146
    %v1939 = vmul.f32 %v1837, 0.52201146
    %v1940 = vmul.f32 %v1838, 0.52201146
    %v1941 = vmul.f32 %v1839, 0.52201146
    %v1942 = vmul.f32 %v1840, 0.52201146
    %v1943 = vmul.f32 %v1841, 0.52201146
    %v1944 = vmul.f32 %v1842, 0.52201146
    %v1945 = vmul.f32 %v1843, 0.52201146
    %v1946 = vmul.f32 %v1844, 0.52201146
    %v1947 = vmul.f32 %v1845, 0.52201146
    %vm2050 = vcmask 1045504
    %v2051 = vrot.slane %v1744, 2
    %v2052 = vrot.slane %v1747, 2
    %v2053 = vsel %vm2050, %v2051, %v2052
    %v2054 = vrot.slane %v1745, 2
    %v2055 = vrot.slane %v1748, 2
    %v2056 = vsel %vm2050, %v2054, %v2055
    %v2057 = vrot.slane %v1746, 2
    %v2058 = vrot.slane %v1749, 2
    %v2059 = vsel %vm2050, %v2057, %v2058
    %v2060 = vrot.slane %v1750, 2
    %v2061 = vsel %vm2050, %v2052, %v2060
    %v2062 = vrot.slane %v1751, 2
    %v2063 = vsel %vm2050, %v2055, %v2062
    %v2064 = vrot.slane %v1752, 2
    %v2065 = vsel %vm2050, %v2058, %v2064
    %v2066 = vrot.slane %v1753, 2
    %v2067 = vsel %vm2050, %v2060, %v2066
    %v2068 = vrot.slane %v1754, 2
    %v2069 = vsel %vm2050, %v2062, %v2068
    %v2070 = vrot.slane %v1755, 2
    %v2071 = vsel %vm2050, %v2064, %v2070
    %v2072 = vrot.slane %v1756, 2
    %v2073 = vsel %vm2050, %v2066, %v2072
    %v2074 = vrot.slane %v1757, 2
    %v2075 = vsel %vm2050, %v2068, %v2074
    %v2076 = vrot.slane %v1758, 2
    %v2077 = vsel %vm2050, %v2070, %v2076
    %v2078 = vrot.slane %v1759, 2
    %v2079 = vsel %vm2050, %v2072, %v2078
    %v2080 = vrot.slane %v1760, 2
    %v2081 = vsel %vm2050, %v2074, %v2080
    %v2082 = vrot.slane %v1761, 2
    %v2083 = vsel %vm2050, %v2076, %v2082
    %v2084 = vrot.slane %v1762, 2
    %v2085 = vsel %vm2050, %v2078, %v2084
    %v2086 = vrot.slane %v1763, 2
    %v2087 = vsel %vm2050, %v2080, %v2086
    %v2088 = vrot.slane %v1764, 2
    %v2089 = vsel %vm2050, %v2082, %v2088
    %v2090 = vrot.slane %v1765, 2
    %v2091 = vsel %vm2050, %v2084, %v2090
    %v2092 = vrot.slane %v1766, 2
    %v2093 = vsel %vm2050, %v2086, %v2092
    %v2094 = vrot.slane %v1767, 2
    %v2095 = vsel %vm2050, %v2088, %v2094
    %v2096 = vrot.slane %v1768, 2
    %v2097 = vsel %vm2050, %v2090, %v2096
    %v2098 = vrot.slane %v1769, 2
    %v2099 = vsel %vm2050, %v2092, %v2098
    %v2100 = vrot.slane %v1770, 2
    %v2101 = vsel %vm2050, %v2094, %v2100
    %v2102 = vrot.slane %v1771, 2
    %v2103 = vsel %vm2050, %v2096, %v2102
    %v2104 = vrot.slane %v1772, 2
    %v2105 = vsel %vm2050, %v2098, %v2104
    %v2106 = vrot.slane %v1773, 2
    %v2107 = vsel %vm2050, %v2100, %v2106
    %v2108 = vrot.slane %v1774, 2
    %v2109 = vsel %vm2050, %v2102, %v2108
    %v2110 = vrot.slane %v1775, 2
    %v2111 = vsel %vm2050, %v2104, %v2110
    %v2112 = vrot.slane %v1776, 2
    %v2113 = vsel %vm2050, %v2106, %v2112
    %v2114 = vrot.slane %v1777, 2
    %v2115 = vsel %vm2050, %v2108, %v2114
    %v2116 = vrot.slane %v1778, 2
    %v2117 = vsel %vm2050, %v2110, %v2116
    %v2118 = vrot.slane %v1779, 2
    %v2119 = vsel %vm2050, %v2112, %v2118
    %v2120 = vrot.slane %v1780, 2
    %v2121 = vsel %vm2050, %v2114, %v2120
    %v2122 = vrot.slane %v1781, 2
    %v2123 = vsel %vm2050, %v2116, %v2122
    %v2124 = vrot.slane %v1782, 2
    %v2125 = vsel %vm2050, %v2118, %v2124
    %v2126 = vrot.slane %v1783, 2
    %v2127 = vsel %vm2050, %v2120, %v2126
    %v2128 = vrot.slane %v1784, 2
    %v2129 = vsel %vm2050, %v2122, %v2128
    %v2130 = vrot.slane %v1785, 2
    %v2131 = vsel %vm2050, %v2124, %v2130
    %v2132 = vrot.slane %v1786, 2
    %v2133 = vsel %vm2050, %v2126, %v2132
    %v2134 = vrot.slane %v1787, 2
    %v2135 = vsel %vm2050, %v2128, %v2134
    %v2136 = vrot.slane %v1788, 2
    %v2137 = vsel %vm2050, %v2130, %v2136
    %v2138 = vrot.slane %v1789, 2
    %v2139 = vsel %vm2050, %v2132, %v2138
    %v2140 = vrot.slane %v1790, 2
    %v2141 = vsel %vm2050, %v2134, %v2140
    %v2142 = vrot.slane %v1791, 2
    %v2143 = vsel %vm2050, %v2136, %v2142
    %v2144 = vrot.slane %v1792, 2
    %v2145 = vsel %vm2050, %v2138, %v2144
    %v2146 = vrot.slane %v1793, 2
    %v2147 = vsel %vm2050, %v2140, %v2146
    %v2148 = vrot.slane %v1794, 2
    %v2149 = vsel %vm2050, %v2142, %v2148
    %v2150 = vrot.slane %v1795, 2
    %v2151 = vsel %vm2050, %v2144, %v2150
    %v2152 = vrot.slane %v1796, 2
    %v2153 = vsel %vm2050, %v2146, %v2152
    %v2154 = vrot.slane %v1797, 2
    %v2155 = vsel %vm2050, %v2148, %v2154
    %v2156 = vrot.slane %v1798, 2
    %v2157 = vsel %vm2050, %v2150, %v2156
    %v2158 = vrot.slane %v1799, 2
    %v2159 = vsel %vm2050, %v2152, %v2158
    %v2160 = vrot.slane %v1800, 2
    %v2161 = vsel %vm2050, %v2154, %v2160
    %v2162 = vrot.slane %v1801, 2
    %v2163 = vsel %vm2050, %v2156, %v2162
    %v2164 = vrot.slane %v1802, 2
    %v2165 = vsel %vm2050, %v2158, %v2164
    %v2166 = vrot.slane %v1803, 2
    %v2167 = vsel %vm2050, %v2160, %v2166
    %v2168 = vrot.slane %v1804, 2
    %v2169 = vsel %vm2050, %v2162, %v2168
    %v2170 = vrot.slane %v1805, 2
    %v2171 = vsel %vm2050, %v2164, %v2170
    %v2172 = vrot.slane %v1806, 2
    %v2173 = vsel %vm2050, %v2166, %v2172
    %v2174 = vrot.slane %v1807, 2
    %v2175 = vsel %vm2050, %v2168, %v2174
    %v2176 = vrot.slane %v1808, 2
    %v2177 = vsel %vm2050, %v2170, %v2176
    %v2178 = vrot.slane %v1809, 2
    %v2179 = vsel %vm2050, %v2172, %v2178
    %v2180 = vrot.slane %v1810, 2
    %v2181 = vsel %vm2050, %v2174, %v2180
    %v2182 = vrot.slane %v1811, 2
    %v2183 = vsel %vm2050, %v2176, %v2182
    %v2184 = vrot.slane %v1812, 2
    %v2185 = vsel %vm2050, %v2178, %v2184
    %v2186 = vrot.slane %v1813, 2
    %v2187 = vsel %vm2050, %v2180, %v2186
    %v2188 = vrot.slane %v1814, 2
    %v2189 = vsel %vm2050, %v2182, %v2188
    %v2190 = vrot.slane %v1815, 2
    %v2191 = vsel %vm2050, %v2184, %v2190
    %v2192 = vrot.slane %v1816, 2
    %v2193 = vsel %vm2050, %v2186, %v2192
    %v2194 = vrot.slane %v1817, 2
    %v2195 = vsel %vm2050, %v2188, %v2194
    %v2196 = vrot.slane %v1818, 2
    %v2197 = vsel %vm2050, %v2190, %v2196
    %v2198 = vrot.slane %v1819, 2
    %v2199 = vsel %vm2050, %v2192, %v2198
    %v2200 = vrot.slane %v1820, 2
    %v2201 = vsel %vm2050, %v2194, %v2200
    %v2202 = vrot.slane %v1821, 2
    %v2203 = vsel %vm2050, %v2196, %v2202
    %v2204 = vrot.slane %v1822, 2
    %v2205 = vsel %vm2050, %v2198, %v2204
    %v2206 = vrot.slane %v1823, 2
    %v2207 = vsel %vm2050, %v2200, %v2206
    %v2208 = vrot.slane %v1824, 2
    %v2209 = vsel %vm2050, %v2202, %v2208
    %v2210 = vrot.slane %v1825, 2
    %v2211 = vsel %vm2050, %v2204, %v2210
    %v2212 = vrot.slane %v1826, 2
    %v2213 = vsel %vm2050, %v2206, %v2212
    %v2214 = vrot.slane %v1827, 2
    %v2215 = vsel %vm2050, %v2208, %v2214
    %v2216 = vrot.slane %v1828, 2
    %v2217 = vsel %vm2050, %v2210, %v2216
    %v2218 = vrot.slane %v1829, 2
    %v2219 = vsel %vm2050, %v2212, %v2218
    %v2220 = vrot.slane %v1830, 2
    %v2221 = vsel %vm2050, %v2214, %v2220
    %v2222 = vrot.slane %v1831, 2
    %v2223 = vsel %vm2050, %v2216, %v2222
    %v2224 = vrot.slane %v1832, 2
    %v2225 = vsel %vm2050, %v2218, %v2224
    %v2226 = vrot.slane %v1833, 2
    %v2227 = vsel %vm2050, %v2220, %v2226
    %v2228 = vrot.slane %v1834, 2
    %v2229 = vsel %vm2050, %v2222, %v2228
    %v2230 = vrot.slane %v1835, 2
    %v2231 = vsel %vm2050, %v2224, %v2230
    %v2232 = vrot.slane %v1836, 2
    %v2233 = vsel %vm2050, %v2226, %v2232
    %v2234 = vrot.slane %v1837, 2
    %v2235 = vsel %vm2050, %v2228, %v2234
    %v2236 = vrot.slane %v1838, 2
    %v2237 = vsel %vm2050, %v2230, %v2236
    %v2238 = vrot.slane %v1839, 2
    %v2239 = vsel %vm2050, %v2232, %v2238
    %v2240 = vrot.slane %v1840, 2
    %v2241 = vsel %vm2050, %v2234, %v2240
    %v2242 = vrot.slane %v1841, 2
    %v2243 = vsel %vm2050, %v2236, %v2242
    %v2244 = vrot.slane %v1842, 2
    %v2245 = vsel %vm2050, %v2238, %v2244
    %v2246 = vrot.slane %v1843, 2
    %v2247 = vsel %vm2050, %v2240, %v2246
    %v2248 = vrot.slane %v1844, 2
    %v2249 = vsel %vm2050, %v2242, %v2248
    %v2250 = vrot.slane %v1845, 2
    %v2251 = vsel %vm2050, %v2244, %v2250
    %v2354 = vadd.f32 %v1744, %v2053
    %v2355 = vadd.f32 %v1745, %v2056
    %v2356 = vadd.f32 %v1746, %v2059
    %v2357 = vadd.f32 %v1747, %v2061
    %v2358 = vadd.f32 %v1748, %v2063
    %v2359 = vadd.f32 %v1749, %v2065
    %v2360 = vadd.f32 %v1750, %v2067
    %v2361 = vadd.f32 %v1751, %v2069
    %v2362 = vadd.f32 %v1752, %v2071
    %v2363 = vadd.f32 %v1753, %v2073
    %v2364 = vadd.f32 %v1754, %v2075
    %v2365 = vadd.f32 %v1755, %v2077
    %v2366 = vadd.f32 %v1756, %v2079
    %v2367 = vadd.f32 %v1757, %v2081
    %v2368 = vadd.f32 %v1758, %v2083
    %v2369 = vadd.f32 %v1759, %v2085
    %v2370 = vadd.f32 %v1760, %v2087
    %v2371 = vadd.f32 %v1761, %v2089
    %v2372 = vadd.f32 %v1762, %v2091
    %v2373 = vadd.f32 %v1763, %v2093
    %v2374 = vadd.f32 %v1764, %v2095
    %v2375 = vadd.f32 %v1765, %v2097
    %v2376 = vadd.f32 %v1766, %v2099
    %v2377 = vadd.f32 %v1767, %v2101
    %v2378 = vadd.f32 %v1768, %v2103
    %v2379 = vadd.f32 %v1769, %v2105
    %v2380 = vadd.f32 %v1770, %v2107
    %v2381 = vadd.f32 %v1771, %v2109
    %v2382 = vadd.f32 %v1772, %v2111
    %v2383 = vadd.f32 %v1773, %v2113
    %v2384 = vadd.f32 %v1774, %v2115
    %v2385 = vadd.f32 %v1775, %v2117
    %v2386 = vadd.f32 %v1776, %v2119
    %v2387 = vadd.f32 %v1777, %v2121
    %v2388 = vadd.f32 %v1778, %v2123
    %v2389 = vadd.f32 %v1779, %v2125
    %v2390 = vadd.f32 %v1780, %v2127
    %v2391 = vadd.f32 %v1781, %v2129
    %v2392 = vadd.f32 %v1782, %v2131
    %v2393 = vadd.f32 %v1783, %v2133
    %v2394 = vadd.f32 %v1784, %v2135
    %v2395 = vadd.f32 %v1785, %v2137
    %v2396 = vadd.f32 %v1786, %v2139
    %v2397 = vadd.f32 %v1787, %v2141
    %v2398 = vadd.f32 %v1788, %v2143
    %v2399 = vadd.f32 %v1789, %v2145
    %v2400 = vadd.f32 %v1790, %v2147
    %v2401 = vadd.f32 %v1791, %v2149
    %v2402 = vadd.f32 %v1792, %v2151
    %v2403 = vadd.f32 %v1793, %v2153
    %v2404 = vadd.f32 %v1794, %v2155
    %v2405 = vadd.f32 %v1795, %v2157
    %v2406 = vadd.f32 %v1796, %v2159
    %v2407 = vadd.f32 %v1797, %v2161
    %v2408 = vadd.f32 %v1798, %v2163
    %v2409 = vadd.f32 %v1799, %v2165
    %v2410 = vadd.f32 %v1800, %v2167
    %v2411 = vadd.f32 %v1801, %v2169
    %v2412 = vadd.f32 %v1802, %v2171
    %v2413 = vadd.f32 %v1803, %v2173
    %v2414 = vadd.f32 %v1804, %v2175
    %v2415 = vadd.f32 %v1805, %v2177
    %v2416 = vadd.f32 %v1806, %v2179
    %v2417 = vadd.f32 %v1807, %v2181
    %v2418 = vadd.f32 %v1808, %v2183
    %v2419 = vadd.f32 %v1809, %v2185
    %v2420 = vadd.f32 %v1810, %v2187
    %v2421 = vadd.f32 %v1811, %v2189
    %v2422 = vadd.f32 %v1812, %v2191
    %v2423 = vadd.f32 %v1813, %v2193
    %v2424 = vadd.f32 %v1814, %v2195
    %v2425 = vadd.f32 %v1815, %v2197
    %v2426 = vadd.f32 %v1816, %v2199
    %v2427 = vadd.f32 %v1817, %v2201
    %v2428 = vadd.f32 %v1818, %v2203
    %v2429 = vadd.f32 %v1819, %v2205
    %v2430 = vadd.f32 %v1820, %v2207
    %v2431 = vadd.f32 %v1821, %v2209
    %v2432 = vadd.f32 %v1822, %v2211
    %v2433 = vadd.f32 %v1823, %v2213
    %v2434 = vadd.f32 %v1824, %v2215
    %v2435 = vadd.f32 %v1825, %v2217
    %v2436 = vadd.f32 %v1826, %v2219
    %v2437 = vadd.f32 %v1827, %v2221
    %v2438 = vadd.f32 %v1828, %v2223
    %v2439 = vadd.f32 %v1829, %v2225
    %v2440 = vadd.f32 %v1830, %v2227
    %v2441 = vadd.f32 %v1831, %v2229
    %v2442 = vadd.f32 %v1832, %v2231
    %v2443 = vadd.f32 %v1833, %v2233
    %v2444 = vadd.f32 %v1834, %v2235
    %v2445 = vadd.f32 %v1835, %v2237
    %v2446 = vadd.f32 %v1836, %v2239
    %v2447 = vadd.f32 %v1837, %v2241
    %v2448 = vadd.f32 %v1838, %v2243
    %v2449 = vadd.f32 %v1839, %v2245
    %v2450 = vadd.f32 %v1840, %v2247
    %v2451 = vadd.f32 %v1841, %v2249
    %v2452 = vadd.f32 %v1842, %v2251
    %v2453 = vadd.f32 %v1843, %v2246
    %v2454 = vadd.f32 %v1844, %v2248
    %v2455 = vadd.f32 %v1845, %v2250
    %v2456 = vmul.f32 %v2354, 0.23899427
    %v2457 = vmul.f32 %v2355, 0.23899427
    %v2458 = vmul.f32 %v2356, 0.23899427
    %v2459 = vmul.f32 %v2357, 0.23899427
    %v2460 = vmul.f32 %v2358, 0.23899427
    %v2461 = vmul.f32 %v2359, 0.23899427
    %v2462 = vmul.f32 %v2360, 0.23899427
    %v2463 = vmul.f32 %v2361, 0.23899427
    %v2464 = vmul.f32 %v2362, 0.23899427
    %v2465 = vmul.f32 %v2363, 0.23899427
    %v2466 = vmul.f32 %v2364, 0.23899427
    %v2467 = vmul.f32 %v2365, 0.23899427
    %v2468 = vmul.f32 %v2366, 0.23899427
    %v2469 = vmul.f32 %v2367, 0.23899427
    %v2470 = vmul.f32 %v2368, 0.23899427
    %v2471 = vmul.f32 %v2369, 0.23899427
    %v2472 = vmul.f32 %v2370, 0.23899427
    %v2473 = vmul.f32 %v2371, 0.23899427
    %v2474 = vmul.f32 %v2372, 0.23899427
    %v2475 = vmul.f32 %v2373, 0.23899427
    %v2476 = vmul.f32 %v2374, 0.23899427
    %v2477 = vmul.f32 %v2375, 0.23899427
    %v2478 = vmul.f32 %v2376, 0.23899427
    %v2479 = vmul.f32 %v2377, 0.23899427
    %v2480 = vmul.f32 %v2378, 0.23899427
    %v2481 = vmul.f32 %v2379, 0.23899427
    %v2482 = vmul.f32 %v2380, 0.23899427
    %v2483 = vmul.f32 %v2381, 0.23899427
    %v2484 = vmul.f32 %v2382, 0.23899427
    %v2485 = vmul.f32 %v2383, 0.23899427
    %v2486 = vmul.f32 %v2384, 0.23899427
    %v2487 = vmul.f32 %v2385, 0.23899427
    %v2488 = vmul.f32 %v2386, 0.23899427
    %v2489 = vmul.f32 %v2387, 0.23899427
    %v2490 = vmul.f32 %v2388, 0.23899427
    %v2491 = vmul.f32 %v2389, 0.23899427
    %v2492 = vmul.f32 %v2390, 0.23899427
    %v2493 = vmul.f32 %v2391, 0.23899427
    %v2494 = vmul.f32 %v2392, 0.23899427
    %v2495 = vmul.f32 %v2393, 0.23899427
    %v2496 = vmul.f32 %v2394, 0.23899427
    %v2497 = vmul.f32 %v2395, 0.23899427
    %v2498 = vmul.f32 %v2396, 0.23899427
    %v2499 = vmul.f32 %v2397, 0.23899427
    %v2500 = vmul.f32 %v2398, 0.23899427
    %v2501 = vmul.f32 %v2399, 0.23899427
    %v2502 = vmul.f32 %v2400, 0.23899427
    %v2503 = vmul.f32 %v2401, 0.23899427
    %v2504 = vmul.f32 %v2402, 0.23899427
    %v2505 = vmul.f32 %v2403, 0.23899427
    %v2506 = vmul.f32 %v2404, 0.23899427
    %v2507 = vmul.f32 %v2405, 0.23899427
    %v2508 = vmul.f32 %v2406, 0.23899427
    %v2509 = vmul.f32 %v2407, 0.23899427
    %v2510 = vmul.f32 %v2408, 0.23899427
    %v2511 = vmul.f32 %v2409, 0.23899427
    %v2512 = vmul.f32 %v2410, 0.23899427
    %v2513 = vmul.f32 %v2411, 0.23899427
    %v2514 = vmul.f32 %v2412, 0.23899427
    %v2515 = vmul.f32 %v2413, 0.23899427
    %v2516 = vmul.f32 %v2414, 0.23899427
    %v2517 = vmul.f32 %v2415, 0.23899427
    %v2518 = vmul.f32 %v2416, 0.23899427
    %v2519 = vmul.f32 %v2417, 0.23899427
    %v2520 = vmul.f32 %v2418, 0.23899427
    %v2521 = vmul.f32 %v2419, 0.23899427
    %v2522 = vmul.f32 %v2420, 0.23899427
    %v2523 = vmul.f32 %v2421, 0.23899427
    %v2524 = vmul.f32 %v2422, 0.23899427
    %v2525 = vmul.f32 %v2423, 0.23899427
    %v2526 = vmul.f32 %v2424, 0.23899427
    %v2527 = vmul.f32 %v2425, 0.23899427
    %v2528 = vmul.f32 %v2426, 0.23899427
    %v2529 = vmul.f32 %v2427, 0.23899427
    %v2530 = vmul.f32 %v2428, 0.23899427
    %v2531 = vmul.f32 %v2429, 0.23899427
    %v2532 = vmul.f32 %v2430, 0.23899427
    %v2533 = vmul.f32 %v2431, 0.23899427
    %v2534 = vmul.f32 %v2432, 0.23899427
    %v2535 = vmul.f32 %v2433, 0.23899427
    %v2536 = vmul.f32 %v2434, 0.23899427
    %v2537 = vmul.f32 %v2435, 0.23899427
    %v2538 = vmul.f32 %v2436, 0.23899427
    %v2539 = vmul.f32 %v2437, 0.23899427
    %v2540 = vmul.f32 %v2438, 0.23899427
    %v2541 = vmul.f32 %v2439, 0.23899427
    %v2542 = vmul.f32 %v2440, 0.23899427
    %v2543 = vmul.f32 %v2441, 0.23899427
    %v2544 = vmul.f32 %v2442, 0.23899427
    %v2545 = vmul.f32 %v2443, 0.23899427
    %v2546 = vmul.f32 %v2444, 0.23899427
    %v2547 = vmul.f32 %v2445, 0.23899427
    %v2548 = vmul.f32 %v2446, 0.23899427
    %v2549 = vmul.f32 %v2447, 0.23899427
    %v2550 = vmul.f32 %v2448, 0.23899427
    %v2551 = vmul.f32 %v2449, 0.23899427
    %v2552 = vmul.f32 %v2450, 0.23899427
    %v2553 = vmul.f32 %v2451, 0.23899427
    %v2554 = vmul.f32 %v2452, 0.23899427
    %v2555 = vmul.f32 %v2453, 0.23899427
    %v2556 = vmul.f32 %v2454, 0.23899427
    %v2557 = vmul.f32 %v2455, 0.23899427
    %vm2660 = vcmask 1040384
    %v2661 = vrot.slane %v2456, 7
    %v2662 = vrot.slane %v2457, 7
    %v2663 = vrot.slane %v2458, 7
    %v2664 = vrot.slane %v2459, 7
    %v2665 = vsel %vm2660, %v2661, %v2664
    %v2666 = vrot.slane %v2460, 7
    %v2667 = vsel %vm2660, %v2662, %v2666
    %v2668 = vrot.slane %v2461, 7
    %v2669 = vsel %vm2660, %v2663, %v2668
    %v2670 = vrot.slane %v2462, 7
    %v2671 = vsel %vm2660, %v2664, %v2670
    %v2672 = vrot.slane %v2463, 7
    %v2673 = vsel %vm2660, %v2666, %v2672
    %v2674 = vrot.slane %v2464, 7
    %v2675 = vsel %vm2660, %v2668, %v2674
    %v2676 = vrot.slane %v2465, 7
    %v2677 = vsel %vm2660, %v2670, %v2676
    %v2678 = vrot.slane %v2466, 7
    %v2679 = vsel %vm2660, %v2672, %v2678
    %v2680 = vrot.slane %v2467, 7
    %v2681 = vsel %vm2660, %v2674, %v2680
    %v2682 = vrot.slane %v2468, 7
    %v2683 = vsel %vm2660, %v2676, %v2682
    %v2684 = vrot.slane %v2469, 7
    %v2685 = vsel %vm2660, %v2678, %v2684
    %v2686 = vrot.slane %v2470, 7
    %v2687 = vsel %vm2660, %v2680, %v2686
    %v2688 = vrot.slane %v2471, 7
    %v2689 = vsel %vm2660, %v2682, %v2688
    %v2690 = vrot.slane %v2472, 7
    %v2691 = vsel %vm2660, %v2684, %v2690
    %v2692 = vrot.slane %v2473, 7
    %v2693 = vsel %vm2660, %v2686, %v2692
    %v2694 = vrot.slane %v2474, 7
    %v2695 = vsel %vm2660, %v2688, %v2694
    %v2696 = vrot.slane %v2475, 7
    %v2697 = vsel %vm2660, %v2690, %v2696
    %v2698 = vrot.slane %v2476, 7
    %v2699 = vsel %vm2660, %v2692, %v2698
    %v2700 = vrot.slane %v2477, 7
    %v2701 = vsel %vm2660, %v2694, %v2700
    %v2702 = vrot.slane %v2478, 7
    %v2703 = vsel %vm2660, %v2696, %v2702
    %v2704 = vrot.slane %v2479, 7
    %v2705 = vsel %vm2660, %v2698, %v2704
    %v2706 = vrot.slane %v2480, 7
    %v2707 = vsel %vm2660, %v2700, %v2706
    %v2708 = vrot.slane %v2481, 7
    %v2709 = vsel %vm2660, %v2702, %v2708
    %v2710 = vrot.slane %v2482, 7
    %v2711 = vsel %vm2660, %v2704, %v2710
    %v2712 = vrot.slane %v2483, 7
    %v2713 = vsel %vm2660, %v2706, %v2712
    %v2714 = vrot.slane %v2484, 7
    %v2715 = vsel %vm2660, %v2708, %v2714
    %v2716 = vrot.slane %v2485, 7
    %v2717 = vsel %vm2660, %v2710, %v2716
    %v2718 = vrot.slane %v2486, 7
    %v2719 = vsel %vm2660, %v2712, %v2718
    %v2720 = vrot.slane %v2487, 7
    %v2721 = vsel %vm2660, %v2714, %v2720
    %v2722 = vrot.slane %v2488, 7
    %v2723 = vsel %vm2660, %v2716, %v2722
    %v2724 = vrot.slane %v2489, 7
    %v2725 = vsel %vm2660, %v2718, %v2724
    %v2726 = vrot.slane %v2490, 7
    %v2727 = vsel %vm2660, %v2720, %v2726
    %v2728 = vrot.slane %v2491, 7
    %v2729 = vsel %vm2660, %v2722, %v2728
    %v2730 = vrot.slane %v2492, 7
    %v2731 = vsel %vm2660, %v2724, %v2730
    %v2732 = vrot.slane %v2493, 7
    %v2733 = vsel %vm2660, %v2726, %v2732
    %v2734 = vrot.slane %v2494, 7
    %v2735 = vsel %vm2660, %v2728, %v2734
    %v2736 = vrot.slane %v2495, 7
    %v2737 = vsel %vm2660, %v2730, %v2736
    %v2738 = vrot.slane %v2496, 7
    %v2739 = vsel %vm2660, %v2732, %v2738
    %v2740 = vrot.slane %v2497, 7
    %v2741 = vsel %vm2660, %v2734, %v2740
    %v2742 = vrot.slane %v2498, 7
    %v2743 = vsel %vm2660, %v2736, %v2742
    %v2744 = vrot.slane %v2499, 7
    %v2745 = vsel %vm2660, %v2738, %v2744
    %v2746 = vrot.slane %v2500, 7
    %v2747 = vsel %vm2660, %v2740, %v2746
    %v2748 = vrot.slane %v2501, 7
    %v2749 = vsel %vm2660, %v2742, %v2748
    %v2750 = vrot.slane %v2502, 7
    %v2751 = vsel %vm2660, %v2744, %v2750
    %v2752 = vrot.slane %v2503, 7
    %v2753 = vsel %vm2660, %v2746, %v2752
    %v2754 = vrot.slane %v2504, 7
    %v2755 = vsel %vm2660, %v2748, %v2754
    %v2756 = vrot.slane %v2505, 7
    %v2757 = vsel %vm2660, %v2750, %v2756
    %v2758 = vrot.slane %v2506, 7
    %v2759 = vsel %vm2660, %v2752, %v2758
    %v2760 = vrot.slane %v2507, 7
    %v2761 = vsel %vm2660, %v2754, %v2760
    %v2762 = vrot.slane %v2508, 7
    %v2763 = vsel %vm2660, %v2756, %v2762
    %v2764 = vrot.slane %v2509, 7
    %v2765 = vsel %vm2660, %v2758, %v2764
    %v2766 = vrot.slane %v2510, 7
    %v2767 = vsel %vm2660, %v2760, %v2766
    %v2768 = vrot.slane %v2511, 7
    %v2769 = vsel %vm2660, %v2762, %v2768
    %v2770 = vrot.slane %v2512, 7
    %v2771 = vsel %vm2660, %v2764, %v2770
    %v2772 = vrot.slane %v2513, 7
    %v2773 = vsel %vm2660, %v2766, %v2772
    %v2774 = vrot.slane %v2514, 7
    %v2775 = vsel %vm2660, %v2768, %v2774
    %v2776 = vrot.slane %v2515, 7
    %v2777 = vsel %vm2660, %v2770, %v2776
    %v2778 = vrot.slane %v2516, 7
    %v2779 = vsel %vm2660, %v2772, %v2778
    %v2780 = vrot.slane %v2517, 7
    %v2781 = vsel %vm2660, %v2774, %v2780
    %v2782 = vrot.slane %v2518, 7
    %v2783 = vsel %vm2660, %v2776, %v2782
    %v2784 = vrot.slane %v2519, 7
    %v2785 = vsel %vm2660, %v2778, %v2784
    %v2786 = vrot.slane %v2520, 7
    %v2787 = vsel %vm2660, %v2780, %v2786
    %v2788 = vrot.slane %v2521, 7
    %v2789 = vsel %vm2660, %v2782, %v2788
    %v2790 = vrot.slane %v2522, 7
    %v2791 = vsel %vm2660, %v2784, %v2790
    %v2792 = vrot.slane %v2523, 7
    %v2793 = vsel %vm2660, %v2786, %v2792
    %v2794 = vrot.slane %v2524, 7
    %v2795 = vsel %vm2660, %v2788, %v2794
    %v2796 = vrot.slane %v2525, 7
    %v2797 = vsel %vm2660, %v2790, %v2796
    %v2798 = vrot.slane %v2526, 7
    %v2799 = vsel %vm2660, %v2792, %v2798
    %v2800 = vrot.slane %v2527, 7
    %v2801 = vsel %vm2660, %v2794, %v2800
    %v2802 = vrot.slane %v2528, 7
    %v2803 = vsel %vm2660, %v2796, %v2802
    %v2804 = vrot.slane %v2529, 7
    %v2805 = vsel %vm2660, %v2798, %v2804
    %v2806 = vrot.slane %v2530, 7
    %v2807 = vsel %vm2660, %v2800, %v2806
    %v2808 = vrot.slane %v2531, 7
    %v2809 = vsel %vm2660, %v2802, %v2808
    %v2810 = vrot.slane %v2532, 7
    %v2811 = vsel %vm2660, %v2804, %v2810
    %v2812 = vrot.slane %v2533, 7
    %v2813 = vsel %vm2660, %v2806, %v2812
    %v2814 = vrot.slane %v2534, 7
    %v2815 = vsel %vm2660, %v2808, %v2814
    %v2816 = vrot.slane %v2535, 7
    %v2817 = vsel %vm2660, %v2810, %v2816
    %v2818 = vrot.slane %v2536, 7
    %v2819 = vsel %vm2660, %v2812, %v2818
    %v2820 = vrot.slane %v2537, 7
    %v2821 = vsel %vm2660, %v2814, %v2820
    %v2822 = vrot.slane %v2538, 7
    %v2823 = vsel %vm2660, %v2816, %v2822
    %v2824 = vrot.slane %v2539, 7
    %v2825 = vsel %vm2660, %v2818, %v2824
    %v2826 = vrot.slane %v2540, 7
    %v2827 = vsel %vm2660, %v2820, %v2826
    %v2828 = vrot.slane %v2541, 7
    %v2829 = vsel %vm2660, %v2822, %v2828
    %v2830 = vrot.slane %v2542, 7
    %v2831 = vsel %vm2660, %v2824, %v2830
    %v2832 = vrot.slane %v2543, 7
    %v2833 = vsel %vm2660, %v2826, %v2832
    %v2834 = vrot.slane %v2544, 7
    %v2835 = vsel %vm2660, %v2828, %v2834
    %v2836 = vrot.slane %v2545, 7
    %v2837 = vsel %vm2660, %v2830, %v2836
    %v2838 = vrot.slane %v2546, 7
    %v2839 = vsel %vm2660, %v2832, %v2838
    %v2840 = vrot.slane %v2547, 7
    %v2841 = vsel %vm2660, %v2834, %v2840
    %v2842 = vrot.slane %v2548, 7
    %v2843 = vsel %vm2660, %v2836, %v2842
    %v2844 = vrot.slane %v2549, 7
    %v2845 = vsel %vm2660, %v2838, %v2844
    %v2846 = vrot.slane %v2550, 7
    %v2847 = vsel %vm2660, %v2840, %v2846
    %v2848 = vrot.slane %v2551, 7
    %v2849 = vsel %vm2660, %v2842, %v2848
    %v2850 = vrot.slane %v2552, 7
    %v2851 = vsel %vm2660, %v2844, %v2850
    %v2852 = vrot.slane %v2553, 7
    %v2853 = vsel %vm2660, %v2846, %v2852
    %v2854 = vrot.slane %v2554, 7
    %v2855 = vsel %vm2660, %v2848, %v2854
    %v2856 = vrot.slane %v2555, 7
    %v2857 = vsel %vm2660, %v2850, %v2856
    %v2858 = vrot.slane %v2556, 7
    %v2859 = vsel %vm2660, %v2852, %v2858
    %v2860 = vrot.slane %v2557, 7
    %v2861 = vsel %vm2660, %v2854, %v2860
    %v2964 = vadd.f32 %v1846, %v2661
    %v2965 = vadd.f32 %v1847, %v2662
    %v2966 = vadd.f32 %v1848, %v2663
    %v2967 = vadd.f32 %v1849, %v2665
    %v2968 = vadd.f32 %v1850, %v2667
    %v2969 = vadd.f32 %v1851, %v2669
    %v2970 = vadd.f32 %v1852, %v2671
    %v2971 = vadd.f32 %v1853, %v2673
    %v2972 = vadd.f32 %v1854, %v2675
    %v2973 = vadd.f32 %v1855, %v2677
    %v2974 = vadd.f32 %v1856, %v2679
    %v2975 = vadd.f32 %v1857, %v2681
    %v2976 = vadd.f32 %v1858, %v2683
    %v2977 = vadd.f32 %v1859, %v2685
    %v2978 = vadd.f32 %v1860, %v2687
    %v2979 = vadd.f32 %v1861, %v2689
    %v2980 = vadd.f32 %v1862, %v2691
    %v2981 = vadd.f32 %v1863, %v2693
    %v2982 = vadd.f32 %v1864, %v2695
    %v2983 = vadd.f32 %v1865, %v2697
    %v2984 = vadd.f32 %v1866, %v2699
    %v2985 = vadd.f32 %v1867, %v2701
    %v2986 = vadd.f32 %v1868, %v2703
    %v2987 = vadd.f32 %v1869, %v2705
    %v2988 = vadd.f32 %v1870, %v2707
    %v2989 = vadd.f32 %v1871, %v2709
    %v2990 = vadd.f32 %v1872, %v2711
    %v2991 = vadd.f32 %v1873, %v2713
    %v2992 = vadd.f32 %v1874, %v2715
    %v2993 = vadd.f32 %v1875, %v2717
    %v2994 = vadd.f32 %v1876, %v2719
    %v2995 = vadd.f32 %v1877, %v2721
    %v2996 = vadd.f32 %v1878, %v2723
    %v2997 = vadd.f32 %v1879, %v2725
    %v2998 = vadd.f32 %v1880, %v2727
    %v2999 = vadd.f32 %v1881, %v2729
    %v3000 = vadd.f32 %v1882, %v2731
    %v3001 = vadd.f32 %v1883, %v2733
    %v3002 = vadd.f32 %v1884, %v2735
    %v3003 = vadd.f32 %v1885, %v2737
    %v3004 = vadd.f32 %v1886, %v2739
    %v3005 = vadd.f32 %v1887, %v2741
    %v3006 = vadd.f32 %v1888, %v2743
    %v3007 = vadd.f32 %v1889, %v2745
    %v3008 = vadd.f32 %v1890, %v2747
    %v3009 = vadd.f32 %v1891, %v2749
    %v3010 = vadd.f32 %v1892, %v2751
    %v3011 = vadd.f32 %v1893, %v2753
    %v3012 = vadd.f32 %v1894, %v2755
    %v3013 = vadd.f32 %v1895, %v2757
    %v3014 = vadd.f32 %v1896, %v2759
    %v3015 = vadd.f32 %v1897, %v2761
    %v3016 = vadd.f32 %v1898, %v2763
    %v3017 = vadd.f32 %v1899, %v2765
    %v3018 = vadd.f32 %v1900, %v2767
    %v3019 = vadd.f32 %v1901, %v2769
    %v3020 = vadd.f32 %v1902, %v2771
    %v3021 = vadd.f32 %v1903, %v2773
    %v3022 = vadd.f32 %v1904, %v2775
    %v3023 = vadd.f32 %v1905, %v2777
    %v3024 = vadd.f32 %v1906, %v2779
    %v3025 = vadd.f32 %v1907, %v2781
    %v3026 = vadd.f32 %v1908, %v2783
    %v3027 = vadd.f32 %v1909, %v2785
    %v3028 = vadd.f32 %v1910, %v2787
    %v3029 = vadd.f32 %v1911, %v2789
    %v3030 = vadd.f32 %v1912, %v2791
    %v3031 = vadd.f32 %v1913, %v2793
    %v3032 = vadd.f32 %v1914, %v2795
    %v3033 = vadd.f32 %v1915, %v2797
    %v3034 = vadd.f32 %v1916, %v2799
    %v3035 = vadd.f32 %v1917, %v2801
    %v3036 = vadd.f32 %v1918, %v2803
    %v3037 = vadd.f32 %v1919, %v2805
    %v3038 = vadd.f32 %v1920, %v2807
    %v3039 = vadd.f32 %v1921, %v2809
    %v3040 = vadd.f32 %v1922, %v2811
    %v3041 = vadd.f32 %v1923, %v2813
    %v3042 = vadd.f32 %v1924, %v2815
    %v3043 = vadd.f32 %v1925, %v2817
    %v3044 = vadd.f32 %v1926, %v2819
    %v3045 = vadd.f32 %v1927, %v2821
    %v3046 = vadd.f32 %v1928, %v2823
    %v3047 = vadd.f32 %v1929, %v2825
    %v3048 = vadd.f32 %v1930, %v2827
    %v3049 = vadd.f32 %v1931, %v2829
    %v3050 = vadd.f32 %v1932, %v2831
    %v3051 = vadd.f32 %v1933, %v2833
    %v3052 = vadd.f32 %v1934, %v2835
    %v3053 = vadd.f32 %v1935, %v2837
    %v3054 = vadd.f32 %v1936, %v2839
    %v3055 = vadd.f32 %v1937, %v2841
    %v3056 = vadd.f32 %v1938, %v2843
    %v3057 = vadd.f32 %v1939, %v2845
    %v3058 = vadd.f32 %v1940, %v2847
    %v3059 = vadd.f32 %v1941, %v2849
    %v3060 = vadd.f32 %v1942, %v2851
    %v3061 = vadd.f32 %v1943, %v2853
    %v3062 = vadd.f32 %v1944, %v2855
    %v3063 = vadd.f32 %v1945, %v2857
    %v3064 = vadd.f32 %v1946, %v2859
    %v3065 = vadd.f32 %v1947, %v2861
    %3168 = vrot.lane.b32.xlu0 %v2964, 2
    %v3169 = vpop.permute.xlu0 %3168
    %3170 = vrot.lane.b32.xlu0 %v2965, 2
    %v3171 = vpop.permute.xlu0 %3170
    %3172 = vrot.lane.b32.xlu0 %v2966, 2
    %v3173 = vpop.permute.xlu0 %3172
    %3174 = vrot.lane.b32.xlu0 %v2967, 2
    %v3175 = vpop.permute.xlu0 %3174
    %3176 = vrot.lane.b32.xlu0 %v2968, 2
    %v3177 = vpop.permute.xlu0 %3176
    %3178 = vrot.lane.b32.xlu0 %v2969, 2
    %v3179 = vpop.permute.xlu0 %3178
    %3180 = vrot.lane.b32.xlu0 %v2970, 2
    %v3181 = vpop.permute.xlu0 %3180
    %3182 = vrot.lane.b32.xlu0 %v2971, 2
    %v3183 = vpop.permute.xlu0 %3182
    %3184 = vrot.lane.b32.xlu0 %v2972, 2
    %v3185 = vpop.permute.xlu0 %3184
    %3186 = vrot.lane.b32.xlu0 %v2973, 2
    %v3187 = vpop.permute.xlu0 %3186
    %3188 = vrot.lane.b32.xlu0 %v2974, 2
    %v3189 = vpop.permute.xlu0 %3188
    %3190 = vrot.lane.b32.xlu0 %v2975, 2
    %v3191 = vpop.permute.xlu0 %3190
    %3192 = vrot.lane.b32.xlu0 %v2976, 2
    %v3193 = vpop.permute.xlu0 %3192
    %3194 = vrot.lane.b32.xlu0 %v2977, 2
    %v3195 = vpop.permute.xlu0 %3194
    %3196 = vrot.lane.b32.xlu0 %v2978, 2
    %v3197 = vpop.permute.xlu0 %3196
    %3198 = vrot.lane.b32.xlu0 %v2979, 2
    %v3199 = vpop.permute.xlu0 %3198
    %3200 = vrot.lane.b32.xlu0 %v2980, 2
    %v3201 = vpop.permute.xlu0 %3200
    %3202 = vrot.lane.b32.xlu0 %v2981, 2
    %v3203 = vpop.permute.xlu0 %3202
    %3204 = vrot.lane.b32.xlu0 %v2982, 2
    %v3205 = vpop.permute.xlu0 %3204
    %3206 = vrot.lane.b32.xlu0 %v2983, 2
    %v3207 = vpop.permute.xlu0 %3206
    %3208 = vrot.lane.b32.xlu0 %v2984, 2
    %v3209 = vpop.permute.xlu0 %3208
    %3210 = vrot.lane.b32.xlu0 %v2985, 2
    %v3211 = vpop.permute.xlu0 %3210
    %3212 = vrot.lane.b32.xlu0 %v2986, 2
    %v3213 = vpop.permute.xlu0 %3212
    %3214 = vrot.lane.b32.xlu0 %v2987, 2
    %v3215 = vpop.permute.xlu0 %3214
    %3216 = vrot.lane.b32.xlu0 %v2988, 2
    %v3217 = vpop.permute.xlu0 %3216
    %3218 = vrot.lane.b32.xlu0 %v2989, 2
    %v3219 = vpop.permute.xlu0 %3218
    %3220 = vrot.lane.b32.xlu0 %v2990, 2
    %v3221 = vpop.permute.xlu0 %3220
    %3222 = vrot.lane.b32.xlu0 %v2991, 2
    %v3223 = vpop.permute.xlu0 %3222
    %3224 = vrot.lane.b32.xlu0 %v2992, 2
    %v3225 = vpop.permute.xlu0 %3224
    %3226 = vrot.lane.b32.xlu0 %v2993, 2
    %v3227 = vpop.permute.xlu0 %3226
    %3228 = vrot.lane.b32.xlu0 %v2994, 2
    %v3229 = vpop.permute.xlu0 %3228
    %3230 = vrot.lane.b32.xlu0 %v2995, 2
    %v3231 = vpop.permute.xlu0 %3230
    %3232 = vrot.lane.b32.xlu0 %v2996, 2
    %v3233 = vpop.permute.xlu0 %3232
    %3234 = vrot.lane.b32.xlu0 %v2997, 2
    %v3235 = vpop.permute.xlu0 %3234
    %3236 = vrot.lane.b32.xlu0 %v2998, 2
    %v3237 = vpop.permute.xlu0 %3236
    %3238 = vrot.lane.b32.xlu0 %v2999, 2
    %v3239 = vpop.permute.xlu0 %3238
    %3240 = vrot.lane.b32.xlu0 %v3000, 2
    %v3241 = vpop.permute.xlu0 %3240
    %3242 = vrot.lane.b32.xlu0 %v3001, 2
    %v3243 = vpop.permute.xlu0 %3242
    %3244 = vrot.lane.b32.xlu0 %v3002, 2
    %v3245 = vpop.permute.xlu0 %3244
    %3246 = vrot.lane.b32.xlu0 %v3003, 2
    %v3247 = vpop.permute.xlu0 %3246
    %3248 = vrot.lane.b32.xlu0 %v3004, 2
    %v3249 = vpop.permute.xlu0 %3248
    %3250 = vrot.lane.b32.xlu0 %v3005, 2
    %v3251 = vpop.permute.xlu0 %3250
    %3252 = vrot.lane.b32.xlu0 %v3006, 2
    %v3253 = vpop.permute.xlu0 %3252
    %3254 = vrot.lane.b32.xlu0 %v3007, 2
    %v3255 = vpop.permute.xlu0 %3254
    %3256 = vrot.lane.b32.xlu0 %v3008, 2
    %v3257 = vpop.permute.xlu0 %3256
    %3258 = vrot.lane.b32.xlu0 %v3009, 2
    %v3259 = vpop.permute.xlu0 %3258
    %3260 = vrot.lane.b32.xlu0 %v3010, 2
    %v3261 = vpop.permute.xlu0 %3260
    %3262 = vrot.lane.b32.xlu0 %v3011, 2
    %v3263 = vpop.permute.xlu0 %3262
    %3264 = vrot.lane.b32.xlu0 %v3012, 2
    %v3265 = vpop.permute.xlu0 %3264
    %3266 = vrot.lane.b32.xlu0 %v3013, 2
    %v3267 = vpop.permute.xlu0 %3266
    %3268 = vrot.lane.b32.xlu0 %v3014, 2
    %v3269 = vpop.permute.xlu0 %3268
    %3270 = vrot.lane.b32.xlu0 %v3015, 2
    %v3271 = vpop.permute.xlu0 %3270
    %3272 = vrot.lane.b32.xlu0 %v3016, 2
    %v3273 = vpop.permute.xlu0 %3272
    %3274 = vrot.lane.b32.xlu0 %v3017, 2
    %v3275 = vpop.permute.xlu0 %3274
    %3276 = vrot.lane.b32.xlu0 %v3018, 2
    %v3277 = vpop.permute.xlu0 %3276
    %3278 = vrot.lane.b32.xlu0 %v3019, 2
    %v3279 = vpop.permute.xlu0 %3278
    %3280 = vrot.lane.b32.xlu0 %v3020, 2
    %v3281 = vpop.permute.xlu0 %3280
    %3282 = vrot.lane.b32.xlu0 %v3021, 2
    %v3283 = vpop.permute.xlu0 %3282
    %3284 = vrot.lane.b32.xlu0 %v3022, 2
    %v3285 = vpop.permute.xlu0 %3284
    %3286 = vrot.lane.b32.xlu0 %v3023, 2
    %v3287 = vpop.permute.xlu0 %3286
    %3288 = vrot.lane.b32.xlu0 %v3024, 2
    %v3289 = vpop.permute.xlu0 %3288
    %3290 = vrot.lane.b32.xlu0 %v3025, 2
    %v3291 = vpop.permute.xlu0 %3290
    %3292 = vrot.lane.b32.xlu0 %v3026, 2
    %v3293 = vpop.permute.xlu0 %3292
    %3294 = vrot.lane.b32.xlu0 %v3027, 2
    %v3295 = vpop.permute.xlu0 %3294
    %3296 = vrot.lane.b32.xlu0 %v3028, 2
    %v3297 = vpop.permute.xlu0 %3296
    %3298 = vrot.lane.b32.xlu0 %v3029, 2
    %v3299 = vpop.permute.xlu0 %3298
    %3300 = vrot.lane.b32.xlu0 %v3030, 2
    %v3301 = vpop.permute.xlu0 %3300
    %3302 = vrot.lane.b32.xlu0 %v3031, 2
    %v3303 = vpop.permute.xlu0 %3302
    %3304 = vrot.lane.b32.xlu0 %v3032, 2
    %v3305 = vpop.permute.xlu0 %3304
    %3306 = vrot.lane.b32.xlu0 %v3033, 2
    %v3307 = vpop.permute.xlu0 %3306
    %3308 = vrot.lane.b32.xlu0 %v3034, 2
    %v3309 = vpop.permute.xlu0 %3308
    %3310 = vrot.lane.b32.xlu0 %v3035, 2
    %v3311 = vpop.permute.xlu0 %3310
    %3312 = vrot.lane.b32.xlu0 %v3036, 2
    %v3313 = vpop.permute.xlu0 %3312
    %3314 = vrot.lane.b32.xlu0 %v3037, 2
    %v3315 = vpop.permute.xlu0 %3314
    %3316 = vrot.lane.b32.xlu0 %v3038, 2
    %v3317 = vpop.permute.xlu0 %3316
    %3318 = vrot.lane.b32.xlu0 %v3039, 2
    %v3319 = vpop.permute.xlu0 %3318
    %3320 = vrot.lane.b32.xlu0 %v3040, 2
    %v3321 = vpop.permute.xlu0 %3320
    %3322 = vrot.lane.b32.xlu0 %v3041, 2
    %v3323 = vpop.permute.xlu0 %3322
    %3324 = vrot.lane.b32.xlu0 %v3042, 2
    %v3325 = vpop.permute.xlu0 %3324
    %3326 = vrot.lane.b32.xlu0 %v3043, 2
    %v3327 = vpop.permute.xlu0 %3326
    %3328 = vrot.lane.b32.xlu0 %v3044, 2
    %v3329 = vpop.permute.xlu0 %3328
    %3330 = vrot.lane.b32.xlu0 %v3045, 2
    %v3331 = vpop.permute.xlu0 %3330
    %3332 = vrot.lane.b32.xlu0 %v3046, 2
    %v3333 = vpop.permute.xlu0 %3332
    %3334 = vrot.lane.b32.xlu0 %v3047, 2
    %v3335 = vpop.permute.xlu0 %3334
    %3336 = vrot.lane.b32.xlu0 %v3048, 2
    %v3337 = vpop.permute.xlu0 %3336
    %3338 = vrot.lane.b32.xlu0 %v3049, 2
    %v3339 = vpop.permute.xlu0 %3338
    %3340 = vrot.lane.b32.xlu0 %v3050, 2
    %v3341 = vpop.permute.xlu0 %3340
    %3342 = vrot.lane.b32.xlu0 %v3051, 2
    %v3343 = vpop.permute.xlu0 %3342
    %3344 = vrot.lane.b32.xlu0 %v3052, 2
    %v3345 = vpop.permute.xlu0 %3344
    %3346 = vrot.lane.b32.xlu0 %v3053, 2
    %v3347 = vpop.permute.xlu0 %3346
    %3348 = vrot.lane.b32.xlu0 %v3054, 2
    %v3349 = vpop.permute.xlu0 %3348
    %3350 = vrot.lane.b32.xlu0 %v3055, 2
    %v3351 = vpop.permute.xlu0 %3350
    %3352 = vrot.lane.b32.xlu0 %v3056, 2
    %v3353 = vpop.permute.xlu0 %3352
    %3354 = vrot.lane.b32.xlu0 %v3057, 2
    %v3355 = vpop.permute.xlu0 %3354
    %3356 = vrot.lane.b32.xlu0 %v3058, 2
    %v3357 = vpop.permute.xlu0 %3356
    %3358 = vrot.lane.b32.xlu0 %v3059, 2
    %v3359 = vpop.permute.xlu0 %3358
    %3360 = vrot.lane.b32.xlu0 %v3060, 2
    %v3361 = vpop.permute.xlu0 %3360
    %3362 = vrot.lane.b32.xlu0 %v3061, 2
    %v3363 = vpop.permute.xlu0 %3362
    %3364 = vrot.lane.b32.xlu0 %v3062, 2
    %v3365 = vpop.permute.xlu0 %3364
    %3366 = vrot.lane.b32.xlu0 %v3063, 2
    %v3367 = vpop.permute.xlu0 %3366
    %3368 = vrot.lane.b32.xlu0 %v3064, 2
    %v3369 = vpop.permute.xlu0 %3368
    %3370 = vrot.lane.b32.xlu0 %v3065, 2
    %v3371 = vpop.permute.xlu0 %3370
    %vm3372 = vcmask 15360
    %v3373 = vsel %vm3372, %v3169, %v3171
    %v3374 = vsel %vm3372, %v3171, %v3173
    %v3375 = vsel %vm3372, %v3175, %v3177
    %v3376 = vsel %vm3372, %v3177, %v3179
    %v3377 = vsel %vm3372, %v3181, %v3183
    %v3378 = vsel %vm3372, %v3183, %v3185
    %v3379 = vsel %vm3372, %v3187, %v3189
    %v3380 = vsel %vm3372, %v3189, %v3191
    %v3381 = vsel %vm3372, %v3193, %v3195
    %v3382 = vsel %vm3372, %v3195, %v3197
    %v3383 = vsel %vm3372, %v3199, %v3201
    %v3384 = vsel %vm3372, %v3201, %v3203
    %v3385 = vsel %vm3372, %v3205, %v3207
    %v3386 = vsel %vm3372, %v3207, %v3209
    %v3387 = vsel %vm3372, %v3211, %v3213
    %v3388 = vsel %vm3372, %v3213, %v3215
    %v3389 = vsel %vm3372, %v3217, %v3219
    %v3390 = vsel %vm3372, %v3219, %v3221
    %v3391 = vsel %vm3372, %v3223, %v3225
    %v3392 = vsel %vm3372, %v3225, %v3227
    %v3393 = vsel %vm3372, %v3229, %v3231
    %v3394 = vsel %vm3372, %v3231, %v3233
    %v3395 = vsel %vm3372, %v3235, %v3237
    %v3396 = vsel %vm3372, %v3237, %v3239
    %v3397 = vsel %vm3372, %v3241, %v3243
    %v3398 = vsel %vm3372, %v3243, %v3245
    %v3399 = vsel %vm3372, %v3247, %v3249
    %v3400 = vsel %vm3372, %v3249, %v3251
    %v3401 = vsel %vm3372, %v3253, %v3255
    %v3402 = vsel %vm3372, %v3255, %v3257
    %v3403 = vsel %vm3372, %v3259, %v3261
    %v3404 = vsel %vm3372, %v3261, %v3263
    %v3405 = vsel %vm3372, %v3265, %v3267
    %v3406 = vsel %vm3372, %v3267, %v3269
    %v3407 = vsel %vm3372, %v3271, %v3273
    %v3408 = vsel %vm3372, %v3273, %v3275
    %v3409 = vsel %vm3372, %v3277, %v3279
    %v3410 = vsel %vm3372, %v3279, %v3281
    %v3411 = vsel %vm3372, %v3283, %v3285
    %v3412 = vsel %vm3372, %v3285, %v3287
    %v3413 = vsel %vm3372, %v3289, %v3291
    %v3414 = vsel %vm3372, %v3291, %v3293
    %v3415 = vsel %vm3372, %v3295, %v3297
    %v3416 = vsel %vm3372, %v3297, %v3299
    %v3417 = vsel %vm3372, %v3301, %v3303
    %v3418 = vsel %vm3372, %v3303, %v3305
    %v3419 = vsel %vm3372, %v3307, %v3309
    %v3420 = vsel %vm3372, %v3309, %v3311
    %v3421 = vsel %vm3372, %v3313, %v3315
    %v3422 = vsel %vm3372, %v3315, %v3317
    %v3423 = vsel %vm3372, %v3319, %v3321
    %v3424 = vsel %vm3372, %v3321, %v3323
    %v3425 = vsel %vm3372, %v3325, %v3327
    %v3426 = vsel %vm3372, %v3327, %v3329
    %v3427 = vsel %vm3372, %v3331, %v3333
    %v3428 = vsel %vm3372, %v3333, %v3335
    %v3429 = vsel %vm3372, %v3337, %v3339
    %v3430 = vsel %vm3372, %v3339, %v3341
    %v3431 = vsel %vm3372, %v3343, %v3345
    %v3432 = vsel %vm3372, %v3345, %v3347
    %v3433 = vsel %vm3372, %v3349, %v3351
    %v3434 = vsel %vm3372, %v3351, %v3353
    %v3435 = vsel %vm3372, %v3355, %v3357
    %v3436 = vsel %vm3372, %v3357, %v3359
    %v3437 = vsel %vm3372, %v3361, %v3363
    %v3438 = vsel %vm3372, %v3363, %v3365
    %v3439 = vsel %vm3372, %v3367, %v3369
    %v3440 = vsel %vm3372, %v3369, %v3371
    %v3543 = vsub.f32 %v2964, %v3169
    %v3544 = vsub.f32 %v2965, %v3373
    %v3545 = vsub.f32 %v2966, %v3374
    %v3546 = vsub.f32 %v2967, %v3175
    %v3547 = vsub.f32 %v2968, %v3375
    %v3548 = vsub.f32 %v2969, %v3376
    %v3549 = vsub.f32 %v2970, %v3181
    %v3550 = vsub.f32 %v2971, %v3377
    %v3551 = vsub.f32 %v2972, %v3378
    %v3552 = vsub.f32 %v2973, %v3187
    %v3553 = vsub.f32 %v2974, %v3379
    %v3554 = vsub.f32 %v2975, %v3380
    %v3555 = vsub.f32 %v2976, %v3193
    %v3556 = vsub.f32 %v2977, %v3381
    %v3557 = vsub.f32 %v2978, %v3382
    %v3558 = vsub.f32 %v2979, %v3199
    %v3559 = vsub.f32 %v2980, %v3383
    %v3560 = vsub.f32 %v2981, %v3384
    %v3561 = vsub.f32 %v2982, %v3205
    %v3562 = vsub.f32 %v2983, %v3385
    %v3563 = vsub.f32 %v2984, %v3386
    %v3564 = vsub.f32 %v2985, %v3211
    %v3565 = vsub.f32 %v2986, %v3387
    %v3566 = vsub.f32 %v2987, %v3388
    %v3567 = vsub.f32 %v2988, %v3217
    %v3568 = vsub.f32 %v2989, %v3389
    %v3569 = vsub.f32 %v2990, %v3390
    %v3570 = vsub.f32 %v2991, %v3223
    %v3571 = vsub.f32 %v2992, %v3391
    %v3572 = vsub.f32 %v2993, %v3392
    %v3573 = vsub.f32 %v2994, %v3229
    %v3574 = vsub.f32 %v2995, %v3393
    %v3575 = vsub.f32 %v2996, %v3394
    %v3576 = vsub.f32 %v2997, %v3235
    %v3577 = vsub.f32 %v2998, %v3395
    %v3578 = vsub.f32 %v2999, %v3396
    %v3579 = vsub.f32 %v3000, %v3241
    %v3580 = vsub.f32 %v3001, %v3397
    %v3581 = vsub.f32 %v3002, %v3398
    %v3582 = vsub.f32 %v3003, %v3247
    %v3583 = vsub.f32 %v3004, %v3399
    %v3584 = vsub.f32 %v3005, %v3400
    %v3585 = vsub.f32 %v3006, %v3253
    %v3586 = vsub.f32 %v3007, %v3401
    %v3587 = vsub.f32 %v3008, %v3402
    %v3588 = vsub.f32 %v3009, %v3259
    %v3589 = vsub.f32 %v3010, %v3403
    %v3590 = vsub.f32 %v3011, %v3404
    %v3591 = vsub.f32 %v3012, %v3265
    %v3592 = vsub.f32 %v3013, %v3405
    %v3593 = vsub.f32 %v3014, %v3406
    %v3594 = vsub.f32 %v3015, %v3271
    %v3595 = vsub.f32 %v3016, %v3407
    %v3596 = vsub.f32 %v3017, %v3408
    %v3597 = vsub.f32 %v3018, %v3277
    %v3598 = vsub.f32 %v3019, %v3409
    %v3599 = vsub.f32 %v3020, %v3410
    %v3600 = vsub.f32 %v3021, %v3283
    %v3601 = vsub.f32 %v3022, %v3411
    %v3602 = vsub.f32 %v3023, %v3412
    %v3603 = vsub.f32 %v3024, %v3289
    %v3604 = vsub.f32 %v3025, %v3413
    %v3605 = vsub.f32 %v3026, %v3414
    %v3606 = vsub.f32 %v3027, %v3295
    %v3607 = vsub.f32 %v3028, %v3415
    %v3608 = vsub.f32 %v3029, %v3416
    %v3609 = vsub.f32 %v3030, %v3301
    %v3610 = vsub.f32 %v3031, %v3417
    %v3611 = vsub.f32 %v3032, %v3418
    %v3612 = vsub.f32 %v3033, %v3307
    %v3613 = vsub.f32 %v3034, %v3419
    %v3614 = vsub.f32 %v3035, %v3420
    %v3615 = vsub.f32 %v3036, %v3313
    %v3616 = vsub.f32 %v3037, %v3421
    %v3617 = vsub.f32 %v3038, %v3422
    %v3618 = vsub.f32 %v3039, %v3319
    %v3619 = vsub.f32 %v3040, %v3423
    %v3620 = vsub.f32 %v3041, %v3424
    %v3621 = vsub.f32 %v3042, %v3325
    %v3622 = vsub.f32 %v3043, %v3425
    %v3623 = vsub.f32 %v3044, %v3426
    %v3624 = vsub.f32 %v3045, %v3331
    %v3625 = vsub.f32 %v3046, %v3427
    %v3626 = vsub.f32 %v3047, %v3428
    %v3627 = vsub.f32 %v3048, %v3337
    %v3628 = vsub.f32 %v3049, %v3429
    %v3629 = vsub.f32 %v3050, %v3430
    %v3630 = vsub.f32 %v3051, %v3343
    %v3631 = vsub.f32 %v3052, %v3431
    %v3632 = vsub.f32 %v3053, %v3432
    %v3633 = vsub.f32 %v3054, %v3349
    %v3634 = vsub.f32 %v3055, %v3433
    %v3635 = vsub.f32 %v3056, %v3434
    %v3636 = vsub.f32 %v3057, %v3355
    %v3637 = vsub.f32 %v3058, %v3435
    %v3638 = vsub.f32 %v3059, %v3436
    %v3639 = vsub.f32 %v3060, %v3361
    %v3640 = vsub.f32 %v3061, %v3437
    %v3641 = vsub.f32 %v3062, %v3438
    %v3642 = vsub.f32 %v3063, %v3367
    %v3643 = vsub.f32 %v3064, %v3439
    %v3644 = vsub.f32 %v3065, %v3440
    %v3747 = vrot.slane %v3543, 2
    %v3748 = vrot.slane %v3546, 2
    %v3749 = vsel %vm2050, %v3747, %v3748
    %v3750 = vrot.slane %v3544, 2
    %v3751 = vrot.slane %v3547, 2
    %v3752 = vsel %vm2050, %v3750, %v3751
    %v3753 = vrot.slane %v3545, 2
    %v3754 = vrot.slane %v3548, 2
    %v3755 = vsel %vm2050, %v3753, %v3754
    %v3756 = vrot.slane %v3549, 2
    %v3757 = vsel %vm2050, %v3748, %v3756
    %v3758 = vrot.slane %v3550, 2
    %v3759 = vsel %vm2050, %v3751, %v3758
    %v3760 = vrot.slane %v3551, 2
    %v3761 = vsel %vm2050, %v3754, %v3760
    %v3762 = vrot.slane %v3552, 2
    %v3763 = vsel %vm2050, %v3756, %v3762
    %v3764 = vrot.slane %v3553, 2
    %v3765 = vsel %vm2050, %v3758, %v3764
    %v3766 = vrot.slane %v3554, 2
    %v3767 = vsel %vm2050, %v3760, %v3766
    %v3768 = vrot.slane %v3555, 2
    %v3769 = vsel %vm2050, %v3762, %v3768
    %v3770 = vrot.slane %v3556, 2
    %v3771 = vsel %vm2050, %v3764, %v3770
    %v3772 = vrot.slane %v3557, 2
    %v3773 = vsel %vm2050, %v3766, %v3772
    %v3774 = vrot.slane %v3558, 2
    %v3775 = vsel %vm2050, %v3768, %v3774
    %v3776 = vrot.slane %v3559, 2
    %v3777 = vsel %vm2050, %v3770, %v3776
    %v3778 = vrot.slane %v3560, 2
    %v3779 = vsel %vm2050, %v3772, %v3778
    %v3780 = vrot.slane %v3561, 2
    %v3781 = vsel %vm2050, %v3774, %v3780
    %v3782 = vrot.slane %v3562, 2
    %v3783 = vsel %vm2050, %v3776, %v3782
    %v3784 = vrot.slane %v3563, 2
    %v3785 = vsel %vm2050, %v3778, %v3784
    %v3786 = vrot.slane %v3564, 2
    %v3787 = vsel %vm2050, %v3780, %v3786
    %v3788 = vrot.slane %v3565, 2
    %v3789 = vsel %vm2050, %v3782, %v3788
    %v3790 = vrot.slane %v3566, 2
    %v3791 = vsel %vm2050, %v3784, %v3790
    %v3792 = vrot.slane %v3567, 2
    %v3793 = vsel %vm2050, %v3786, %v3792
    %v3794 = vrot.slane %v3568, 2
    %v3795 = vsel %vm2050, %v3788, %v3794
    %v3796 = vrot.slane %v3569, 2
    %v3797 = vsel %vm2050, %v3790, %v3796
    %v3798 = vrot.slane %v3570, 2
    %v3799 = vsel %vm2050, %v3792, %v3798
    %v3800 = vrot.slane %v3571, 2
    %v3801 = vsel %vm2050, %v3794, %v3800
    %v3802 = vrot.slane %v3572, 2
    %v3803 = vsel %vm2050, %v3796, %v3802
    %v3804 = vrot.slane %v3573, 2
    %v3805 = vsel %vm2050, %v3798, %v3804
    %v3806 = vrot.slane %v3574, 2
    %v3807 = vsel %vm2050, %v3800, %v3806
    %v3808 = vrot.slane %v3575, 2
    %v3809 = vsel %vm2050, %v3802, %v3808
    %v3810 = vrot.slane %v3576, 2
    %v3811 = vsel %vm2050, %v3804, %v3810
    %v3812 = vrot.slane %v3577, 2
    %v3813 = vsel %vm2050, %v3806, %v3812
    %v3814 = vrot.slane %v3578, 2
    %v3815 = vsel %vm2050, %v3808, %v3814
    %v3816 = vrot.slane %v3579, 2
    %v3817 = vsel %vm2050, %v3810, %v3816
    %v3818 = vrot.slane %v3580, 2
    %v3819 = vsel %vm2050, %v3812, %v3818
    %v3820 = vrot.slane %v3581, 2
    %v3821 = vsel %vm2050, %v3814, %v3820
    %v3822 = vrot.slane %v3582, 2
    %v3823 = vsel %vm2050, %v3816, %v3822
    %v3824 = vrot.slane %v3583, 2
    %v3825 = vsel %vm2050, %v3818, %v3824
    %v3826 = vrot.slane %v3584, 2
    %v3827 = vsel %vm2050, %v3820, %v3826
    %v3828 = vrot.slane %v3585, 2
    %v3829 = vsel %vm2050, %v3822, %v3828
    %v3830 = vrot.slane %v3586, 2
    %v3831 = vsel %vm2050, %v3824, %v3830
    %v3832 = vrot.slane %v3587, 2
    %v3833 = vsel %vm2050, %v3826, %v3832
    %v3834 = vrot.slane %v3588, 2
    %v3835 = vsel %vm2050, %v3828, %v3834
    %v3836 = vrot.slane %v3589, 2
    %v3837 = vsel %vm2050, %v3830, %v3836
    %v3838 = vrot.slane %v3590, 2
    %v3839 = vsel %vm2050, %v3832, %v3838
    %v3840 = vrot.slane %v3591, 2
    %v3841 = vsel %vm2050, %v3834, %v3840
    %v3842 = vrot.slane %v3592, 2
    %v3843 = vsel %vm2050, %v3836, %v3842
    %v3844 = vrot.slane %v3593, 2
    %v3845 = vsel %vm2050, %v3838, %v3844
    %v3846 = vrot.slane %v3594, 2
    %v3847 = vsel %vm2050, %v3840, %v3846
    %v3848 = vrot.slane %v3595, 2
    %v3849 = vsel %vm2050, %v3842, %v3848
    %v3850 = vrot.slane %v3596, 2
    %v3851 = vsel %vm2050, %v3844, %v3850
    %v3852 = vrot.slane %v3597, 2
    %v3853 = vsel %vm2050, %v3846, %v3852
    %v3854 = vrot.slane %v3598, 2
    %v3855 = vsel %vm2050, %v3848, %v3854
    %v3856 = vrot.slane %v3599, 2
    %v3857 = vsel %vm2050, %v3850, %v3856
    %v3858 = vrot.slane %v3600, 2
    %v3859 = vsel %vm2050, %v3852, %v3858
    %v3860 = vrot.slane %v3601, 2
    %v3861 = vsel %vm2050, %v3854, %v3860
    %v3862 = vrot.slane %v3602, 2
    %v3863 = vsel %vm2050, %v3856, %v3862
    %v3864 = vrot.slane %v3603, 2
    %v3865 = vsel %vm2050, %v3858, %v3864
    %v3866 = vrot.slane %v3604, 2
    %v3867 = vsel %vm2050, %v3860, %v3866
    %v3868 = vrot.slane %v3605, 2
    %v3869 = vsel %vm2050, %v3862, %v3868
    %v3870 = vrot.slane %v3606, 2
    %v3871 = vsel %vm2050, %v3864, %v3870
    %v3872 = vrot.slane %v3607, 2
    %v3873 = vsel %vm2050, %v3866, %v3872
    %v3874 = vrot.slane %v3608, 2
    %v3875 = vsel %vm2050, %v3868, %v3874
    %v3876 = vrot.slane %v3609, 2
    %v3877 = vsel %vm2050, %v3870, %v3876
    %v3878 = vrot.slane %v3610, 2
    %v3879 = vsel %vm2050, %v3872, %v3878
    %v3880 = vrot.slane %v3611, 2
    %v3881 = vsel %vm2050, %v3874, %v3880
    %v3882 = vrot.slane %v3612, 2
    %v3883 = vsel %vm2050, %v3876, %v3882
    %v3884 = vrot.slane %v3613, 2
    %v3885 = vsel %vm2050, %v3878, %v3884
    %v3886 = vrot.slane %v3614, 2
    %v3887 = vsel %vm2050, %v3880, %v3886
    %v3888 = vrot.slane %v3615, 2
    %v3889 = vsel %vm2050, %v3882, %v3888
    %v3890 = vrot.slane %v3616, 2
    %v3891 = vsel %vm2050, %v3884, %v3890
    %v3892 = vrot.slane %v3617, 2
    %v3893 = vsel %vm2050, %v3886, %v3892
    %v3894 = vrot.slane %v3618, 2
    %v3895 = vsel %vm2050, %v3888, %v3894
    %v3896 = vrot.slane %v3619, 2
    %v3897 = vsel %vm2050, %v3890, %v3896
    %v3898 = vrot.slane %v3620, 2
    %v3899 = vsel %vm2050, %v3892, %v3898
    %v3900 = vrot.slane %v3621, 2
    %v3901 = vsel %vm2050, %v3894, %v3900
    %v3902 = vrot.slane %v3622, 2
    %v3903 = vsel %vm2050, %v3896, %v3902
    %v3904 = vrot.slane %v3623, 2
    %v3905 = vsel %vm2050, %v3898, %v3904
    %v3906 = vrot.slane %v3624, 2
    %v3907 = vsel %vm2050, %v3900, %v3906
    %v3908 = vrot.slane %v3625, 2
    %v3909 = vsel %vm2050, %v3902, %v3908
    %v3910 = vrot.slane %v3626, 2
    %v3911 = vsel %vm2050, %v3904, %v3910
    %v3912 = vrot.slane %v3627, 2
    %v3913 = vsel %vm2050, %v3906, %v3912
    %v3914 = vrot.slane %v3628, 2
    %v3915 = vsel %vm2050, %v3908, %v3914
    %v3916 = vrot.slane %v3629, 2
    %v3917 = vsel %vm2050, %v3910, %v3916
    %v3918 = vrot.slane %v3630, 2
    %v3919 = vsel %vm2050, %v3912, %v3918
    %v3920 = vrot.slane %v3631, 2
    %v3921 = vsel %vm2050, %v3914, %v3920
    %v3922 = vrot.slane %v3632, 2
    %v3923 = vsel %vm2050, %v3916, %v3922
    %v3924 = vrot.slane %v3633, 2
    %v3925 = vsel %vm2050, %v3918, %v3924
    %v3926 = vrot.slane %v3634, 2
    %v3927 = vsel %vm2050, %v3920, %v3926
    %v3928 = vrot.slane %v3635, 2
    %v3929 = vsel %vm2050, %v3922, %v3928
    %v3930 = vrot.slane %v3636, 2
    %v3931 = vsel %vm2050, %v3924, %v3930
    %v3932 = vrot.slane %v3637, 2
    %v3933 = vsel %vm2050, %v3926, %v3932
    %v3934 = vrot.slane %v3638, 2
    %v3935 = vsel %vm2050, %v3928, %v3934
    %v3936 = vrot.slane %v3639, 2
    %v3937 = vsel %vm2050, %v3930, %v3936
    %v3938 = vrot.slane %v3640, 2
    %v3939 = vsel %vm2050, %v3932, %v3938
    %v3940 = vrot.slane %v3641, 2
    %v3941 = vsel %vm2050, %v3934, %v3940
    %v3942 = vrot.slane %v3642, 2
    %v3943 = vsel %vm2050, %v3936, %v3942
    %v3944 = vrot.slane %v3643, 2
    %v3945 = vsel %vm2050, %v3938, %v3944
    %v3946 = vrot.slane %v3644, 2
    %v3947 = vsel %vm2050, %v3940, %v3946
    %v4047 = vadd.f32 %v3543, %v3749
    %v4048 = vadd.f32 %v3544, %v3752
    %v4049 = vadd.f32 %v3545, %v3755
    %v4050 = vadd.f32 %v3546, %v3757
    %v4051 = vadd.f32 %v3547, %v3759
    %v4052 = vadd.f32 %v3548, %v3761
    %v4053 = vadd.f32 %v3549, %v3763
    %v4054 = vadd.f32 %v3550, %v3765
    %v4055 = vadd.f32 %v3551, %v3767
    %v4056 = vadd.f32 %v3552, %v3769
    %v4057 = vadd.f32 %v3553, %v3771
    %v4058 = vadd.f32 %v3554, %v3773
    %v4059 = vadd.f32 %v3555, %v3775
    %v4060 = vadd.f32 %v3556, %v3777
    %v4061 = vadd.f32 %v3557, %v3779
    %v4062 = vadd.f32 %v3558, %v3781
    %v4063 = vadd.f32 %v3559, %v3783
    %v4064 = vadd.f32 %v3560, %v3785
    %v4065 = vadd.f32 %v3561, %v3787
    %v4066 = vadd.f32 %v3562, %v3789
    %v4067 = vadd.f32 %v3563, %v3791
    %v4068 = vadd.f32 %v3564, %v3793
    %v4069 = vadd.f32 %v3565, %v3795
    %v4070 = vadd.f32 %v3566, %v3797
    %v4071 = vadd.f32 %v3567, %v3799
    %v4072 = vadd.f32 %v3568, %v3801
    %v4073 = vadd.f32 %v3569, %v3803
    %v4074 = vadd.f32 %v3570, %v3805
    %v4075 = vadd.f32 %v3571, %v3807
    %v4076 = vadd.f32 %v3572, %v3809
    %v4077 = vadd.f32 %v3573, %v3811
    %v4078 = vadd.f32 %v3574, %v3813
    %v4079 = vadd.f32 %v3575, %v3815
    %v4080 = vadd.f32 %v3576, %v3817
    %v4081 = vadd.f32 %v3577, %v3819
    %v4082 = vadd.f32 %v3578, %v3821
    %v4083 = vadd.f32 %v3579, %v3823
    %v4084 = vadd.f32 %v3580, %v3825
    %v4085 = vadd.f32 %v3581, %v3827
    %v4086 = vadd.f32 %v3582, %v3829
    %v4087 = vadd.f32 %v3583, %v3831
    %v4088 = vadd.f32 %v3584, %v3833
    %v4089 = vadd.f32 %v3585, %v3835
    %v4090 = vadd.f32 %v3586, %v3837
    %v4091 = vadd.f32 %v3587, %v3839
    %v4092 = vadd.f32 %v3588, %v3841
    %v4093 = vadd.f32 %v3589, %v3843
    %v4094 = vadd.f32 %v3590, %v3845
    %v4095 = vadd.f32 %v3591, %v3847
    %v4096 = vadd.f32 %v3592, %v3849
    %v4097 = vadd.f32 %v3593, %v3851
    %v4098 = vadd.f32 %v3594, %v3853
    %v4099 = vadd.f32 %v3595, %v3855
    %v4100 = vadd.f32 %v3596, %v3857
    %v4101 = vadd.f32 %v3597, %v3859
    %v4102 = vadd.f32 %v3598, %v3861
    %v4103 = vadd.f32 %v3599, %v3863
    %v4104 = vadd.f32 %v3600, %v3865
    %v4105 = vadd.f32 %v3601, %v3867
    %v4106 = vadd.f32 %v3602, %v3869
    %v4107 = vadd.f32 %v3603, %v3871
    %v4108 = vadd.f32 %v3604, %v3873
    %v4109 = vadd.f32 %v3605, %v3875
    %v4110 = vadd.f32 %v3606, %v3877
    %v4111 = vadd.f32 %v3607, %v3879
    %v4112 = vadd.f32 %v3608, %v3881
    %v4113 = vadd.f32 %v3609, %v3883
    %v4114 = vadd.f32 %v3610, %v3885
    %v4115 = vadd.f32 %v3611, %v3887
    %v4116 = vadd.f32 %v3612, %v3889
    %v4117 = vadd.f32 %v3613, %v3891
    %v4118 = vadd.f32 %v3614, %v3893
    %v4119 = vadd.f32 %v3615, %v3895
    %v4120 = vadd.f32 %v3616, %v3897
    %v4121 = vadd.f32 %v3617, %v3899
    %v4122 = vadd.f32 %v3618, %v3901
    %v4123 = vadd.f32 %v3619, %v3903
    %v4124 = vadd.f32 %v3620, %v3905
    %v4125 = vadd.f32 %v3621, %v3907
    %v4126 = vadd.f32 %v3622, %v3909
    %v4127 = vadd.f32 %v3623, %v3911
    %v4128 = vadd.f32 %v3624, %v3913
    %v4129 = vadd.f32 %v3625, %v3915
    %v4130 = vadd.f32 %v3626, %v3917
    %v4131 = vadd.f32 %v3627, %v3919
    %v4132 = vadd.f32 %v3628, %v3921
    %v4133 = vadd.f32 %v3629, %v3923
    %v4134 = vadd.f32 %v3630, %v3925
    %v4135 = vadd.f32 %v3631, %v3927
    %v4136 = vadd.f32 %v3632, %v3929
    %v4137 = vadd.f32 %v3633, %v3931
    %v4138 = vadd.f32 %v3634, %v3933
    %v4139 = vadd.f32 %v3635, %v3935
    %v4140 = vadd.f32 %v3636, %v3937
    %v4141 = vadd.f32 %v3637, %v3939
    %v4142 = vadd.f32 %v3638, %v3941
    %v4143 = vadd.f32 %v3639, %v3943
    %v4144 = vadd.f32 %v3640, %v3945
    %v4145 = vadd.f32 %v3641, %v3947
    %v4146 = vadd.f32 %v3543, %v3543
    %v4147 = vadd.f32 %v3544, %v3544
    %v4148 = vadd.f32 %v3545, %v3545
    %v4149 = vadd.f32 %v3546, %v3546
    %v4150 = vadd.f32 %v3547, %v3547
    %v4151 = vadd.f32 %v3548, %v3548
    %v4152 = vadd.f32 %v3549, %v3549
    %v4153 = vadd.f32 %v3550, %v3550
    %v4154 = vadd.f32 %v3551, %v3551
    %v4155 = vadd.f32 %v3552, %v3552
    %v4156 = vadd.f32 %v3553, %v3553
    %v4157 = vadd.f32 %v3554, %v3554
    %v4158 = vadd.f32 %v3555, %v3555
    %v4159 = vadd.f32 %v3556, %v3556
    %v4160 = vadd.f32 %v3557, %v3557
    %v4161 = vadd.f32 %v3558, %v3558
    %v4162 = vadd.f32 %v3559, %v3559
    %v4163 = vadd.f32 %v3560, %v3560
    %v4164 = vadd.f32 %v3561, %v3561
    %v4165 = vadd.f32 %v3562, %v3562
    %v4166 = vadd.f32 %v3563, %v3563
    %v4167 = vadd.f32 %v3564, %v3564
    %v4168 = vadd.f32 %v3565, %v3565
    %v4169 = vadd.f32 %v3566, %v3566
    %v4170 = vadd.f32 %v3567, %v3567
    %v4171 = vadd.f32 %v3568, %v3568
    %v4172 = vadd.f32 %v3569, %v3569
    %v4173 = vadd.f32 %v3570, %v3570
    %v4174 = vadd.f32 %v3571, %v3571
    %v4175 = vadd.f32 %v3572, %v3572
    %v4176 = vadd.f32 %v3573, %v3573
    %v4177 = vadd.f32 %v3574, %v3574
    %v4178 = vadd.f32 %v3575, %v3575
    %v4179 = vadd.f32 %v3576, %v3576
    %v4180 = vadd.f32 %v3577, %v3577
    %v4181 = vadd.f32 %v3578, %v3578
    %v4182 = vadd.f32 %v3579, %v3579
    %v4183 = vadd.f32 %v3580, %v3580
    %v4184 = vadd.f32 %v3581, %v3581
    %v4185 = vadd.f32 %v3582, %v3582
    %v4186 = vadd.f32 %v3583, %v3583
    %v4187 = vadd.f32 %v3584, %v3584
    %v4188 = vadd.f32 %v3585, %v3585
    %v4189 = vadd.f32 %v3586, %v3586
    %v4190 = vadd.f32 %v3587, %v3587
    %v4191 = vadd.f32 %v3588, %v3588
    %v4192 = vadd.f32 %v3589, %v3589
    %v4193 = vadd.f32 %v3590, %v3590
    %v4194 = vadd.f32 %v3591, %v3591
    %v4195 = vadd.f32 %v3592, %v3592
    %v4196 = vadd.f32 %v3593, %v3593
    %v4197 = vadd.f32 %v3594, %v3594
    %v4198 = vadd.f32 %v3595, %v3595
    %v4199 = vadd.f32 %v3596, %v3596
    %v4200 = vadd.f32 %v3597, %v3597
    %v4201 = vadd.f32 %v3598, %v3598
    %v4202 = vadd.f32 %v3599, %v3599
    %v4203 = vadd.f32 %v3600, %v3600
    %v4204 = vadd.f32 %v3601, %v3601
    %v4205 = vadd.f32 %v3602, %v3602
    %v4206 = vadd.f32 %v3603, %v3603
    %v4207 = vadd.f32 %v3604, %v3604
    %v4208 = vadd.f32 %v3605, %v3605
    %v4209 = vadd.f32 %v3606, %v3606
    %v4210 = vadd.f32 %v3607, %v3607
    %v4211 = vadd.f32 %v3608, %v3608
    %v4212 = vadd.f32 %v3609, %v3609
    %v4213 = vadd.f32 %v3610, %v3610
    %v4214 = vadd.f32 %v3611, %v3611
    %v4215 = vadd.f32 %v3612, %v3612
    %v4216 = vadd.f32 %v3613, %v3613
    %v4217 = vadd.f32 %v3614, %v3614
    %v4218 = vadd.f32 %v3615, %v3615
    %v4219 = vadd.f32 %v3616, %v3616
    %v4220 = vadd.f32 %v3617, %v3617
    %v4221 = vadd.f32 %v3618, %v3618
    %v4222 = vadd.f32 %v3619, %v3619
    %v4223 = vadd.f32 %v3620, %v3620
    %v4224 = vadd.f32 %v3621, %v3621
    %v4225 = vadd.f32 %v3622, %v3622
    %v4226 = vadd.f32 %v3623, %v3623
    %v4227 = vadd.f32 %v3624, %v3624
    %v4228 = vadd.f32 %v3625, %v3625
    %v4229 = vadd.f32 %v3626, %v3626
    %v4230 = vadd.f32 %v3627, %v3627
    %v4231 = vadd.f32 %v3628, %v3628
    %v4232 = vadd.f32 %v3629, %v3629
    %v4233 = vadd.f32 %v3630, %v3630
    %v4234 = vadd.f32 %v3631, %v3631
    %v4235 = vadd.f32 %v3632, %v3632
    %v4236 = vadd.f32 %v3633, %v3633
    %v4237 = vadd.f32 %v3634, %v3634
    %v4238 = vadd.f32 %v3635, %v3635
    %v4239 = vadd.f32 %v3636, %v3636
    %v4240 = vadd.f32 %v3637, %v3637
    %v4241 = vadd.f32 %v3638, %v3638
    %v4242 = vadd.f32 %v3639, %v3639
    %v4243 = vadd.f32 %v3640, %v3640
    %v4244 = vadd.f32 %v3641, %v3641
    %v4245 = vadd.f32 %v3642, %v3642
    %v4246 = vadd.f32 %v3643, %v3643
    %v4247 = vadd.f32 %v3644, %v3644
    %vm4350 = vcmask 1046528
    %v4351 = vrot.slane %v4146, 1
    %v4352 = vrot.slane %v4149, 1
    %v4353 = vsel %vm4350, %v4351, %v4352
    %v4354 = vrot.slane %v4147, 1
    %v4355 = vrot.slane %v4150, 1
    %v4356 = vsel %vm4350, %v4354, %v4355
    %v4357 = vrot.slane %v4148, 1
    %v4358 = vrot.slane %v4151, 1
    %v4359 = vsel %vm4350, %v4357, %v4358
    %v4360 = vrot.slane %v4152, 1
    %v4361 = vsel %vm4350, %v4352, %v4360
    %v4362 = vrot.slane %v4153, 1
    %v4363 = vsel %vm4350, %v4355, %v4362
    %v4364 = vrot.slane %v4154, 1
    %v4365 = vsel %vm4350, %v4358, %v4364
    %v4366 = vrot.slane %v4155, 1
    %v4367 = vsel %vm4350, %v4360, %v4366
    %v4368 = vrot.slane %v4156, 1
    %v4369 = vsel %vm4350, %v4362, %v4368
    %v4370 = vrot.slane %v4157, 1
    %v4371 = vsel %vm4350, %v4364, %v4370
    %v4372 = vrot.slane %v4158, 1
    %v4373 = vsel %vm4350, %v4366, %v4372
    %v4374 = vrot.slane %v4159, 1
    %v4375 = vsel %vm4350, %v4368, %v4374
    %v4376 = vrot.slane %v4160, 1
    %v4377 = vsel %vm4350, %v4370, %v4376
    %v4378 = vrot.slane %v4161, 1
    %v4379 = vsel %vm4350, %v4372, %v4378
    %v4380 = vrot.slane %v4162, 1
    %v4381 = vsel %vm4350, %v4374, %v4380
    %v4382 = vrot.slane %v4163, 1
    %v4383 = vsel %vm4350, %v4376, %v4382
    %v4384 = vrot.slane %v4164, 1
    %v4385 = vsel %vm4350, %v4378, %v4384
    %v4386 = vrot.slane %v4165, 1
    %v4387 = vsel %vm4350, %v4380, %v4386
    %v4388 = vrot.slane %v4166, 1
    %v4389 = vsel %vm4350, %v4382, %v4388
    %v4390 = vrot.slane %v4167, 1
    %v4391 = vsel %vm4350, %v4384, %v4390
    %v4392 = vrot.slane %v4168, 1
    %v4393 = vsel %vm4350, %v4386, %v4392
    %v4394 = vrot.slane %v4169, 1
    %v4395 = vsel %vm4350, %v4388, %v4394
    %v4396 = vrot.slane %v4170, 1
    %v4397 = vsel %vm4350, %v4390, %v4396
    %v4398 = vrot.slane %v4171, 1
    %v4399 = vsel %vm4350, %v4392, %v4398
    %v4400 = vrot.slane %v4172, 1
    %v4401 = vsel %vm4350, %v4394, %v4400
    %v4402 = vrot.slane %v4173, 1
    %v4403 = vsel %vm4350, %v4396, %v4402
    %v4404 = vrot.slane %v4174, 1
    %v4405 = vsel %vm4350, %v4398, %v4404
    %v4406 = vrot.slane %v4175, 1
    %v4407 = vsel %vm4350, %v4400, %v4406
    %v4408 = vrot.slane %v4176, 1
    %v4409 = vsel %vm4350, %v4402, %v4408
    %v4410 = vrot.slane %v4177, 1
    %v4411 = vsel %vm4350, %v4404, %v4410
    %v4412 = vrot.slane %v4178, 1
    %v4413 = vsel %vm4350, %v4406, %v4412
    %v4414 = vrot.slane %v4179, 1
    %v4415 = vsel %vm4350, %v4408, %v4414
    %v4416 = vrot.slane %v4180, 1
    %v4417 = vsel %vm4350, %v4410, %v4416
    %v4418 = vrot.slane %v4181, 1
    %v4419 = vsel %vm4350, %v4412, %v4418
    %v4420 = vrot.slane %v4182, 1
    %v4421 = vsel %vm4350, %v4414, %v4420
    %v4422 = vrot.slane %v4183, 1
    %v4423 = vsel %vm4350, %v4416, %v4422
    %v4424 = vrot.slane %v4184, 1
    %v4425 = vsel %vm4350, %v4418, %v4424
    %v4426 = vrot.slane %v4185, 1
    %v4427 = vsel %vm4350, %v4420, %v4426
    %v4428 = vrot.slane %v4186, 1
    %v4429 = vsel %vm4350, %v4422, %v4428
    %v4430 = vrot.slane %v4187, 1
    %v4431 = vsel %vm4350, %v4424, %v4430
    %v4432 = vrot.slane %v4188, 1
    %v4433 = vsel %vm4350, %v4426, %v4432
    %v4434 = vrot.slane %v4189, 1
    %v4435 = vsel %vm4350, %v4428, %v4434
    %v4436 = vrot.slane %v4190, 1
    %v4437 = vsel %vm4350, %v4430, %v4436
    %v4438 = vrot.slane %v4191, 1
    %v4439 = vsel %vm4350, %v4432, %v4438
    %v4440 = vrot.slane %v4192, 1
    %v4441 = vsel %vm4350, %v4434, %v4440
    %v4442 = vrot.slane %v4193, 1
    %v4443 = vsel %vm4350, %v4436, %v4442
    %v4444 = vrot.slane %v4194, 1
    %v4445 = vsel %vm4350, %v4438, %v4444
    %v4446 = vrot.slane %v4195, 1
    %v4447 = vsel %vm4350, %v4440, %v4446
    %v4448 = vrot.slane %v4196, 1
    %v4449 = vsel %vm4350, %v4442, %v4448
    %v4450 = vrot.slane %v4197, 1
    %v4451 = vsel %vm4350, %v4444, %v4450
    %v4452 = vrot.slane %v4198, 1
    %v4453 = vsel %vm4350, %v4446, %v4452
    %v4454 = vrot.slane %v4199, 1
    %v4455 = vsel %vm4350, %v4448, %v4454
    %v4456 = vrot.slane %v4200, 1
    %v4457 = vsel %vm4350, %v4450, %v4456
    %v4458 = vrot.slane %v4201, 1
    %v4459 = vsel %vm4350, %v4452, %v4458
    %v4460 = vrot.slane %v4202, 1
    %v4461 = vsel %vm4350, %v4454, %v4460
    %v4462 = vrot.slane %v4203, 1
    %v4463 = vsel %vm4350, %v4456, %v4462
    %v4464 = vrot.slane %v4204, 1
    %v4465 = vsel %vm4350, %v4458, %v4464
    %v4466 = vrot.slane %v4205, 1
    %v4467 = vsel %vm4350, %v4460, %v4466
    %v4468 = vrot.slane %v4206, 1
    %v4469 = vsel %vm4350, %v4462, %v4468
    %v4470 = vrot.slane %v4207, 1
    %v4471 = vsel %vm4350, %v4464, %v4470
    %v4472 = vrot.slane %v4208, 1
    %v4473 = vsel %vm4350, %v4466, %v4472
    %v4474 = vrot.slane %v4209, 1
    %v4475 = vsel %vm4350, %v4468, %v4474
    %v4476 = vrot.slane %v4210, 1
    %v4477 = vsel %vm4350, %v4470, %v4476
    %v4478 = vrot.slane %v4211, 1
    %v4479 = vsel %vm4350, %v4472, %v4478
    %v4480 = vrot.slane %v4212, 1
    %v4481 = vsel %vm4350, %v4474, %v4480
    %v4482 = vrot.slane %v4213, 1
    %v4483 = vsel %vm4350, %v4476, %v4482
    %v4484 = vrot.slane %v4214, 1
    %v4485 = vsel %vm4350, %v4478, %v4484
    %v4486 = vrot.slane %v4215, 1
    %v4487 = vsel %vm4350, %v4480, %v4486
    %v4488 = vrot.slane %v4216, 1
    %v4489 = vsel %vm4350, %v4482, %v4488
    %v4490 = vrot.slane %v4217, 1
    %v4491 = vsel %vm4350, %v4484, %v4490
    %v4492 = vrot.slane %v4218, 1
    %v4493 = vsel %vm4350, %v4486, %v4492
    %v4494 = vrot.slane %v4219, 1
    %v4495 = vsel %vm4350, %v4488, %v4494
    %v4496 = vrot.slane %v4220, 1
    %v4497 = vsel %vm4350, %v4490, %v4496
    %v4498 = vrot.slane %v4221, 1
    %v4499 = vsel %vm4350, %v4492, %v4498
    %v4500 = vrot.slane %v4222, 1
    %v4501 = vsel %vm4350, %v4494, %v4500
    %v4502 = vrot.slane %v4223, 1
    %v4503 = vsel %vm4350, %v4496, %v4502
    %v4504 = vrot.slane %v4224, 1
    %v4505 = vsel %vm4350, %v4498, %v4504
    %v4506 = vrot.slane %v4225, 1
    %v4507 = vsel %vm4350, %v4500, %v4506
    %v4508 = vrot.slane %v4226, 1
    %v4509 = vsel %vm4350, %v4502, %v4508
    %v4510 = vrot.slane %v4227, 1
    %v4511 = vsel %vm4350, %v4504, %v4510
    %v4512 = vrot.slane %v4228, 1
    %v4513 = vsel %vm4350, %v4506, %v4512
    %v4514 = vrot.slane %v4229, 1
    %v4515 = vsel %vm4350, %v4508, %v4514
    %v4516 = vrot.slane %v4230, 1
    %v4517 = vsel %vm4350, %v4510, %v4516
    %v4518 = vrot.slane %v4231, 1
    %v4519 = vsel %vm4350, %v4512, %v4518
    %v4520 = vrot.slane %v4232, 1
    %v4521 = vsel %vm4350, %v4514, %v4520
    %v4522 = vrot.slane %v4233, 1
    %v4523 = vsel %vm4350, %v4516, %v4522
    %v4524 = vrot.slane %v4234, 1
    %v4525 = vsel %vm4350, %v4518, %v4524
    %v4526 = vrot.slane %v4235, 1
    %v4527 = vsel %vm4350, %v4520, %v4526
    %v4528 = vrot.slane %v4236, 1
    %v4529 = vsel %vm4350, %v4522, %v4528
    %v4530 = vrot.slane %v4237, 1
    %v4531 = vsel %vm4350, %v4524, %v4530
    %v4532 = vrot.slane %v4238, 1
    %v4533 = vsel %vm4350, %v4526, %v4532
    %v4534 = vrot.slane %v4239, 1
    %v4535 = vsel %vm4350, %v4528, %v4534
    %v4536 = vrot.slane %v4240, 1
    %v4537 = vsel %vm4350, %v4530, %v4536
    %v4538 = vrot.slane %v4241, 1
    %v4539 = vsel %vm4350, %v4532, %v4538
    %v4540 = vrot.slane %v4242, 1
    %v4541 = vsel %vm4350, %v4534, %v4540
    %v4542 = vrot.slane %v4243, 1
    %v4543 = vsel %vm4350, %v4536, %v4542
    %v4544 = vrot.slane %v4244, 1
    %v4545 = vsel %vm4350, %v4538, %v4544
    %v4546 = vrot.slane %v4245, 1
    %v4547 = vsel %vm4350, %v4540, %v4546
    %v4548 = vrot.slane %v4246, 1
    %v4549 = vsel %vm4350, %v4542, %v4548
    %v4550 = vrot.slane %v4247, 1
    %v4551 = vsel %vm4350, %v4544, %v4550
    %v4651 = vadd.f32 %v4047, %v4353
    %v4652 = vadd.f32 %v4048, %v4356
    %v4653 = vadd.f32 %v4049, %v4359
    %v4654 = vadd.f32 %v4050, %v4361
    %v4655 = vadd.f32 %v4051, %v4363
    %v4656 = vadd.f32 %v4052, %v4365
    %v4657 = vadd.f32 %v4053, %v4367
    %v4658 = vadd.f32 %v4054, %v4369
    %v4659 = vadd.f32 %v4055, %v4371
    %v4660 = vadd.f32 %v4056, %v4373
    %v4661 = vadd.f32 %v4057, %v4375
    %v4662 = vadd.f32 %v4058, %v4377
    %v4663 = vadd.f32 %v4059, %v4379
    %v4664 = vadd.f32 %v4060, %v4381
    %v4665 = vadd.f32 %v4061, %v4383
    %v4666 = vadd.f32 %v4062, %v4385
    %v4667 = vadd.f32 %v4063, %v4387
    %v4668 = vadd.f32 %v4064, %v4389
    %v4669 = vadd.f32 %v4065, %v4391
    %v4670 = vadd.f32 %v4066, %v4393
    %v4671 = vadd.f32 %v4067, %v4395
    %v4672 = vadd.f32 %v4068, %v4397
    %v4673 = vadd.f32 %v4069, %v4399
    %v4674 = vadd.f32 %v4070, %v4401
    %v4675 = vadd.f32 %v4071, %v4403
    %v4676 = vadd.f32 %v4072, %v4405
    %v4677 = vadd.f32 %v4073, %v4407
    %v4678 = vadd.f32 %v4074, %v4409
    %v4679 = vadd.f32 %v4075, %v4411
    %v4680 = vadd.f32 %v4076, %v4413
    %v4681 = vadd.f32 %v4077, %v4415
    %v4682 = vadd.f32 %v4078, %v4417
    %v4683 = vadd.f32 %v4079, %v4419
    %v4684 = vadd.f32 %v4080, %v4421
    %v4685 = vadd.f32 %v4081, %v4423
    %v4686 = vadd.f32 %v4082, %v4425
    %v4687 = vadd.f32 %v4083, %v4427
    %v4688 = vadd.f32 %v4084, %v4429
    %v4689 = vadd.f32 %v4085, %v4431
    %v4690 = vadd.f32 %v4086, %v4433
    %v4691 = vadd.f32 %v4087, %v4435
    %v4692 = vadd.f32 %v4088, %v4437
    %v4693 = vadd.f32 %v4089, %v4439
    %v4694 = vadd.f32 %v4090, %v4441
    %v4695 = vadd.f32 %v4091, %v4443
    %v4696 = vadd.f32 %v4092, %v4445
    %v4697 = vadd.f32 %v4093, %v4447
    %v4698 = vadd.f32 %v4094, %v4449
    %v4699 = vadd.f32 %v4095, %v4451
    %v4700 = vadd.f32 %v4096, %v4453
    %v4701 = vadd.f32 %v4097, %v4455
    %v4702 = vadd.f32 %v4098, %v4457
    %v4703 = vadd.f32 %v4099, %v4459
    %v4704 = vadd.f32 %v4100, %v4461
    %v4705 = vadd.f32 %v4101, %v4463
    %v4706 = vadd.f32 %v4102, %v4465
    %v4707 = vadd.f32 %v4103, %v4467
    %v4708 = vadd.f32 %v4104, %v4469
    %v4709 = vadd.f32 %v4105, %v4471
    %v4710 = vadd.f32 %v4106, %v4473
    %v4711 = vadd.f32 %v4107, %v4475
    %v4712 = vadd.f32 %v4108, %v4477
    %v4713 = vadd.f32 %v4109, %v4479
    %v4714 = vadd.f32 %v4110, %v4481
    %v4715 = vadd.f32 %v4111, %v4483
    %v4716 = vadd.f32 %v4112, %v4485
    %v4717 = vadd.f32 %v4113, %v4487
    %v4718 = vadd.f32 %v4114, %v4489
    %v4719 = vadd.f32 %v4115, %v4491
    %v4720 = vadd.f32 %v4116, %v4493
    %v4721 = vadd.f32 %v4117, %v4495
    %v4722 = vadd.f32 %v4118, %v4497
    %v4723 = vadd.f32 %v4119, %v4499
    %v4724 = vadd.f32 %v4120, %v4501
    %v4725 = vadd.f32 %v4121, %v4503
    %v4726 = vadd.f32 %v4122, %v4505
    %v4727 = vadd.f32 %v4123, %v4507
    %v4728 = vadd.f32 %v4124, %v4509
    %v4729 = vadd.f32 %v4125, %v4511
    %v4730 = vadd.f32 %v4126, %v4513
    %v4731 = vadd.f32 %v4127, %v4515
    %v4732 = vadd.f32 %v4128, %v4517
    %v4733 = vadd.f32 %v4129, %v4519
    %v4734 = vadd.f32 %v4130, %v4521
    %v4735 = vadd.f32 %v4131, %v4523
    %v4736 = vadd.f32 %v4132, %v4525
    %v4737 = vadd.f32 %v4133, %v4527
    %v4738 = vadd.f32 %v4134, %v4529
    %v4739 = vadd.f32 %v4135, %v4531
    %v4740 = vadd.f32 %v4136, %v4533
    %v4741 = vadd.f32 %v4137, %v4535
    %v4742 = vadd.f32 %v4138, %v4537
    %v4743 = vadd.f32 %v4139, %v4539
    %v4744 = vadd.f32 %v4140, %v4541
    %v4745 = vadd.f32 %v4141, %v4543
    %v4746 = vadd.f32 %v4142, %v4545
    %v4747 = vadd.f32 %v4143, %v4547
    %v4748 = vadd.f32 %v4144, %v4549
    %v4749 = vadd.f32 %v4145, %v4551
    %4750 = vrot.lane.b32.xlu0 %v2964, 126
    %v4751 = vpop.permute.xlu0 %4750
    %4752 = vrot.lane.b32.xlu0 %v2965, 126
    %v4753 = vpop.permute.xlu0 %4752
    %4754 = vrot.lane.b32.xlu0 %v2966, 126
    %v4755 = vpop.permute.xlu0 %4754
    %4756 = vrot.lane.b32.xlu0 %v2967, 126
    %v4757 = vpop.permute.xlu0 %4756
    %4758 = vrot.lane.b32.xlu0 %v2968, 126
    %v4759 = vpop.permute.xlu0 %4758
    %4760 = vrot.lane.b32.xlu0 %v2969, 126
    %v4761 = vpop.permute.xlu0 %4760
    %4762 = vrot.lane.b32.xlu0 %v2970, 126
    %v4763 = vpop.permute.xlu0 %4762
    %4764 = vrot.lane.b32.xlu0 %v2971, 126
    %v4765 = vpop.permute.xlu0 %4764
    %4766 = vrot.lane.b32.xlu0 %v2972, 126
    %v4767 = vpop.permute.xlu0 %4766
    %4768 = vrot.lane.b32.xlu0 %v2973, 126
    %v4769 = vpop.permute.xlu0 %4768
    %4770 = vrot.lane.b32.xlu0 %v2974, 126
    %v4771 = vpop.permute.xlu0 %4770
    %4772 = vrot.lane.b32.xlu0 %v2975, 126
    %v4773 = vpop.permute.xlu0 %4772
    %4774 = vrot.lane.b32.xlu0 %v2976, 126
    %v4775 = vpop.permute.xlu0 %4774
    %4776 = vrot.lane.b32.xlu0 %v2977, 126
    %v4777 = vpop.permute.xlu0 %4776
    %4778 = vrot.lane.b32.xlu0 %v2978, 126
    %v4779 = vpop.permute.xlu0 %4778
    %4780 = vrot.lane.b32.xlu0 %v2979, 126
    %v4781 = vpop.permute.xlu0 %4780
    %4782 = vrot.lane.b32.xlu0 %v2980, 126
    %v4783 = vpop.permute.xlu0 %4782
    %4784 = vrot.lane.b32.xlu0 %v2981, 126
    %v4785 = vpop.permute.xlu0 %4784
    %4786 = vrot.lane.b32.xlu0 %v2982, 126
    %v4787 = vpop.permute.xlu0 %4786
    %4788 = vrot.lane.b32.xlu0 %v2983, 126
    %v4789 = vpop.permute.xlu0 %4788
    %4790 = vrot.lane.b32.xlu0 %v2984, 126
    %v4791 = vpop.permute.xlu0 %4790
    %4792 = vrot.lane.b32.xlu0 %v2985, 126
    %v4793 = vpop.permute.xlu0 %4792
    %4794 = vrot.lane.b32.xlu0 %v2986, 126
    %v4795 = vpop.permute.xlu0 %4794
    %4796 = vrot.lane.b32.xlu0 %v2987, 126
    %v4797 = vpop.permute.xlu0 %4796
    %4798 = vrot.lane.b32.xlu0 %v2988, 126
    %v4799 = vpop.permute.xlu0 %4798
    %4800 = vrot.lane.b32.xlu0 %v2989, 126
    %v4801 = vpop.permute.xlu0 %4800
    %4802 = vrot.lane.b32.xlu0 %v2990, 126
    %v4803 = vpop.permute.xlu0 %4802
    %4804 = vrot.lane.b32.xlu0 %v2991, 126
    %v4805 = vpop.permute.xlu0 %4804
    %4806 = vrot.lane.b32.xlu0 %v2992, 126
    %v4807 = vpop.permute.xlu0 %4806
    %4808 = vrot.lane.b32.xlu0 %v2993, 126
    %v4809 = vpop.permute.xlu0 %4808
    %4810 = vrot.lane.b32.xlu0 %v2994, 126
    %v4811 = vpop.permute.xlu0 %4810
    %4812 = vrot.lane.b32.xlu0 %v2995, 126
    %v4813 = vpop.permute.xlu0 %4812
    %4814 = vrot.lane.b32.xlu0 %v2996, 126
    %v4815 = vpop.permute.xlu0 %4814
    %4816 = vrot.lane.b32.xlu0 %v2997, 126
    %v4817 = vpop.permute.xlu0 %4816
    %4818 = vrot.lane.b32.xlu0 %v2998, 126
    %v4819 = vpop.permute.xlu0 %4818
    %4820 = vrot.lane.b32.xlu0 %v2999, 126
    %v4821 = vpop.permute.xlu0 %4820
    %4822 = vrot.lane.b32.xlu0 %v3000, 126
    %v4823 = vpop.permute.xlu0 %4822
    %4824 = vrot.lane.b32.xlu0 %v3001, 126
    %v4825 = vpop.permute.xlu0 %4824
    %4826 = vrot.lane.b32.xlu0 %v3002, 126
    %v4827 = vpop.permute.xlu0 %4826
    %4828 = vrot.lane.b32.xlu0 %v3003, 126
    %v4829 = vpop.permute.xlu0 %4828
    %4830 = vrot.lane.b32.xlu0 %v3004, 126
    %v4831 = vpop.permute.xlu0 %4830
    %4832 = vrot.lane.b32.xlu0 %v3005, 126
    %v4833 = vpop.permute.xlu0 %4832
    %4834 = vrot.lane.b32.xlu0 %v3006, 126
    %v4835 = vpop.permute.xlu0 %4834
    %4836 = vrot.lane.b32.xlu0 %v3007, 126
    %v4837 = vpop.permute.xlu0 %4836
    %4838 = vrot.lane.b32.xlu0 %v3008, 126
    %v4839 = vpop.permute.xlu0 %4838
    %4840 = vrot.lane.b32.xlu0 %v3009, 126
    %v4841 = vpop.permute.xlu0 %4840
    %4842 = vrot.lane.b32.xlu0 %v3010, 126
    %v4843 = vpop.permute.xlu0 %4842
    %4844 = vrot.lane.b32.xlu0 %v3011, 126
    %v4845 = vpop.permute.xlu0 %4844
    %4846 = vrot.lane.b32.xlu0 %v3012, 126
    %v4847 = vpop.permute.xlu0 %4846
    %4848 = vrot.lane.b32.xlu0 %v3013, 126
    %v4849 = vpop.permute.xlu0 %4848
    %4850 = vrot.lane.b32.xlu0 %v3014, 126
    %v4851 = vpop.permute.xlu0 %4850
    %4852 = vrot.lane.b32.xlu0 %v3015, 126
    %v4853 = vpop.permute.xlu0 %4852
    %4854 = vrot.lane.b32.xlu0 %v3016, 126
    %v4855 = vpop.permute.xlu0 %4854
    %4856 = vrot.lane.b32.xlu0 %v3017, 126
    %v4857 = vpop.permute.xlu0 %4856
    %4858 = vrot.lane.b32.xlu0 %v3018, 126
    %v4859 = vpop.permute.xlu0 %4858
    %4860 = vrot.lane.b32.xlu0 %v3019, 126
    %v4861 = vpop.permute.xlu0 %4860
    %4862 = vrot.lane.b32.xlu0 %v3020, 126
    %v4863 = vpop.permute.xlu0 %4862
    %4864 = vrot.lane.b32.xlu0 %v3021, 126
    %v4865 = vpop.permute.xlu0 %4864
    %4866 = vrot.lane.b32.xlu0 %v3022, 126
    %v4867 = vpop.permute.xlu0 %4866
    %4868 = vrot.lane.b32.xlu0 %v3023, 126
    %v4869 = vpop.permute.xlu0 %4868
    %4870 = vrot.lane.b32.xlu0 %v3024, 126
    %v4871 = vpop.permute.xlu0 %4870
    %4872 = vrot.lane.b32.xlu0 %v3025, 126
    %v4873 = vpop.permute.xlu0 %4872
    %4874 = vrot.lane.b32.xlu0 %v3026, 126
    %v4875 = vpop.permute.xlu0 %4874
    %4876 = vrot.lane.b32.xlu0 %v3027, 126
    %v4877 = vpop.permute.xlu0 %4876
    %4878 = vrot.lane.b32.xlu0 %v3028, 126
    %v4879 = vpop.permute.xlu0 %4878
    %4880 = vrot.lane.b32.xlu0 %v3029, 126
    %v4881 = vpop.permute.xlu0 %4880
    %4882 = vrot.lane.b32.xlu0 %v3030, 126
    %v4883 = vpop.permute.xlu0 %4882
    %4884 = vrot.lane.b32.xlu0 %v3031, 126
    %v4885 = vpop.permute.xlu0 %4884
    %4886 = vrot.lane.b32.xlu0 %v3032, 126
    %v4887 = vpop.permute.xlu0 %4886
    %4888 = vrot.lane.b32.xlu0 %v3033, 126
    %v4889 = vpop.permute.xlu0 %4888
    %4890 = vrot.lane.b32.xlu0 %v3034, 126
    %v4891 = vpop.permute.xlu0 %4890
    %4892 = vrot.lane.b32.xlu0 %v3035, 126
    %v4893 = vpop.permute.xlu0 %4892
    %4894 = vrot.lane.b32.xlu0 %v3036, 126
    %v4895 = vpop.permute.xlu0 %4894
    %4896 = vrot.lane.b32.xlu0 %v3037, 126
    %v4897 = vpop.permute.xlu0 %4896
    %4898 = vrot.lane.b32.xlu0 %v3038, 126
    %v4899 = vpop.permute.xlu0 %4898
    %4900 = vrot.lane.b32.xlu0 %v3039, 126
    %v4901 = vpop.permute.xlu0 %4900
    %4902 = vrot.lane.b32.xlu0 %v3040, 126
    %v4903 = vpop.permute.xlu0 %4902
    %4904 = vrot.lane.b32.xlu0 %v3041, 126
    %v4905 = vpop.permute.xlu0 %4904
    %4906 = vrot.lane.b32.xlu0 %v3042, 126
    %v4907 = vpop.permute.xlu0 %4906
    %4908 = vrot.lane.b32.xlu0 %v3043, 126
    %v4909 = vpop.permute.xlu0 %4908
    %4910 = vrot.lane.b32.xlu0 %v3044, 126
    %v4911 = vpop.permute.xlu0 %4910
    %4912 = vrot.lane.b32.xlu0 %v3045, 126
    %v4913 = vpop.permute.xlu0 %4912
    %4914 = vrot.lane.b32.xlu0 %v3046, 126
    %v4915 = vpop.permute.xlu0 %4914
    %4916 = vrot.lane.b32.xlu0 %v3047, 126
    %v4917 = vpop.permute.xlu0 %4916
    %4918 = vrot.lane.b32.xlu0 %v3048, 126
    %v4919 = vpop.permute.xlu0 %4918
    %4920 = vrot.lane.b32.xlu0 %v3049, 126
    %v4921 = vpop.permute.xlu0 %4920
    %4922 = vrot.lane.b32.xlu0 %v3050, 126
    %v4923 = vpop.permute.xlu0 %4922
    %4924 = vrot.lane.b32.xlu0 %v3051, 126
    %v4925 = vpop.permute.xlu0 %4924
    %4926 = vrot.lane.b32.xlu0 %v3052, 126
    %v4927 = vpop.permute.xlu0 %4926
    %4928 = vrot.lane.b32.xlu0 %v3053, 126
    %v4929 = vpop.permute.xlu0 %4928
    %4930 = vrot.lane.b32.xlu0 %v3054, 126
    %v4931 = vpop.permute.xlu0 %4930
    %4932 = vrot.lane.b32.xlu0 %v3055, 126
    %v4933 = vpop.permute.xlu0 %4932
    %4934 = vrot.lane.b32.xlu0 %v3056, 126
    %v4935 = vpop.permute.xlu0 %4934
    %4936 = vrot.lane.b32.xlu0 %v3057, 126
    %v4937 = vpop.permute.xlu0 %4936
    %4938 = vrot.lane.b32.xlu0 %v3058, 126
    %v4939 = vpop.permute.xlu0 %4938
    %4940 = vrot.lane.b32.xlu0 %v3059, 126
    %v4941 = vpop.permute.xlu0 %4940
    %4942 = vrot.lane.b32.xlu0 %v3060, 126
    %v4943 = vpop.permute.xlu0 %4942
    %4944 = vrot.lane.b32.xlu0 %v3061, 126
    %v4945 = vpop.permute.xlu0 %4944
    %4946 = vrot.lane.b32.xlu0 %v3062, 126
    %v4947 = vpop.permute.xlu0 %4946
    %4948 = vrot.lane.b32.xlu0 %v3063, 126
    %v4949 = vpop.permute.xlu0 %4948
    %4950 = vrot.lane.b32.xlu0 %v3064, 126
    %v4951 = vpop.permute.xlu0 %4950
    %4952 = vrot.lane.b32.xlu0 %v3065, 126
    %v4953 = vpop.permute.xlu0 %4952
    %v4954 = vsel %vm892, %v4751, %v4753
    %v4955 = vsel %vm892, %v4753, %v4755
    %v4956 = vsel %vm892, %v4757, %v4759
    %v4957 = vsel %vm892, %v4759, %v4761
    %v4958 = vsel %vm892, %v4763, %v4765
    %v4959 = vsel %vm892, %v4765, %v4767
    %v4960 = vsel %vm892, %v4769, %v4771
    %v4961 = vsel %vm892, %v4771, %v4773
    %v4962 = vsel %vm892, %v4775, %v4777
    %v4963 = vsel %vm892, %v4777, %v4779
    %v4964 = vsel %vm892, %v4781, %v4783
    %v4965 = vsel %vm892, %v4783, %v4785
    %v4966 = vsel %vm892, %v4787, %v4789
    %v4967 = vsel %vm892, %v4789, %v4791
    %v4968 = vsel %vm892, %v4793, %v4795
    %v4969 = vsel %vm892, %v4795, %v4797
    %v4970 = vsel %vm892, %v4799, %v4801
    %v4971 = vsel %vm892, %v4801, %v4803
    %v4972 = vsel %vm892, %v4805, %v4807
    %v4973 = vsel %vm892, %v4807, %v4809
    %v4974 = vsel %vm892, %v4811, %v4813
    %v4975 = vsel %vm892, %v4813, %v4815
    %v4976 = vsel %vm892, %v4817, %v4819
    %v4977 = vsel %vm892, %v4819, %v4821
    %v4978 = vsel %vm892, %v4823, %v4825
    %v4979 = vsel %vm892, %v4825, %v4827
    %v4980 = vsel %vm892, %v4829, %v4831
    %v4981 = vsel %vm892, %v4831, %v4833
    %v4982 = vsel %vm892, %v4835, %v4837
    %v4983 = vsel %vm892, %v4837, %v4839
    %v4984 = vsel %vm892, %v4841, %v4843
    %v4985 = vsel %vm892, %v4843, %v4845
    %v4986 = vsel %vm892, %v4847, %v4849
    %v4987 = vsel %vm892, %v4849, %v4851
    %v4988 = vsel %vm892, %v4853, %v4855
    %v4989 = vsel %vm892, %v4855, %v4857
    %v4990 = vsel %vm892, %v4859, %v4861
    %v4991 = vsel %vm892, %v4861, %v4863
    %v4992 = vsel %vm892, %v4865, %v4867
    %v4993 = vsel %vm892, %v4867, %v4869
    %v4994 = vsel %vm892, %v4871, %v4873
    %v4995 = vsel %vm892, %v4873, %v4875
    %v4996 = vsel %vm892, %v4877, %v4879
    %v4997 = vsel %vm892, %v4879, %v4881
    %v4998 = vsel %vm892, %v4883, %v4885
    %v4999 = vsel %vm892, %v4885, %v4887
    %v5000 = vsel %vm892, %v4889, %v4891
    %v5001 = vsel %vm892, %v4891, %v4893
    %v5002 = vsel %vm892, %v4895, %v4897
    %v5003 = vsel %vm892, %v4897, %v4899
    %v5004 = vsel %vm892, %v4901, %v4903
    %v5005 = vsel %vm892, %v4903, %v4905
    %v5006 = vsel %vm892, %v4907, %v4909
    %v5007 = vsel %vm892, %v4909, %v4911
    %v5008 = vsel %vm892, %v4913, %v4915
    %v5009 = vsel %vm892, %v4915, %v4917
    %v5010 = vsel %vm892, %v4919, %v4921
    %v5011 = vsel %vm892, %v4921, %v4923
    %v5012 = vsel %vm892, %v4925, %v4927
    %v5013 = vsel %vm892, %v4927, %v4929
    %v5014 = vsel %vm892, %v4931, %v4933
    %v5015 = vsel %vm892, %v4933, %v4935
    %v5016 = vsel %vm892, %v4937, %v4939
    %v5017 = vsel %vm892, %v4939, %v4941
    %v5018 = vsel %vm892, %v4943, %v4945
    %v5019 = vsel %vm892, %v4945, %v4947
    %v5020 = vsel %vm892, %v4949, %v4951
    %v5021 = vsel %vm892, %v4951, %v4953
    %v5124 = vadd.f32 %v2964, %v4954
    %v5125 = vadd.f32 %v2965, %v4955
    %v5126 = vadd.f32 %v2966, %v4755
    %v5127 = vadd.f32 %v2967, %v4956
    %v5128 = vadd.f32 %v2968, %v4957
    %v5129 = vadd.f32 %v2969, %v4761
    %v5130 = vadd.f32 %v2970, %v4958
    %v5131 = vadd.f32 %v2971, %v4959
    %v5132 = vadd.f32 %v2972, %v4767
    %v5133 = vadd.f32 %v2973, %v4960
    %v5134 = vadd.f32 %v2974, %v4961
    %v5135 = vadd.f32 %v2975, %v4773
    %v5136 = vadd.f32 %v2976, %v4962
    %v5137 = vadd.f32 %v2977, %v4963
    %v5138 = vadd.f32 %v2978, %v4779
    %v5139 = vadd.f32 %v2979, %v4964
    %v5140 = vadd.f32 %v2980, %v4965
    %v5141 = vadd.f32 %v2981, %v4785
    %v5142 = vadd.f32 %v2982, %v4966
    %v5143 = vadd.f32 %v2983, %v4967
    %v5144 = vadd.f32 %v2984, %v4791
    %v5145 = vadd.f32 %v2985, %v4968
    %v5146 = vadd.f32 %v2986, %v4969
    %v5147 = vadd.f32 %v2987, %v4797
    %v5148 = vadd.f32 %v2988, %v4970
    %v5149 = vadd.f32 %v2989, %v4971
    %v5150 = vadd.f32 %v2990, %v4803
    %v5151 = vadd.f32 %v2991, %v4972
    %v5152 = vadd.f32 %v2992, %v4973
    %v5153 = vadd.f32 %v2993, %v4809
    %v5154 = vadd.f32 %v2994, %v4974
    %v5155 = vadd.f32 %v2995, %v4975
    %v5156 = vadd.f32 %v2996, %v4815
    %v5157 = vadd.f32 %v2997, %v4976
    %v5158 = vadd.f32 %v2998, %v4977
    %v5159 = vadd.f32 %v2999, %v4821
    %v5160 = vadd.f32 %v3000, %v4978
    %v5161 = vadd.f32 %v3001, %v4979
    %v5162 = vadd.f32 %v3002, %v4827
    %v5163 = vadd.f32 %v3003, %v4980
    %v5164 = vadd.f32 %v3004, %v4981
    %v5165 = vadd.f32 %v3005, %v4833
    %v5166 = vadd.f32 %v3006, %v4982
    %v5167 = vadd.f32 %v3007, %v4983
    %v5168 = vadd.f32 %v3008, %v4839
    %v5169 = vadd.f32 %v3009, %v4984
    %v5170 = vadd.f32 %v3010, %v4985
    %v5171 = vadd.f32 %v3011, %v4845
    %v5172 = vadd.f32 %v3012, %v4986
    %v5173 = vadd.f32 %v3013, %v4987
    %v5174 = vadd.f32 %v3014, %v4851
    %v5175 = vadd.f32 %v3015, %v4988
    %v5176 = vadd.f32 %v3016, %v4989
    %v5177 = vadd.f32 %v3017, %v4857
    %v5178 = vadd.f32 %v3018, %v4990
    %v5179 = vadd.f32 %v3019, %v4991
    %v5180 = vadd.f32 %v3020, %v4863
    %v5181 = vadd.f32 %v3021, %v4992
    %v5182 = vadd.f32 %v3022, %v4993
    %v5183 = vadd.f32 %v3023, %v4869
    %v5184 = vadd.f32 %v3024, %v4994
    %v5185 = vadd.f32 %v3025, %v4995
    %v5186 = vadd.f32 %v3026, %v4875
    %v5187 = vadd.f32 %v3027, %v4996
    %v5188 = vadd.f32 %v3028, %v4997
    %v5189 = vadd.f32 %v3029, %v4881
    %v5190 = vadd.f32 %v3030, %v4998
    %v5191 = vadd.f32 %v3031, %v4999
    %v5192 = vadd.f32 %v3032, %v4887
    %v5193 = vadd.f32 %v3033, %v5000
    %v5194 = vadd.f32 %v3034, %v5001
    %v5195 = vadd.f32 %v3035, %v4893
    %v5196 = vadd.f32 %v3036, %v5002
    %v5197 = vadd.f32 %v3037, %v5003
    %v5198 = vadd.f32 %v3038, %v4899
    %v5199 = vadd.f32 %v3039, %v5004
    %v5200 = vadd.f32 %v3040, %v5005
    %v5201 = vadd.f32 %v3041, %v4905
    %v5202 = vadd.f32 %v3042, %v5006
    %v5203 = vadd.f32 %v3043, %v5007
    %v5204 = vadd.f32 %v3044, %v4911
    %v5205 = vadd.f32 %v3045, %v5008
    %v5206 = vadd.f32 %v3046, %v5009
    %v5207 = vadd.f32 %v3047, %v4917
    %v5208 = vadd.f32 %v3048, %v5010
    %v5209 = vadd.f32 %v3049, %v5011
    %v5210 = vadd.f32 %v3050, %v4923
    %v5211 = vadd.f32 %v3051, %v5012
    %v5212 = vadd.f32 %v3052, %v5013
    %v5213 = vadd.f32 %v3053, %v4929
    %v5214 = vadd.f32 %v3054, %v5014
    %v5215 = vadd.f32 %v3055, %v5015
    %v5216 = vadd.f32 %v3056, %v4935
    %v5217 = vadd.f32 %v3057, %v5016
    %v5218 = vadd.f32 %v3058, %v5017
    %v5219 = vadd.f32 %v3059, %v4941
    %v5220 = vadd.f32 %v3060, %v5018
    %v5221 = vadd.f32 %v3061, %v5019
    %v5222 = vadd.f32 %v3062, %v4947
    %v5223 = vadd.f32 %v3063, %v5020
    %v5224 = vadd.f32 %v3064, %v5021
    %v5225 = vadd.f32 %v3065, %v4953
    %v5226 = vadd.f32 %v2964, %v2964
    %v5227 = vadd.f32 %v2965, %v2965
    %v5228 = vadd.f32 %v2966, %v2966
    %v5229 = vadd.f32 %v2967, %v2967
    %v5230 = vadd.f32 %v2968, %v2968
    %v5231 = vadd.f32 %v2969, %v2969
    %v5232 = vadd.f32 %v2970, %v2970
    %v5233 = vadd.f32 %v2971, %v2971
    %v5234 = vadd.f32 %v2972, %v2972
    %v5235 = vadd.f32 %v2973, %v2973
    %v5236 = vadd.f32 %v2974, %v2974
    %v5237 = vadd.f32 %v2975, %v2975
    %v5238 = vadd.f32 %v2976, %v2976
    %v5239 = vadd.f32 %v2977, %v2977
    %v5240 = vadd.f32 %v2978, %v2978
    %v5241 = vadd.f32 %v2979, %v2979
    %v5242 = vadd.f32 %v2980, %v2980
    %v5243 = vadd.f32 %v2981, %v2981
    %v5244 = vadd.f32 %v2982, %v2982
    %v5245 = vadd.f32 %v2983, %v2983
    %v5246 = vadd.f32 %v2984, %v2984
    %v5247 = vadd.f32 %v2985, %v2985
    %v5248 = vadd.f32 %v2986, %v2986
    %v5249 = vadd.f32 %v2987, %v2987
    %v5250 = vadd.f32 %v2988, %v2988
    %v5251 = vadd.f32 %v2989, %v2989
    %v5252 = vadd.f32 %v2990, %v2990
    %v5253 = vadd.f32 %v2991, %v2991
    %v5254 = vadd.f32 %v2992, %v2992
    %v5255 = vadd.f32 %v2993, %v2993
    %v5256 = vadd.f32 %v2994, %v2994
    %v5257 = vadd.f32 %v2995, %v2995
    %v5258 = vadd.f32 %v2996, %v2996
    %v5259 = vadd.f32 %v2997, %v2997
    %v5260 = vadd.f32 %v2998, %v2998
    %v5261 = vadd.f32 %v2999, %v2999
    %v5262 = vadd.f32 %v3000, %v3000
    %v5263 = vadd.f32 %v3001, %v3001
    %v5264 = vadd.f32 %v3002, %v3002
    %v5265 = vadd.f32 %v3003, %v3003
    %v5266 = vadd.f32 %v3004, %v3004
    %v5267 = vadd.f32 %v3005, %v3005
    %v5268 = vadd.f32 %v3006, %v3006
    %v5269 = vadd.f32 %v3007, %v3007
    %v5270 = vadd.f32 %v3008, %v3008
    %v5271 = vadd.f32 %v3009, %v3009
    %v5272 = vadd.f32 %v3010, %v3010
    %v5273 = vadd.f32 %v3011, %v3011
    %v5274 = vadd.f32 %v3012, %v3012
    %v5275 = vadd.f32 %v3013, %v3013
    %v5276 = vadd.f32 %v3014, %v3014
    %v5277 = vadd.f32 %v3015, %v3015
    %v5278 = vadd.f32 %v3016, %v3016
    %v5279 = vadd.f32 %v3017, %v3017
    %v5280 = vadd.f32 %v3018, %v3018
    %v5281 = vadd.f32 %v3019, %v3019
    %v5282 = vadd.f32 %v3020, %v3020
    %v5283 = vadd.f32 %v3021, %v3021
    %v5284 = vadd.f32 %v3022, %v3022
    %v5285 = vadd.f32 %v3023, %v3023
    %v5286 = vadd.f32 %v3024, %v3024
    %v5287 = vadd.f32 %v3025, %v3025
    %v5288 = vadd.f32 %v3026, %v3026
    %v5289 = vadd.f32 %v3027, %v3027
    %v5290 = vadd.f32 %v3028, %v3028
    %v5291 = vadd.f32 %v3029, %v3029
    %v5292 = vadd.f32 %v3030, %v3030
    %v5293 = vadd.f32 %v3031, %v3031
    %v5294 = vadd.f32 %v3032, %v3032
    %v5295 = vadd.f32 %v3033, %v3033
    %v5296 = vadd.f32 %v3034, %v3034
    %v5297 = vadd.f32 %v3035, %v3035
    %v5298 = vadd.f32 %v3036, %v3036
    %v5299 = vadd.f32 %v3037, %v3037
    %v5300 = vadd.f32 %v3038, %v3038
    %v5301 = vadd.f32 %v3039, %v3039
    %v5302 = vadd.f32 %v3040, %v3040
    %v5303 = vadd.f32 %v3041, %v3041
    %v5304 = vadd.f32 %v3042, %v3042
    %v5305 = vadd.f32 %v3043, %v3043
    %v5306 = vadd.f32 %v3044, %v3044
    %v5307 = vadd.f32 %v3045, %v3045
    %v5308 = vadd.f32 %v3046, %v3046
    %v5309 = vadd.f32 %v3047, %v3047
    %v5310 = vadd.f32 %v3048, %v3048
    %v5311 = vadd.f32 %v3049, %v3049
    %v5312 = vadd.f32 %v3050, %v3050
    %v5313 = vadd.f32 %v3051, %v3051
    %v5314 = vadd.f32 %v3052, %v3052
    %v5315 = vadd.f32 %v3053, %v3053
    %v5316 = vadd.f32 %v3054, %v3054
    %v5317 = vadd.f32 %v3055, %v3055
    %v5318 = vadd.f32 %v3056, %v3056
    %v5319 = vadd.f32 %v3057, %v3057
    %v5320 = vadd.f32 %v3058, %v3058
    %v5321 = vadd.f32 %v3059, %v3059
    %v5322 = vadd.f32 %v3060, %v3060
    %v5323 = vadd.f32 %v3061, %v3061
    %v5324 = vadd.f32 %v3062, %v3062
    %v5325 = vadd.f32 %v3063, %v3063
    %v5326 = vadd.f32 %v3064, %v3064
    %v5327 = vadd.f32 %v3065, %v3065
    %5430 = vrot.lane.b32.xlu0 %v5226, 127
    %v5431 = vpop.permute.xlu0 %5430
    %5432 = vrot.lane.b32.xlu0 %v5227, 127
    %v5433 = vpop.permute.xlu0 %5432
    %5434 = vrot.lane.b32.xlu0 %v5228, 127
    %v5435 = vpop.permute.xlu0 %5434
    %5436 = vrot.lane.b32.xlu0 %v5229, 127
    %v5437 = vpop.permute.xlu0 %5436
    %5438 = vrot.lane.b32.xlu0 %v5230, 127
    %v5439 = vpop.permute.xlu0 %5438
    %5440 = vrot.lane.b32.xlu0 %v5231, 127
    %v5441 = vpop.permute.xlu0 %5440
    %5442 = vrot.lane.b32.xlu0 %v5232, 127
    %v5443 = vpop.permute.xlu0 %5442
    %5444 = vrot.lane.b32.xlu0 %v5233, 127
    %v5445 = vpop.permute.xlu0 %5444
    %5446 = vrot.lane.b32.xlu0 %v5234, 127
    %v5447 = vpop.permute.xlu0 %5446
    %5448 = vrot.lane.b32.xlu0 %v5235, 127
    %v5449 = vpop.permute.xlu0 %5448
    %5450 = vrot.lane.b32.xlu0 %v5236, 127
    %v5451 = vpop.permute.xlu0 %5450
    %5452 = vrot.lane.b32.xlu0 %v5237, 127
    %v5453 = vpop.permute.xlu0 %5452
    %5454 = vrot.lane.b32.xlu0 %v5238, 127
    %v5455 = vpop.permute.xlu0 %5454
    %5456 = vrot.lane.b32.xlu0 %v5239, 127
    %v5457 = vpop.permute.xlu0 %5456
    %5458 = vrot.lane.b32.xlu0 %v5240, 127
    %v5459 = vpop.permute.xlu0 %5458
    %5460 = vrot.lane.b32.xlu0 %v5241, 127
    %v5461 = vpop.permute.xlu0 %5460
    %5462 = vrot.lane.b32.xlu0 %v5242, 127
    %v5463 = vpop.permute.xlu0 %5462
    %5464 = vrot.lane.b32.xlu0 %v5243, 127
    %v5465 = vpop.permute.xlu0 %5464
    %5466 = vrot.lane.b32.xlu0 %v5244, 127
    %v5467 = vpop.permute.xlu0 %5466
    %5468 = vrot.lane.b32.xlu0 %v5245, 127
    %v5469 = vpop.permute.xlu0 %5468
    %5470 = vrot.lane.b32.xlu0 %v5246, 127
    %v5471 = vpop.permute.xlu0 %5470
    %5472 = vrot.lane.b32.xlu0 %v5247, 127
    %v5473 = vpop.permute.xlu0 %5472
    %5474 = vrot.lane.b32.xlu0 %v5248, 127
    %v5475 = vpop.permute.xlu0 %5474
    %5476 = vrot.lane.b32.xlu0 %v5249, 127
    %v5477 = vpop.permute.xlu0 %5476
    %5478 = vrot.lane.b32.xlu0 %v5250, 127
    %v5479 = vpop.permute.xlu0 %5478
    %5480 = vrot.lane.b32.xlu0 %v5251, 127
    %v5481 = vpop.permute.xlu0 %5480
    %5482 = vrot.lane.b32.xlu0 %v5252, 127
    %v5483 = vpop.permute.xlu0 %5482
    %5484 = vrot.lane.b32.xlu0 %v5253, 127
    %v5485 = vpop.permute.xlu0 %5484
    %5486 = vrot.lane.b32.xlu0 %v5254, 127
    %v5487 = vpop.permute.xlu0 %5486
    %5488 = vrot.lane.b32.xlu0 %v5255, 127
    %v5489 = vpop.permute.xlu0 %5488
    %5490 = vrot.lane.b32.xlu0 %v5256, 127
    %v5491 = vpop.permute.xlu0 %5490
    %5492 = vrot.lane.b32.xlu0 %v5257, 127
    %v5493 = vpop.permute.xlu0 %5492
    %5494 = vrot.lane.b32.xlu0 %v5258, 127
    %v5495 = vpop.permute.xlu0 %5494
    %5496 = vrot.lane.b32.xlu0 %v5259, 127
    %v5497 = vpop.permute.xlu0 %5496
    %5498 = vrot.lane.b32.xlu0 %v5260, 127
    %v5499 = vpop.permute.xlu0 %5498
    %5500 = vrot.lane.b32.xlu0 %v5261, 127
    %v5501 = vpop.permute.xlu0 %5500
    %5502 = vrot.lane.b32.xlu0 %v5262, 127
    %v5503 = vpop.permute.xlu0 %5502
    %5504 = vrot.lane.b32.xlu0 %v5263, 127
    %v5505 = vpop.permute.xlu0 %5504
    %5506 = vrot.lane.b32.xlu0 %v5264, 127
    %v5507 = vpop.permute.xlu0 %5506
    %5508 = vrot.lane.b32.xlu0 %v5265, 127
    %v5509 = vpop.permute.xlu0 %5508
    %5510 = vrot.lane.b32.xlu0 %v5266, 127
    %v5511 = vpop.permute.xlu0 %5510
    %5512 = vrot.lane.b32.xlu0 %v5267, 127
    %v5513 = vpop.permute.xlu0 %5512
    %5514 = vrot.lane.b32.xlu0 %v5268, 127
    %v5515 = vpop.permute.xlu0 %5514
    %5516 = vrot.lane.b32.xlu0 %v5269, 127
    %v5517 = vpop.permute.xlu0 %5516
    %5518 = vrot.lane.b32.xlu0 %v5270, 127
    %v5519 = vpop.permute.xlu0 %5518
    %5520 = vrot.lane.b32.xlu0 %v5271, 127
    %v5521 = vpop.permute.xlu0 %5520
    %5522 = vrot.lane.b32.xlu0 %v5272, 127
    %v5523 = vpop.permute.xlu0 %5522
    %5524 = vrot.lane.b32.xlu0 %v5273, 127
    %v5525 = vpop.permute.xlu0 %5524
    %5526 = vrot.lane.b32.xlu0 %v5274, 127
    %v5527 = vpop.permute.xlu0 %5526
    %5528 = vrot.lane.b32.xlu0 %v5275, 127
    %v5529 = vpop.permute.xlu0 %5528
    %5530 = vrot.lane.b32.xlu0 %v5276, 127
    %v5531 = vpop.permute.xlu0 %5530
    %5532 = vrot.lane.b32.xlu0 %v5277, 127
    %v5533 = vpop.permute.xlu0 %5532
    %5534 = vrot.lane.b32.xlu0 %v5278, 127
    %v5535 = vpop.permute.xlu0 %5534
    %5536 = vrot.lane.b32.xlu0 %v5279, 127
    %v5537 = vpop.permute.xlu0 %5536
    %5538 = vrot.lane.b32.xlu0 %v5280, 127
    %v5539 = vpop.permute.xlu0 %5538
    %5540 = vrot.lane.b32.xlu0 %v5281, 127
    %v5541 = vpop.permute.xlu0 %5540
    %5542 = vrot.lane.b32.xlu0 %v5282, 127
    %v5543 = vpop.permute.xlu0 %5542
    %5544 = vrot.lane.b32.xlu0 %v5283, 127
    %v5545 = vpop.permute.xlu0 %5544
    %5546 = vrot.lane.b32.xlu0 %v5284, 127
    %v5547 = vpop.permute.xlu0 %5546
    %5548 = vrot.lane.b32.xlu0 %v5285, 127
    %v5549 = vpop.permute.xlu0 %5548
    %5550 = vrot.lane.b32.xlu0 %v5286, 127
    %v5551 = vpop.permute.xlu0 %5550
    %5552 = vrot.lane.b32.xlu0 %v5287, 127
    %v5553 = vpop.permute.xlu0 %5552
    %5554 = vrot.lane.b32.xlu0 %v5288, 127
    %v5555 = vpop.permute.xlu0 %5554
    %5556 = vrot.lane.b32.xlu0 %v5289, 127
    %v5557 = vpop.permute.xlu0 %5556
    %5558 = vrot.lane.b32.xlu0 %v5290, 127
    %v5559 = vpop.permute.xlu0 %5558
    %5560 = vrot.lane.b32.xlu0 %v5291, 127
    %v5561 = vpop.permute.xlu0 %5560
    %5562 = vrot.lane.b32.xlu0 %v5292, 127
    %v5563 = vpop.permute.xlu0 %5562
    %5564 = vrot.lane.b32.xlu0 %v5293, 127
    %v5565 = vpop.permute.xlu0 %5564
    %5566 = vrot.lane.b32.xlu0 %v5294, 127
    %v5567 = vpop.permute.xlu0 %5566
    %5568 = vrot.lane.b32.xlu0 %v5295, 127
    %v5569 = vpop.permute.xlu0 %5568
    %5570 = vrot.lane.b32.xlu0 %v5296, 127
    %v5571 = vpop.permute.xlu0 %5570
    %5572 = vrot.lane.b32.xlu0 %v5297, 127
    %v5573 = vpop.permute.xlu0 %5572
    %5574 = vrot.lane.b32.xlu0 %v5298, 127
    %v5575 = vpop.permute.xlu0 %5574
    %5576 = vrot.lane.b32.xlu0 %v5299, 127
    %v5577 = vpop.permute.xlu0 %5576
    %5578 = vrot.lane.b32.xlu0 %v5300, 127
    %v5579 = vpop.permute.xlu0 %5578
    %5580 = vrot.lane.b32.xlu0 %v5301, 127
    %v5581 = vpop.permute.xlu0 %5580
    %5582 = vrot.lane.b32.xlu0 %v5302, 127
    %v5583 = vpop.permute.xlu0 %5582
    %5584 = vrot.lane.b32.xlu0 %v5303, 127
    %v5585 = vpop.permute.xlu0 %5584
    %5586 = vrot.lane.b32.xlu0 %v5304, 127
    %v5587 = vpop.permute.xlu0 %5586
    %5588 = vrot.lane.b32.xlu0 %v5305, 127
    %v5589 = vpop.permute.xlu0 %5588
    %5590 = vrot.lane.b32.xlu0 %v5306, 127
    %v5591 = vpop.permute.xlu0 %5590
    %5592 = vrot.lane.b32.xlu0 %v5307, 127
    %v5593 = vpop.permute.xlu0 %5592
    %5594 = vrot.lane.b32.xlu0 %v5308, 127
    %v5595 = vpop.permute.xlu0 %5594
    %5596 = vrot.lane.b32.xlu0 %v5309, 127
    %v5597 = vpop.permute.xlu0 %5596
    %5598 = vrot.lane.b32.xlu0 %v5310, 127
    %v5599 = vpop.permute.xlu0 %5598
    %5600 = vrot.lane.b32.xlu0 %v5311, 127
    %v5601 = vpop.permute.xlu0 %5600
    %5602 = vrot.lane.b32.xlu0 %v5312, 127
    %v5603 = vpop.permute.xlu0 %5602
    %5604 = vrot.lane.b32.xlu0 %v5313, 127
    %v5605 = vpop.permute.xlu0 %5604
    %5606 = vrot.lane.b32.xlu0 %v5314, 127
    %v5607 = vpop.permute.xlu0 %5606
    %5608 = vrot.lane.b32.xlu0 %v5315, 127
    %v5609 = vpop.permute.xlu0 %5608
    %5610 = vrot.lane.b32.xlu0 %v5316, 127
    %v5611 = vpop.permute.xlu0 %5610
    %5612 = vrot.lane.b32.xlu0 %v5317, 127
    %v5613 = vpop.permute.xlu0 %5612
    %5614 = vrot.lane.b32.xlu0 %v5318, 127
    %v5615 = vpop.permute.xlu0 %5614
    %5616 = vrot.lane.b32.xlu0 %v5319, 127
    %v5617 = vpop.permute.xlu0 %5616
    %5618 = vrot.lane.b32.xlu0 %v5320, 127
    %v5619 = vpop.permute.xlu0 %5618
    %5620 = vrot.lane.b32.xlu0 %v5321, 127
    %v5621 = vpop.permute.xlu0 %5620
    %5622 = vrot.lane.b32.xlu0 %v5322, 127
    %v5623 = vpop.permute.xlu0 %5622
    %5624 = vrot.lane.b32.xlu0 %v5323, 127
    %v5625 = vpop.permute.xlu0 %5624
    %5626 = vrot.lane.b32.xlu0 %v5324, 127
    %v5627 = vpop.permute.xlu0 %5626
    %5628 = vrot.lane.b32.xlu0 %v5325, 127
    %v5629 = vpop.permute.xlu0 %5628
    %5630 = vrot.lane.b32.xlu0 %v5326, 127
    %v5631 = vpop.permute.xlu0 %5630
    %5632 = vrot.lane.b32.xlu0 %v5327, 127
    %v5633 = vpop.permute.xlu0 %5632
    %vm5634 = vcmask 1039360
    %v5635 = vsel %vm5634, %v5431, %v5433
    %v5636 = vsel %vm5634, %v5433, %v5435
    %v5637 = vsel %vm5634, %v5437, %v5439
    %v5638 = vsel %vm5634, %v5439, %v5441
    %v5639 = vsel %vm5634, %v5443, %v5445
    %v5640 = vsel %vm5634, %v5445, %v5447
    %v5641 = vsel %vm5634, %v5449, %v5451
    %v5642 = vsel %vm5634, %v5451, %v5453
    %v5643 = vsel %vm5634, %v5455, %v5457
    %v5644 = vsel %vm5634, %v5457, %v5459
    %v5645 = vsel %vm5634, %v5461, %v5463
    %v5646 = vsel %vm5634, %v5463, %v5465
    %v5647 = vsel %vm5634, %v5467, %v5469
    %v5648 = vsel %vm5634, %v5469, %v5471
    %v5649 = vsel %vm5634, %v5473, %v5475
    %v5650 = vsel %vm5634, %v5475, %v5477
    %v5651 = vsel %vm5634, %v5479, %v5481
    %v5652 = vsel %vm5634, %v5481, %v5483
    %v5653 = vsel %vm5634, %v5485, %v5487
    %v5654 = vsel %vm5634, %v5487, %v5489
    %v5655 = vsel %vm5634, %v5491, %v5493
    %v5656 = vsel %vm5634, %v5493, %v5495
    %v5657 = vsel %vm5634, %v5497, %v5499
    %v5658 = vsel %vm5634, %v5499, %v5501
    %v5659 = vsel %vm5634, %v5503, %v5505
    %v5660 = vsel %vm5634, %v5505, %v5507
    %v5661 = vsel %vm5634, %v5509, %v5511
    %v5662 = vsel %vm5634, %v5511, %v5513
    %v5663 = vsel %vm5634, %v5515, %v5517
    %v5664 = vsel %vm5634, %v5517, %v5519
    %v5665 = vsel %vm5634, %v5521, %v5523
    %v5666 = vsel %vm5634, %v5523, %v5525
    %v5667 = vsel %vm5634, %v5527, %v5529
    %v5668 = vsel %vm5634, %v5529, %v5531
    %v5669 = vsel %vm5634, %v5533, %v5535
    %v5670 = vsel %vm5634, %v5535, %v5537
    %v5671 = vsel %vm5634, %v5539, %v5541
    %v5672 = vsel %vm5634, %v5541, %v5543
    %v5673 = vsel %vm5634, %v5545, %v5547
    %v5674 = vsel %vm5634, %v5547, %v5549
    %v5675 = vsel %vm5634, %v5551, %v5553
    %v5676 = vsel %vm5634, %v5553, %v5555
    %v5677 = vsel %vm5634, %v5557, %v5559
    %v5678 = vsel %vm5634, %v5559, %v5561
    %v5679 = vsel %vm5634, %v5563, %v5565
    %v5680 = vsel %vm5634, %v5565, %v5567
    %v5681 = vsel %vm5634, %v5569, %v5571
    %v5682 = vsel %vm5634, %v5571, %v5573
    %v5683 = vsel %vm5634, %v5575, %v5577
    %v5684 = vsel %vm5634, %v5577, %v5579
    %v5685 = vsel %vm5634, %v5581, %v5583
    %v5686 = vsel %vm5634, %v5583, %v5585
    %v5687 = vsel %vm5634, %v5587, %v5589
    %v5688 = vsel %vm5634, %v5589, %v5591
    %v5689 = vsel %vm5634, %v5593, %v5595
    %v5690 = vsel %vm5634, %v5595, %v5597
    %v5691 = vsel %vm5634, %v5599, %v5601
    %v5692 = vsel %vm5634, %v5601, %v5603
    %v5693 = vsel %vm5634, %v5605, %v5607
    %v5694 = vsel %vm5634, %v5607, %v5609
    %v5695 = vsel %vm5634, %v5611, %v5613
    %v5696 = vsel %vm5634, %v5613, %v5615
    %v5697 = vsel %vm5634, %v5617, %v5619
    %v5698 = vsel %vm5634, %v5619, %v5621
    %v5699 = vsel %vm5634, %v5623, %v5625
    %v5700 = vsel %vm5634, %v5625, %v5627
    %v5701 = vsel %vm5634, %v5629, %v5631
    %v5702 = vsel %vm5634, %v5631, %v5633
    %v5805 = vadd.f32 %v5124, %v5635
    %v5806 = vadd.f32 %v5125, %v5636
    %v5807 = vadd.f32 %v5126, %v5435
    %v5808 = vadd.f32 %v5127, %v5637
    %v5809 = vadd.f32 %v5128, %v5638
    %v5810 = vadd.f32 %v5129, %v5441
    %v5811 = vadd.f32 %v5130, %v5639
    %v5812 = vadd.f32 %v5131, %v5640
    %v5813 = vadd.f32 %v5132, %v5447
    %v5814 = vadd.f32 %v5133, %v5641
    %v5815 = vadd.f32 %v5134, %v5642
    %v5816 = vadd.f32 %v5135, %v5453
    %v5817 = vadd.f32 %v5136, %v5643
    %v5818 = vadd.f32 %v5137, %v5644
    %v5819 = vadd.f32 %v5138, %v5459
    %v5820 = vadd.f32 %v5139, %v5645
    %v5821 = vadd.f32 %v5140, %v5646
    %v5822 = vadd.f32 %v5141, %v5465
    %v5823 = vadd.f32 %v5142, %v5647
    %v5824 = vadd.f32 %v5143, %v5648
    %v5825 = vadd.f32 %v5144, %v5471
    %v5826 = vadd.f32 %v5145, %v5649
    %v5827 = vadd.f32 %v5146, %v5650
    %v5828 = vadd.f32 %v5147, %v5477
    %v5829 = vadd.f32 %v5148, %v5651
    %v5830 = vadd.f32 %v5149, %v5652
    %v5831 = vadd.f32 %v5150, %v5483
    %v5832 = vadd.f32 %v5151, %v5653
    %v5833 = vadd.f32 %v5152, %v5654
    %v5834 = vadd.f32 %v5153, %v5489
    %v5835 = vadd.f32 %v5154, %v5655
    %v5836 = vadd.f32 %v5155, %v5656
    %v5837 = vadd.f32 %v5156, %v5495
    %v5838 = vadd.f32 %v5157, %v5657
    %v5839 = vadd.f32 %v5158, %v5658
    %v5840 = vadd.f32 %v5159, %v5501
    %v5841 = vadd.f32 %v5160, %v5659
    %v5842 = vadd.f32 %v5161, %v5660
    %v5843 = vadd.f32 %v5162, %v5507
    %v5844 = vadd.f32 %v5163, %v5661
    %v5845 = vadd.f32 %v5164, %v5662
    %v5846 = vadd.f32 %v5165, %v5513
    %v5847 = vadd.f32 %v5166, %v5663
    %v5848 = vadd.f32 %v5167, %v5664
    %v5849 = vadd.f32 %v5168, %v5519
    %v5850 = vadd.f32 %v5169, %v5665
    %v5851 = vadd.f32 %v5170, %v5666
    %v5852 = vadd.f32 %v5171, %v5525
    %v5853 = vadd.f32 %v5172, %v5667
    %v5854 = vadd.f32 %v5173, %v5668
    %v5855 = vadd.f32 %v5174, %v5531
    %v5856 = vadd.f32 %v5175, %v5669
    %v5857 = vadd.f32 %v5176, %v5670
    %v5858 = vadd.f32 %v5177, %v5537
    %v5859 = vadd.f32 %v5178, %v5671
    %v5860 = vadd.f32 %v5179, %v5672
    %v5861 = vadd.f32 %v5180, %v5543
    %v5862 = vadd.f32 %v5181, %v5673
    %v5863 = vadd.f32 %v5182, %v5674
    %v5864 = vadd.f32 %v5183, %v5549
    %v5865 = vadd.f32 %v5184, %v5675
    %v5866 = vadd.f32 %v5185, %v5676
    %v5867 = vadd.f32 %v5186, %v5555
    %v5868 = vadd.f32 %v5187, %v5677
    %v5869 = vadd.f32 %v5188, %v5678
    %v5870 = vadd.f32 %v5189, %v5561
    %v5871 = vadd.f32 %v5190, %v5679
    %v5872 = vadd.f32 %v5191, %v5680
    %v5873 = vadd.f32 %v5192, %v5567
    %v5874 = vadd.f32 %v5193, %v5681
    %v5875 = vadd.f32 %v5194, %v5682
    %v5876 = vadd.f32 %v5195, %v5573
    %v5877 = vadd.f32 %v5196, %v5683
    %v5878 = vadd.f32 %v5197, %v5684
    %v5879 = vadd.f32 %v5198, %v5579
    %v5880 = vadd.f32 %v5199, %v5685
    %v5881 = vadd.f32 %v5200, %v5686
    %v5882 = vadd.f32 %v5201, %v5585
    %v5883 = vadd.f32 %v5202, %v5687
    %v5884 = vadd.f32 %v5203, %v5688
    %v5885 = vadd.f32 %v5204, %v5591
    %v5886 = vadd.f32 %v5205, %v5689
    %v5887 = vadd.f32 %v5206, %v5690
    %v5888 = vadd.f32 %v5207, %v5597
    %v5889 = vadd.f32 %v5208, %v5691
    %v5890 = vadd.f32 %v5209, %v5692
    %v5891 = vadd.f32 %v5210, %v5603
    %v5892 = vadd.f32 %v5211, %v5693
    %v5893 = vadd.f32 %v5212, %v5694
    %v5894 = vadd.f32 %v5213, %v5609
    %v5895 = vadd.f32 %v5214, %v5695
    %v5896 = vadd.f32 %v5215, %v5696
    %v5897 = vadd.f32 %v5216, %v5615
    %v5898 = vadd.f32 %v5217, %v5697
    %v5899 = vadd.f32 %v5218, %v5698
    %v5900 = vadd.f32 %v5219, %v5621
    %v5901 = vadd.f32 %v5220, %v5699
    %v5902 = vadd.f32 %v5221, %v5700
    %v5903 = vadd.f32 %v5222, %v5627
    %v5904 = vadd.f32 %v5223, %v5701
    %v5905 = vadd.f32 %v5224, %v5702
    %v5906 = vadd.f32 %v5225, %v5633
    %vm6009 = vcmask 1041408
    %v6010 = vrot.slane %v5805, 6
    %v6011 = vrot.slane %v5806, 6
    %v6012 = vrot.slane %v5807, 6
    %v6013 = vrot.slane %v5808, 6
    %v6014 = vsel %vm6009, %v6010, %v6013
    %v6015 = vrot.slane %v5809, 6
    %v6016 = vsel %vm6009, %v6011, %v6015
    %v6017 = vrot.slane %v5810, 6
    %v6018 = vsel %vm6009, %v6012, %v6017
    %v6019 = vrot.slane %v5811, 6
    %v6020 = vsel %vm6009, %v6013, %v6019
    %v6021 = vrot.slane %v5812, 6
    %v6022 = vsel %vm6009, %v6015, %v6021
    %v6023 = vrot.slane %v5813, 6
    %v6024 = vsel %vm6009, %v6017, %v6023
    %v6025 = vrot.slane %v5814, 6
    %v6026 = vsel %vm6009, %v6019, %v6025
    %v6027 = vrot.slane %v5815, 6
    %v6028 = vsel %vm6009, %v6021, %v6027
    %v6029 = vrot.slane %v5816, 6
    %v6030 = vsel %vm6009, %v6023, %v6029
    %v6031 = vrot.slane %v5817, 6
    %v6032 = vsel %vm6009, %v6025, %v6031
    %v6033 = vrot.slane %v5818, 6
    %v6034 = vsel %vm6009, %v6027, %v6033
    %v6035 = vrot.slane %v5819, 6
    %v6036 = vsel %vm6009, %v6029, %v6035
    %v6037 = vrot.slane %v5820, 6
    %v6038 = vsel %vm6009, %v6031, %v6037
    %v6039 = vrot.slane %v5821, 6
    %v6040 = vsel %vm6009, %v6033, %v6039
    %v6041 = vrot.slane %v5822, 6
    %v6042 = vsel %vm6009, %v6035, %v6041
    %v6043 = vrot.slane %v5823, 6
    %v6044 = vsel %vm6009, %v6037, %v6043
    %v6045 = vrot.slane %v5824, 6
    %v6046 = vsel %vm6009, %v6039, %v6045
    %v6047 = vrot.slane %v5825, 6
    %v6048 = vsel %vm6009, %v6041, %v6047
    %v6049 = vrot.slane %v5826, 6
    %v6050 = vsel %vm6009, %v6043, %v6049
    %v6051 = vrot.slane %v5827, 6
    %v6052 = vsel %vm6009, %v6045, %v6051
    %v6053 = vrot.slane %v5828, 6
    %v6054 = vsel %vm6009, %v6047, %v6053
    %v6055 = vrot.slane %v5829, 6
    %v6056 = vsel %vm6009, %v6049, %v6055
    %v6057 = vrot.slane %v5830, 6
    %v6058 = vsel %vm6009, %v6051, %v6057
    %v6059 = vrot.slane %v5831, 6
    %v6060 = vsel %vm6009, %v6053, %v6059
    %v6061 = vrot.slane %v5832, 6
    %v6062 = vsel %vm6009, %v6055, %v6061
    %v6063 = vrot.slane %v5833, 6
    %v6064 = vsel %vm6009, %v6057, %v6063
    %v6065 = vrot.slane %v5834, 6
    %v6066 = vsel %vm6009, %v6059, %v6065
    %v6067 = vrot.slane %v5835, 6
    %v6068 = vsel %vm6009, %v6061, %v6067
    %v6069 = vrot.slane %v5836, 6
    %v6070 = vsel %vm6009, %v6063, %v6069
    %v6071 = vrot.slane %v5837, 6
    %v6072 = vsel %vm6009, %v6065, %v6071
    %v6073 = vrot.slane %v5838, 6
    %v6074 = vsel %vm6009, %v6067, %v6073
    %v6075 = vrot.slane %v5839, 6
    %v6076 = vsel %vm6009, %v6069, %v6075
    %v6077 = vrot.slane %v5840, 6
    %v6078 = vsel %vm6009, %v6071, %v6077
    %v6079 = vrot.slane %v5841, 6
    %v6080 = vsel %vm6009, %v6073, %v6079
    %v6081 = vrot.slane %v5842, 6
    %v6082 = vsel %vm6009, %v6075, %v6081
    %v6083 = vrot.slane %v5843, 6
    %v6084 = vsel %vm6009, %v6077, %v6083
    %v6085 = vrot.slane %v5844, 6
    %v6086 = vsel %vm6009, %v6079, %v6085
    %v6087 = vrot.slane %v5845, 6
    %v6088 = vsel %vm6009, %v6081, %v6087
    %v6089 = vrot.slane %v5846, 6
    %v6090 = vsel %vm6009, %v6083, %v6089
    %v6091 = vrot.slane %v5847, 6
    %v6092 = vsel %vm6009, %v6085, %v6091
    %v6093 = vrot.slane %v5848, 6
    %v6094 = vsel %vm6009, %v6087, %v6093
    %v6095 = vrot.slane %v5849, 6
    %v6096 = vsel %vm6009, %v6089, %v6095
    %v6097 = vrot.slane %v5850, 6
    %v6098 = vsel %vm6009, %v6091, %v6097
    %v6099 = vrot.slane %v5851, 6
    %v6100 = vsel %vm6009, %v6093, %v6099
    %v6101 = vrot.slane %v5852, 6
    %v6102 = vsel %vm6009, %v6095, %v6101
    %v6103 = vrot.slane %v5853, 6
    %v6104 = vsel %vm6009, %v6097, %v6103
    %v6105 = vrot.slane %v5854, 6
    %v6106 = vsel %vm6009, %v6099, %v6105
    %v6107 = vrot.slane %v5855, 6
    %v6108 = vsel %vm6009, %v6101, %v6107
    %v6109 = vrot.slane %v5856, 6
    %v6110 = vsel %vm6009, %v6103, %v6109
    %v6111 = vrot.slane %v5857, 6
    %v6112 = vsel %vm6009, %v6105, %v6111
    %v6113 = vrot.slane %v5858, 6
    %v6114 = vsel %vm6009, %v6107, %v6113
    %v6115 = vrot.slane %v5859, 6
    %v6116 = vsel %vm6009, %v6109, %v6115
    %v6117 = vrot.slane %v5860, 6
    %v6118 = vsel %vm6009, %v6111, %v6117
    %v6119 = vrot.slane %v5861, 6
    %v6120 = vsel %vm6009, %v6113, %v6119
    %v6121 = vrot.slane %v5862, 6
    %v6122 = vsel %vm6009, %v6115, %v6121
    %v6123 = vrot.slane %v5863, 6
    %v6124 = vsel %vm6009, %v6117, %v6123
    %v6125 = vrot.slane %v5864, 6
    %v6126 = vsel %vm6009, %v6119, %v6125
    %v6127 = vrot.slane %v5865, 6
    %v6128 = vsel %vm6009, %v6121, %v6127
    %v6129 = vrot.slane %v5866, 6
    %v6130 = vsel %vm6009, %v6123, %v6129
    %v6131 = vrot.slane %v5867, 6
    %v6132 = vsel %vm6009, %v6125, %v6131
    %v6133 = vrot.slane %v5868, 6
    %v6134 = vsel %vm6009, %v6127, %v6133
    %v6135 = vrot.slane %v5869, 6
    %v6136 = vsel %vm6009, %v6129, %v6135
    %v6137 = vrot.slane %v5870, 6
    %v6138 = vsel %vm6009, %v6131, %v6137
    %v6139 = vrot.slane %v5871, 6
    %v6140 = vsel %vm6009, %v6133, %v6139
    %v6141 = vrot.slane %v5872, 6
    %v6142 = vsel %vm6009, %v6135, %v6141
    %v6143 = vrot.slane %v5873, 6
    %v6144 = vsel %vm6009, %v6137, %v6143
    %v6145 = vrot.slane %v5874, 6
    %v6146 = vsel %vm6009, %v6139, %v6145
    %v6147 = vrot.slane %v5875, 6
    %v6148 = vsel %vm6009, %v6141, %v6147
    %v6149 = vrot.slane %v5876, 6
    %v6150 = vsel %vm6009, %v6143, %v6149
    %v6151 = vrot.slane %v5877, 6
    %v6152 = vsel %vm6009, %v6145, %v6151
    %v6153 = vrot.slane %v5878, 6
    %v6154 = vsel %vm6009, %v6147, %v6153
    %v6155 = vrot.slane %v5879, 6
    %v6156 = vsel %vm6009, %v6149, %v6155
    %v6157 = vrot.slane %v5880, 6
    %v6158 = vsel %vm6009, %v6151, %v6157
    %v6159 = vrot.slane %v5881, 6
    %v6160 = vsel %vm6009, %v6153, %v6159
    %v6161 = vrot.slane %v5882, 6
    %v6162 = vsel %vm6009, %v6155, %v6161
    %v6163 = vrot.slane %v5883, 6
    %v6164 = vsel %vm6009, %v6157, %v6163
    %v6165 = vrot.slane %v5884, 6
    %v6166 = vsel %vm6009, %v6159, %v6165
    %v6167 = vrot.slane %v5885, 6
    %v6168 = vsel %vm6009, %v6161, %v6167
    %v6169 = vrot.slane %v5886, 6
    %v6170 = vsel %vm6009, %v6163, %v6169
    %v6171 = vrot.slane %v5887, 6
    %v6172 = vsel %vm6009, %v6165, %v6171
    %v6173 = vrot.slane %v5888, 6
    %v6174 = vsel %vm6009, %v6167, %v6173
    %v6175 = vrot.slane %v5889, 6
    %v6176 = vsel %vm6009, %v6169, %v6175
    %v6177 = vrot.slane %v5890, 6
    %v6178 = vsel %vm6009, %v6171, %v6177
    %v6179 = vrot.slane %v5891, 6
    %v6180 = vsel %vm6009, %v6173, %v6179
    %v6181 = vrot.slane %v5892, 6
    %v6182 = vsel %vm6009, %v6175, %v6181
    %v6183 = vrot.slane %v5893, 6
    %v6184 = vsel %vm6009, %v6177, %v6183
    %v6185 = vrot.slane %v5894, 6
    %v6186 = vsel %vm6009, %v6179, %v6185
    %v6187 = vrot.slane %v5895, 6
    %v6188 = vsel %vm6009, %v6181, %v6187
    %v6189 = vrot.slane %v5896, 6
    %v6190 = vsel %vm6009, %v6183, %v6189
    %v6191 = vrot.slane %v5897, 6
    %v6192 = vsel %vm6009, %v6185, %v6191
    %v6193 = vrot.slane %v5898, 6
    %v6194 = vsel %vm6009, %v6187, %v6193
    %v6195 = vrot.slane %v5899, 6
    %v6196 = vsel %vm6009, %v6189, %v6195
    %v6197 = vrot.slane %v5900, 6
    %v6198 = vsel %vm6009, %v6191, %v6197
    %v6199 = vrot.slane %v5901, 6
    %v6200 = vsel %vm6009, %v6193, %v6199
    %v6201 = vrot.slane %v5902, 6
    %v6202 = vsel %vm6009, %v6195, %v6201
    %v6203 = vrot.slane %v5903, 6
    %v6204 = vsel %vm6009, %v6197, %v6203
    %v6205 = vrot.slane %v5904, 6
    %v6206 = vsel %vm6009, %v6199, %v6205
    %v6207 = vrot.slane %v5905, 6
    %v6208 = vsel %vm6009, %v6201, %v6207
    %v6209 = vrot.slane %v5906, 6
    %v6210 = vsel %vm6009, %v6203, %v6209
    %v6313 = vsub.f32 %v5805, %v6010
    %v6314 = vsub.f32 %v5806, %v6011
    %v6315 = vsub.f32 %v5807, %v6012
    %v6316 = vsub.f32 %v5808, %v6014
    %v6317 = vsub.f32 %v5809, %v6016
    %v6318 = vsub.f32 %v5810, %v6018
    %v6319 = vsub.f32 %v5811, %v6020
    %v6320 = vsub.f32 %v5812, %v6022
    %v6321 = vsub.f32 %v5813, %v6024
    %v6322 = vsub.f32 %v5814, %v6026
    %v6323 = vsub.f32 %v5815, %v6028
    %v6324 = vsub.f32 %v5816, %v6030
    %v6325 = vsub.f32 %v5817, %v6032
    %v6326 = vsub.f32 %v5818, %v6034
    %v6327 = vsub.f32 %v5819, %v6036
    %v6328 = vsub.f32 %v5820, %v6038
    %v6329 = vsub.f32 %v5821, %v6040
    %v6330 = vsub.f32 %v5822, %v6042
    %v6331 = vsub.f32 %v5823, %v6044
    %v6332 = vsub.f32 %v5824, %v6046
    %v6333 = vsub.f32 %v5825, %v6048
    %v6334 = vsub.f32 %v5826, %v6050
    %v6335 = vsub.f32 %v5827, %v6052
    %v6336 = vsub.f32 %v5828, %v6054
    %v6337 = vsub.f32 %v5829, %v6056
    %v6338 = vsub.f32 %v5830, %v6058
    %v6339 = vsub.f32 %v5831, %v6060
    %v6340 = vsub.f32 %v5832, %v6062
    %v6341 = vsub.f32 %v5833, %v6064
    %v6342 = vsub.f32 %v5834, %v6066
    %v6343 = vsub.f32 %v5835, %v6068
    %v6344 = vsub.f32 %v5836, %v6070
    %v6345 = vsub.f32 %v5837, %v6072
    %v6346 = vsub.f32 %v5838, %v6074
    %v6347 = vsub.f32 %v5839, %v6076
    %v6348 = vsub.f32 %v5840, %v6078
    %v6349 = vsub.f32 %v5841, %v6080
    %v6350 = vsub.f32 %v5842, %v6082
    %v6351 = vsub.f32 %v5843, %v6084
    %v6352 = vsub.f32 %v5844, %v6086
    %v6353 = vsub.f32 %v5845, %v6088
    %v6354 = vsub.f32 %v5846, %v6090
    %v6355 = vsub.f32 %v5847, %v6092
    %v6356 = vsub.f32 %v5848, %v6094
    %v6357 = vsub.f32 %v5849, %v6096
    %v6358 = vsub.f32 %v5850, %v6098
    %v6359 = vsub.f32 %v5851, %v6100
    %v6360 = vsub.f32 %v5852, %v6102
    %v6361 = vsub.f32 %v5853, %v6104
    %v6362 = vsub.f32 %v5854, %v6106
    %v6363 = vsub.f32 %v5855, %v6108
    %v6364 = vsub.f32 %v5856, %v6110
    %v6365 = vsub.f32 %v5857, %v6112
    %v6366 = vsub.f32 %v5858, %v6114
    %v6367 = vsub.f32 %v5859, %v6116
    %v6368 = vsub.f32 %v5860, %v6118
    %v6369 = vsub.f32 %v5861, %v6120
    %v6370 = vsub.f32 %v5862, %v6122
    %v6371 = vsub.f32 %v5863, %v6124
    %v6372 = vsub.f32 %v5864, %v6126
    %v6373 = vsub.f32 %v5865, %v6128
    %v6374 = vsub.f32 %v5866, %v6130
    %v6375 = vsub.f32 %v5867, %v6132
    %v6376 = vsub.f32 %v5868, %v6134
    %v6377 = vsub.f32 %v5869, %v6136
    %v6378 = vsub.f32 %v5870, %v6138
    %v6379 = vsub.f32 %v5871, %v6140
    %v6380 = vsub.f32 %v5872, %v6142
    %v6381 = vsub.f32 %v5873, %v6144
    %v6382 = vsub.f32 %v5874, %v6146
    %v6383 = vsub.f32 %v5875, %v6148
    %v6384 = vsub.f32 %v5876, %v6150
    %v6385 = vsub.f32 %v5877, %v6152
    %v6386 = vsub.f32 %v5878, %v6154
    %v6387 = vsub.f32 %v5879, %v6156
    %v6388 = vsub.f32 %v5880, %v6158
    %v6389 = vsub.f32 %v5881, %v6160
    %v6390 = vsub.f32 %v5882, %v6162
    %v6391 = vsub.f32 %v5883, %v6164
    %v6392 = vsub.f32 %v5884, %v6166
    %v6393 = vsub.f32 %v5885, %v6168
    %v6394 = vsub.f32 %v5886, %v6170
    %v6395 = vsub.f32 %v5887, %v6172
    %v6396 = vsub.f32 %v5888, %v6174
    %v6397 = vsub.f32 %v5889, %v6176
    %v6398 = vsub.f32 %v5890, %v6178
    %v6399 = vsub.f32 %v5891, %v6180
    %v6400 = vsub.f32 %v5892, %v6182
    %v6401 = vsub.f32 %v5893, %v6184
    %v6402 = vsub.f32 %v5894, %v6186
    %v6403 = vsub.f32 %v5895, %v6188
    %v6404 = vsub.f32 %v5896, %v6190
    %v6405 = vsub.f32 %v5897, %v6192
    %v6406 = vsub.f32 %v5898, %v6194
    %v6407 = vsub.f32 %v5899, %v6196
    %v6408 = vsub.f32 %v5900, %v6198
    %v6409 = vsub.f32 %v5901, %v6200
    %v6410 = vsub.f32 %v5902, %v6202
    %v6411 = vsub.f32 %v5903, %v6204
    %v6412 = vsub.f32 %v5904, %v6206
    %v6413 = vsub.f32 %v5905, %v6208
    %v6414 = vsub.f32 %v5906, %v6210
    %v6415 = vand.u32 2147483647, %v4651
    %v6416 = vand.u32 2147483647, %v4652
    %v6417 = vand.u32 2147483647, %v4653
    %v6418 = vand.u32 2147483647, %v4654
    %v6419 = vand.u32 2147483647, %v4655
    %v6420 = vand.u32 2147483647, %v4656
    %v6421 = vand.u32 2147483647, %v4657
    %v6422 = vand.u32 2147483647, %v4658
    %v6423 = vand.u32 2147483647, %v4659
    %v6424 = vand.u32 2147483647, %v4660
    %v6425 = vand.u32 2147483647, %v4661
    %v6426 = vand.u32 2147483647, %v4662
    %v6427 = vand.u32 2147483647, %v4663
    %v6428 = vand.u32 2147483647, %v4664
    %v6429 = vand.u32 2147483647, %v4665
    %v6430 = vand.u32 2147483647, %v4666
    %v6431 = vand.u32 2147483647, %v4667
    %v6432 = vand.u32 2147483647, %v4668
    %v6433 = vand.u32 2147483647, %v4669
    %v6434 = vand.u32 2147483647, %v4670
    %v6435 = vand.u32 2147483647, %v4671
    %v6436 = vand.u32 2147483647, %v4672
    %v6437 = vand.u32 2147483647, %v4673
    %v6438 = vand.u32 2147483647, %v4674
    %v6439 = vand.u32 2147483647, %v4675
    %v6440 = vand.u32 2147483647, %v4676
    %v6441 = vand.u32 2147483647, %v4677
    %v6442 = vand.u32 2147483647, %v4678
    %v6443 = vand.u32 2147483647, %v4679
    %v6444 = vand.u32 2147483647, %v4680
    %v6445 = vand.u32 2147483647, %v4681
    %v6446 = vand.u32 2147483647, %v4682
    %v6447 = vand.u32 2147483647, %v4683
    %v6448 = vand.u32 2147483647, %v4684
    %v6449 = vand.u32 2147483647, %v4685
    %v6450 = vand.u32 2147483647, %v4686
    %v6451 = vand.u32 2147483647, %v4687
    %v6452 = vand.u32 2147483647, %v4688
    %v6453 = vand.u32 2147483647, %v4689
    %v6454 = vand.u32 2147483647, %v4690
    %v6455 = vand.u32 2147483647, %v4691
    %v6456 = vand.u32 2147483647, %v4692
    %v6457 = vand.u32 2147483647, %v4693
    %v6458 = vand.u32 2147483647, %v4694
    %v6459 = vand.u32 2147483647, %v4695
    %v6460 = vand.u32 2147483647, %v4696
    %v6461 = vand.u32 2147483647, %v4697
    %v6462 = vand.u32 2147483647, %v4698
    %v6463 = vand.u32 2147483647, %v4699
    %v6464 = vand.u32 2147483647, %v4700
    %v6465 = vand.u32 2147483647, %v4701
    %v6466 = vand.u32 2147483647, %v4702
    %v6467 = vand.u32 2147483647, %v4703
    %v6468 = vand.u32 2147483647, %v4704
    %v6469 = vand.u32 2147483647, %v4705
    %v6470 = vand.u32 2147483647, %v4706
    %v6471 = vand.u32 2147483647, %v4707
    %v6472 = vand.u32 2147483647, %v4708
    %v6473 = vand.u32 2147483647, %v4709
    %v6474 = vand.u32 2147483647, %v4710
    %v6475 = vand.u32 2147483647, %v4711
    %v6476 = vand.u32 2147483647, %v4712
    %v6477 = vand.u32 2147483647, %v4713
    %v6478 = vand.u32 2147483647, %v4714
    %v6479 = vand.u32 2147483647, %v4715
    %v6480 = vand.u32 2147483647, %v4716
    %v6481 = vand.u32 2147483647, %v4717
    %v6482 = vand.u32 2147483647, %v4718
    %v6483 = vand.u32 2147483647, %v4719
    %v6484 = vand.u32 2147483647, %v4720
    %v6485 = vand.u32 2147483647, %v4721
    %v6486 = vand.u32 2147483647, %v4722
    %v6487 = vand.u32 2147483647, %v4723
    %v6488 = vand.u32 2147483647, %v4724
    %v6489 = vand.u32 2147483647, %v4725
    %v6490 = vand.u32 2147483647, %v4726
    %v6491 = vand.u32 2147483647, %v4727
    %v6492 = vand.u32 2147483647, %v4728
    %v6493 = vand.u32 2147483647, %v4729
    %v6494 = vand.u32 2147483647, %v4730
    %v6495 = vand.u32 2147483647, %v4731
    %v6496 = vand.u32 2147483647, %v4732
    %v6497 = vand.u32 2147483647, %v4733
    %v6498 = vand.u32 2147483647, %v4734
    %v6499 = vand.u32 2147483647, %v4735
    %v6500 = vand.u32 2147483647, %v4736
    %v6501 = vand.u32 2147483647, %v4737
    %v6502 = vand.u32 2147483647, %v4738
    %v6503 = vand.u32 2147483647, %v4739
    %v6504 = vand.u32 2147483647, %v4740
    %v6505 = vand.u32 2147483647, %v4741
    %v6506 = vand.u32 2147483647, %v4742
    %v6507 = vand.u32 2147483647, %v4743
    %v6508 = vand.u32 2147483647, %v4744
    %v6509 = vand.u32 2147483647, %v4745
    %v6510 = vand.u32 2147483647, %v4746
    %v6511 = vand.u32 2147483647, %v4747
    %v6512 = vand.u32 2147483647, %v4748
    %v6513 = vand.u32 2147483647, %v4749
    %v6514 = vand.u32 2147483647, %v6313
    %v6515 = vand.u32 2147483647, %v6314
    %v6516 = vand.u32 2147483647, %v6315
    %v6517 = vand.u32 2147483647, %v6316
    %v6518 = vand.u32 2147483647, %v6317
    %v6519 = vand.u32 2147483647, %v6318
    %v6520 = vand.u32 2147483647, %v6319
    %v6521 = vand.u32 2147483647, %v6320
    %v6522 = vand.u32 2147483647, %v6321
    %v6523 = vand.u32 2147483647, %v6322
    %v6524 = vand.u32 2147483647, %v6323
    %v6525 = vand.u32 2147483647, %v6324
    %v6526 = vand.u32 2147483647, %v6325
    %v6527 = vand.u32 2147483647, %v6326
    %v6528 = vand.u32 2147483647, %v6327
    %v6529 = vand.u32 2147483647, %v6328
    %v6530 = vand.u32 2147483647, %v6329
    %v6531 = vand.u32 2147483647, %v6330
    %v6532 = vand.u32 2147483647, %v6331
    %v6533 = vand.u32 2147483647, %v6332
    %v6534 = vand.u32 2147483647, %v6333
    %v6535 = vand.u32 2147483647, %v6334
    %v6536 = vand.u32 2147483647, %v6335
    %v6537 = vand.u32 2147483647, %v6336
    %v6538 = vand.u32 2147483647, %v6337
    %v6539 = vand.u32 2147483647, %v6338
    %v6540 = vand.u32 2147483647, %v6339
    %v6541 = vand.u32 2147483647, %v6340
    %v6542 = vand.u32 2147483647, %v6341
    %v6543 = vand.u32 2147483647, %v6342
    %v6544 = vand.u32 2147483647, %v6343
    %v6545 = vand.u32 2147483647, %v6344
    %v6546 = vand.u32 2147483647, %v6345
    %v6547 = vand.u32 2147483647, %v6346
    %v6548 = vand.u32 2147483647, %v6347
    %v6549 = vand.u32 2147483647, %v6348
    %v6550 = vand.u32 2147483647, %v6349
    %v6551 = vand.u32 2147483647, %v6350
    %v6552 = vand.u32 2147483647, %v6351
    %v6553 = vand.u32 2147483647, %v6352
    %v6554 = vand.u32 2147483647, %v6353
    %v6555 = vand.u32 2147483647, %v6354
    %v6556 = vand.u32 2147483647, %v6355
    %v6557 = vand.u32 2147483647, %v6356
    %v6558 = vand.u32 2147483647, %v6357
    %v6559 = vand.u32 2147483647, %v6358
    %v6560 = vand.u32 2147483647, %v6359
    %v6561 = vand.u32 2147483647, %v6360
    %v6562 = vand.u32 2147483647, %v6361
    %v6563 = vand.u32 2147483647, %v6362
    %v6564 = vand.u32 2147483647, %v6363
    %v6565 = vand.u32 2147483647, %v6364
    %v6566 = vand.u32 2147483647, %v6365
    %v6567 = vand.u32 2147483647, %v6366
    %v6568 = vand.u32 2147483647, %v6367
    %v6569 = vand.u32 2147483647, %v6368
    %v6570 = vand.u32 2147483647, %v6369
    %v6571 = vand.u32 2147483647, %v6370
    %v6572 = vand.u32 2147483647, %v6371
    %v6573 = vand.u32 2147483647, %v6372
    %v6574 = vand.u32 2147483647, %v6373
    %v6575 = vand.u32 2147483647, %v6374
    %v6576 = vand.u32 2147483647, %v6375
    %v6577 = vand.u32 2147483647, %v6376
    %v6578 = vand.u32 2147483647, %v6377
    %v6579 = vand.u32 2147483647, %v6378
    %v6580 = vand.u32 2147483647, %v6379
    %v6581 = vand.u32 2147483647, %v6380
    %v6582 = vand.u32 2147483647, %v6381
    %v6583 = vand.u32 2147483647, %v6382
    %v6584 = vand.u32 2147483647, %v6383
    %v6585 = vand.u32 2147483647, %v6384
    %v6586 = vand.u32 2147483647, %v6385
    %v6587 = vand.u32 2147483647, %v6386
    %v6588 = vand.u32 2147483647, %v6387
    %v6589 = vand.u32 2147483647, %v6388
    %v6590 = vand.u32 2147483647, %v6389
    %v6591 = vand.u32 2147483647, %v6390
    %v6592 = vand.u32 2147483647, %v6391
    %v6593 = vand.u32 2147483647, %v6392
    %v6594 = vand.u32 2147483647, %v6393
    %v6595 = vand.u32 2147483647, %v6394
    %v6596 = vand.u32 2147483647, %v6395
    %v6597 = vand.u32 2147483647, %v6396
    %v6598 = vand.u32 2147483647, %v6397
    %v6599 = vand.u32 2147483647, %v6398
    %v6600 = vand.u32 2147483647, %v6399
    %v6601 = vand.u32 2147483647, %v6400
    %v6602 = vand.u32 2147483647, %v6401
    %v6603 = vand.u32 2147483647, %v6402
    %v6604 = vand.u32 2147483647, %v6403
    %v6605 = vand.u32 2147483647, %v6404
    %v6606 = vand.u32 2147483647, %v6405
    %v6607 = vand.u32 2147483647, %v6406
    %v6608 = vand.u32 2147483647, %v6407
    %v6609 = vand.u32 2147483647, %v6408
    %v6610 = vand.u32 2147483647, %v6409
    %v6611 = vand.u32 2147483647, %v6410
    %v6612 = vand.u32 2147483647, %v6411
    %v6613 = vand.u32 2147483647, %v6412
    %v6614 = vand.u32 2147483647, %v6413
    %v6615 = vand.u32 2147483647, %v6414
    %v6718 = vrot.slane %v6514, 2
    %v6719 = vrot.slane %v6517, 2
    %v6720 = vsel %vm2050, %v6718, %v6719
    %v6721 = vrot.slane %v6515, 2
    %v6722 = vrot.slane %v6518, 2
    %v6723 = vsel %vm2050, %v6721, %v6722
    %v6724 = vrot.slane %v6516, 2
    %v6725 = vrot.slane %v6519, 2
    %v6726 = vsel %vm2050, %v6724, %v6725
    %v6727 = vrot.slane %v6520, 2
    %v6728 = vsel %vm2050, %v6719, %v6727
    %v6729 = vrot.slane %v6521, 2
    %v6730 = vsel %vm2050, %v6722, %v6729
    %v6731 = vrot.slane %v6522, 2
    %v6732 = vsel %vm2050, %v6725, %v6731
    %v6733 = vrot.slane %v6523, 2
    %v6734 = vsel %vm2050, %v6727, %v6733
    %v6735 = vrot.slane %v6524, 2
    %v6736 = vsel %vm2050, %v6729, %v6735
    %v6737 = vrot.slane %v6525, 2
    %v6738 = vsel %vm2050, %v6731, %v6737
    %v6739 = vrot.slane %v6526, 2
    %v6740 = vsel %vm2050, %v6733, %v6739
    %v6741 = vrot.slane %v6527, 2
    %v6742 = vsel %vm2050, %v6735, %v6741
    %v6743 = vrot.slane %v6528, 2
    %v6744 = vsel %vm2050, %v6737, %v6743
    %v6745 = vrot.slane %v6529, 2
    %v6746 = vsel %vm2050, %v6739, %v6745
    %v6747 = vrot.slane %v6530, 2
    %v6748 = vsel %vm2050, %v6741, %v6747
    %v6749 = vrot.slane %v6531, 2
    %v6750 = vsel %vm2050, %v6743, %v6749
    %v6751 = vrot.slane %v6532, 2
    %v6752 = vsel %vm2050, %v6745, %v6751
    %v6753 = vrot.slane %v6533, 2
    %v6754 = vsel %vm2050, %v6747, %v6753
    %v6755 = vrot.slane %v6534, 2
    %v6756 = vsel %vm2050, %v6749, %v6755
    %v6757 = vrot.slane %v6535, 2
    %v6758 = vsel %vm2050, %v6751, %v6757
    %v6759 = vrot.slane %v6536, 2
    %v6760 = vsel %vm2050, %v6753, %v6759
    %v6761 = vrot.slane %v6537, 2
    %v6762 = vsel %vm2050, %v6755, %v6761
    %v6763 = vrot.slane %v6538, 2
    %v6764 = vsel %vm2050, %v6757, %v6763
    %v6765 = vrot.slane %v6539, 2
    %v6766 = vsel %vm2050, %v6759, %v6765
    %v6767 = vrot.slane %v6540, 2
    %v6768 = vsel %vm2050, %v6761, %v6767
    %v6769 = vrot.slane %v6541, 2
    %v6770 = vsel %vm2050, %v6763, %v6769
    %v6771 = vrot.slane %v6542, 2
    %v6772 = vsel %vm2050, %v6765, %v6771
    %v6773 = vrot.slane %v6543, 2
    %v6774 = vsel %vm2050, %v6767, %v6773
    %v6775 = vrot.slane %v6544, 2
    %v6776 = vsel %vm2050, %v6769, %v6775
    %v6777 = vrot.slane %v6545, 2
    %v6778 = vsel %vm2050, %v6771, %v6777
    %v6779 = vrot.slane %v6546, 2
    %v6780 = vsel %vm2050, %v6773, %v6779
    %v6781 = vrot.slane %v6547, 2
    %v6782 = vsel %vm2050, %v6775, %v6781
    %v6783 = vrot.slane %v6548, 2
    %v6784 = vsel %vm2050, %v6777, %v6783
    %v6785 = vrot.slane %v6549, 2
    %v6786 = vsel %vm2050, %v6779, %v6785
    %v6787 = vrot.slane %v6550, 2
    %v6788 = vsel %vm2050, %v6781, %v6787
    %v6789 = vrot.slane %v6551, 2
    %v6790 = vsel %vm2050, %v6783, %v6789
    %v6791 = vrot.slane %v6552, 2
    %v6792 = vsel %vm2050, %v6785, %v6791
    %v6793 = vrot.slane %v6553, 2
    %v6794 = vsel %vm2050, %v6787, %v6793
    %v6795 = vrot.slane %v6554, 2
    %v6796 = vsel %vm2050, %v6789, %v6795
    %v6797 = vrot.slane %v6555, 2
    %v6798 = vsel %vm2050, %v6791, %v6797
    %v6799 = vrot.slane %v6556, 2
    %v6800 = vsel %vm2050, %v6793, %v6799
    %v6801 = vrot.slane %v6557, 2
    %v6802 = vsel %vm2050, %v6795, %v6801
    %v6803 = vrot.slane %v6558, 2
    %v6804 = vsel %vm2050, %v6797, %v6803
    %v6805 = vrot.slane %v6559, 2
    %v6806 = vsel %vm2050, %v6799, %v6805
    %v6807 = vrot.slane %v6560, 2
    %v6808 = vsel %vm2050, %v6801, %v6807
    %v6809 = vrot.slane %v6561, 2
    %v6810 = vsel %vm2050, %v6803, %v6809
    %v6811 = vrot.slane %v6562, 2
    %v6812 = vsel %vm2050, %v6805, %v6811
    %v6813 = vrot.slane %v6563, 2
    %v6814 = vsel %vm2050, %v6807, %v6813
    %v6815 = vrot.slane %v6564, 2
    %v6816 = vsel %vm2050, %v6809, %v6815
    %v6817 = vrot.slane %v6565, 2
    %v6818 = vsel %vm2050, %v6811, %v6817
    %v6819 = vrot.slane %v6566, 2
    %v6820 = vsel %vm2050, %v6813, %v6819
    %v6821 = vrot.slane %v6567, 2
    %v6822 = vsel %vm2050, %v6815, %v6821
    %v6823 = vrot.slane %v6568, 2
    %v6824 = vsel %vm2050, %v6817, %v6823
    %v6825 = vrot.slane %v6569, 2
    %v6826 = vsel %vm2050, %v6819, %v6825
    %v6827 = vrot.slane %v6570, 2
    %v6828 = vsel %vm2050, %v6821, %v6827
    %v6829 = vrot.slane %v6571, 2
    %v6830 = vsel %vm2050, %v6823, %v6829
    %v6831 = vrot.slane %v6572, 2
    %v6832 = vsel %vm2050, %v6825, %v6831
    %v6833 = vrot.slane %v6573, 2
    %v6834 = vsel %vm2050, %v6827, %v6833
    %v6835 = vrot.slane %v6574, 2
    %v6836 = vsel %vm2050, %v6829, %v6835
    %v6837 = vrot.slane %v6575, 2
    %v6838 = vsel %vm2050, %v6831, %v6837
    %v6839 = vrot.slane %v6576, 2
    %v6840 = vsel %vm2050, %v6833, %v6839
    %v6841 = vrot.slane %v6577, 2
    %v6842 = vsel %vm2050, %v6835, %v6841
    %v6843 = vrot.slane %v6578, 2
    %v6844 = vsel %vm2050, %v6837, %v6843
    %v6845 = vrot.slane %v6579, 2
    %v6846 = vsel %vm2050, %v6839, %v6845
    %v6847 = vrot.slane %v6580, 2
    %v6848 = vsel %vm2050, %v6841, %v6847
    %v6849 = vrot.slane %v6581, 2
    %v6850 = vsel %vm2050, %v6843, %v6849
    %v6851 = vrot.slane %v6582, 2
    %v6852 = vsel %vm2050, %v6845, %v6851
    %v6853 = vrot.slane %v6583, 2
    %v6854 = vsel %vm2050, %v6847, %v6853
    %v6855 = vrot.slane %v6584, 2
    %v6856 = vsel %vm2050, %v6849, %v6855
    %v6857 = vrot.slane %v6585, 2
    %v6858 = vsel %vm2050, %v6851, %v6857
    %v6859 = vrot.slane %v6586, 2
    %v6860 = vsel %vm2050, %v6853, %v6859
    %v6861 = vrot.slane %v6587, 2
    %v6862 = vsel %vm2050, %v6855, %v6861
    %v6863 = vrot.slane %v6588, 2
    %v6864 = vsel %vm2050, %v6857, %v6863
    %v6865 = vrot.slane %v6589, 2
    %v6866 = vsel %vm2050, %v6859, %v6865
    %v6867 = vrot.slane %v6590, 2
    %v6868 = vsel %vm2050, %v6861, %v6867
    %v6869 = vrot.slane %v6591, 2
    %v6870 = vsel %vm2050, %v6863, %v6869
    %v6871 = vrot.slane %v6592, 2
    %v6872 = vsel %vm2050, %v6865, %v6871
    %v6873 = vrot.slane %v6593, 2
    %v6874 = vsel %vm2050, %v6867, %v6873
    %v6875 = vrot.slane %v6594, 2
    %v6876 = vsel %vm2050, %v6869, %v6875
    %v6877 = vrot.slane %v6595, 2
    %v6878 = vsel %vm2050, %v6871, %v6877
    %v6879 = vrot.slane %v6596, 2
    %v6880 = vsel %vm2050, %v6873, %v6879
    %v6881 = vrot.slane %v6597, 2
    %v6882 = vsel %vm2050, %v6875, %v6881
    %v6883 = vrot.slane %v6598, 2
    %v6884 = vsel %vm2050, %v6877, %v6883
    %v6885 = vrot.slane %v6599, 2
    %v6886 = vsel %vm2050, %v6879, %v6885
    %v6887 = vrot.slane %v6600, 2
    %v6888 = vsel %vm2050, %v6881, %v6887
    %v6889 = vrot.slane %v6601, 2
    %v6890 = vsel %vm2050, %v6883, %v6889
    %v6891 = vrot.slane %v6602, 2
    %v6892 = vsel %vm2050, %v6885, %v6891
    %v6893 = vrot.slane %v6603, 2
    %v6894 = vsel %vm2050, %v6887, %v6893
    %v6895 = vrot.slane %v6604, 2
    %v6896 = vsel %vm2050, %v6889, %v6895
    %v6897 = vrot.slane %v6605, 2
    %v6898 = vsel %vm2050, %v6891, %v6897
    %v6899 = vrot.slane %v6606, 2
    %v6900 = vsel %vm2050, %v6893, %v6899
    %v6901 = vrot.slane %v6607, 2
    %v6902 = vsel %vm2050, %v6895, %v6901
    %v6903 = vrot.slane %v6608, 2
    %v6904 = vsel %vm2050, %v6897, %v6903
    %v6905 = vrot.slane %v6609, 2
    %v6906 = vsel %vm2050, %v6899, %v6905
    %v6907 = vrot.slane %v6610, 2
    %v6908 = vsel %vm2050, %v6901, %v6907
    %v6909 = vrot.slane %v6611, 2
    %v6910 = vsel %vm2050, %v6903, %v6909
    %v6911 = vrot.slane %v6612, 2
    %v6912 = vsel %vm2050, %v6905, %v6911
    %v6913 = vrot.slane %v6613, 2
    %v6914 = vsel %vm2050, %v6907, %v6913
    %v6915 = vrot.slane %v6614, 2
    %v6916 = vsel %vm2050, %v6909, %v6915
    %v6917 = vrot.slane %v6615, 2
    %v6918 = vsel %vm2050, %v6911, %v6917
    %6919 = vrot.lane.b32.xlu0 %v6720, 2
    %v6920 = vpop.permute.xlu0 %6919
    %6921 = vrot.lane.b32.xlu0 %v6723, 2
    %v6922 = vpop.permute.xlu0 %6921
    %6923 = vrot.lane.b32.xlu0 %v6726, 2
    %v6924 = vpop.permute.xlu0 %6923
    %6925 = vrot.lane.b32.xlu0 %v6728, 2
    %v6926 = vpop.permute.xlu0 %6925
    %6927 = vrot.lane.b32.xlu0 %v6730, 2
    %v6928 = vpop.permute.xlu0 %6927
    %6929 = vrot.lane.b32.xlu0 %v6732, 2
    %v6930 = vpop.permute.xlu0 %6929
    %6931 = vrot.lane.b32.xlu0 %v6734, 2
    %v6932 = vpop.permute.xlu0 %6931
    %6933 = vrot.lane.b32.xlu0 %v6736, 2
    %v6934 = vpop.permute.xlu0 %6933
    %6935 = vrot.lane.b32.xlu0 %v6738, 2
    %v6936 = vpop.permute.xlu0 %6935
    %6937 = vrot.lane.b32.xlu0 %v6740, 2
    %v6938 = vpop.permute.xlu0 %6937
    %6939 = vrot.lane.b32.xlu0 %v6742, 2
    %v6940 = vpop.permute.xlu0 %6939
    %6941 = vrot.lane.b32.xlu0 %v6744, 2
    %v6942 = vpop.permute.xlu0 %6941
    %6943 = vrot.lane.b32.xlu0 %v6746, 2
    %v6944 = vpop.permute.xlu0 %6943
    %6945 = vrot.lane.b32.xlu0 %v6748, 2
    %v6946 = vpop.permute.xlu0 %6945
    %6947 = vrot.lane.b32.xlu0 %v6750, 2
    %v6948 = vpop.permute.xlu0 %6947
    %6949 = vrot.lane.b32.xlu0 %v6752, 2
    %v6950 = vpop.permute.xlu0 %6949
    %6951 = vrot.lane.b32.xlu0 %v6754, 2
    %v6952 = vpop.permute.xlu0 %6951
    %6953 = vrot.lane.b32.xlu0 %v6756, 2
    %v6954 = vpop.permute.xlu0 %6953
    %6955 = vrot.lane.b32.xlu0 %v6758, 2
    %v6956 = vpop.permute.xlu0 %6955
    %6957 = vrot.lane.b32.xlu0 %v6760, 2
    %v6958 = vpop.permute.xlu0 %6957
    %6959 = vrot.lane.b32.xlu0 %v6762, 2
    %v6960 = vpop.permute.xlu0 %6959
    %6961 = vrot.lane.b32.xlu0 %v6764, 2
    %v6962 = vpop.permute.xlu0 %6961
    %6963 = vrot.lane.b32.xlu0 %v6766, 2
    %v6964 = vpop.permute.xlu0 %6963
    %6965 = vrot.lane.b32.xlu0 %v6768, 2
    %v6966 = vpop.permute.xlu0 %6965
    %6967 = vrot.lane.b32.xlu0 %v6770, 2
    %v6968 = vpop.permute.xlu0 %6967
    %6969 = vrot.lane.b32.xlu0 %v6772, 2
    %v6970 = vpop.permute.xlu0 %6969
    %6971 = vrot.lane.b32.xlu0 %v6774, 2
    %v6972 = vpop.permute.xlu0 %6971
    %6973 = vrot.lane.b32.xlu0 %v6776, 2
    %v6974 = vpop.permute.xlu0 %6973
    %6975 = vrot.lane.b32.xlu0 %v6778, 2
    %v6976 = vpop.permute.xlu0 %6975
    %6977 = vrot.lane.b32.xlu0 %v6780, 2
    %v6978 = vpop.permute.xlu0 %6977
    %6979 = vrot.lane.b32.xlu0 %v6782, 2
    %v6980 = vpop.permute.xlu0 %6979
    %6981 = vrot.lane.b32.xlu0 %v6784, 2
    %v6982 = vpop.permute.xlu0 %6981
    %6983 = vrot.lane.b32.xlu0 %v6786, 2
    %v6984 = vpop.permute.xlu0 %6983
    %6985 = vrot.lane.b32.xlu0 %v6788, 2
    %v6986 = vpop.permute.xlu0 %6985
    %6987 = vrot.lane.b32.xlu0 %v6790, 2
    %v6988 = vpop.permute.xlu0 %6987
    %6989 = vrot.lane.b32.xlu0 %v6792, 2
    %v6990 = vpop.permute.xlu0 %6989
    %6991 = vrot.lane.b32.xlu0 %v6794, 2
    %v6992 = vpop.permute.xlu0 %6991
    %6993 = vrot.lane.b32.xlu0 %v6796, 2
    %v6994 = vpop.permute.xlu0 %6993
    %6995 = vrot.lane.b32.xlu0 %v6798, 2
    %v6996 = vpop.permute.xlu0 %6995
    %6997 = vrot.lane.b32.xlu0 %v6800, 2
    %v6998 = vpop.permute.xlu0 %6997
    %6999 = vrot.lane.b32.xlu0 %v6802, 2
    %v7000 = vpop.permute.xlu0 %6999
    %7001 = vrot.lane.b32.xlu0 %v6804, 2
    %v7002 = vpop.permute.xlu0 %7001
    %7003 = vrot.lane.b32.xlu0 %v6806, 2
    %v7004 = vpop.permute.xlu0 %7003
    %7005 = vrot.lane.b32.xlu0 %v6808, 2
    %v7006 = vpop.permute.xlu0 %7005
    %7007 = vrot.lane.b32.xlu0 %v6810, 2
    %v7008 = vpop.permute.xlu0 %7007
    %7009 = vrot.lane.b32.xlu0 %v6812, 2
    %v7010 = vpop.permute.xlu0 %7009
    %7011 = vrot.lane.b32.xlu0 %v6814, 2
    %v7012 = vpop.permute.xlu0 %7011
    %7013 = vrot.lane.b32.xlu0 %v6816, 2
    %v7014 = vpop.permute.xlu0 %7013
    %7015 = vrot.lane.b32.xlu0 %v6818, 2
    %v7016 = vpop.permute.xlu0 %7015
    %7017 = vrot.lane.b32.xlu0 %v6820, 2
    %v7018 = vpop.permute.xlu0 %7017
    %7019 = vrot.lane.b32.xlu0 %v6822, 2
    %v7020 = vpop.permute.xlu0 %7019
    %7021 = vrot.lane.b32.xlu0 %v6824, 2
    %v7022 = vpop.permute.xlu0 %7021
    %7023 = vrot.lane.b32.xlu0 %v6826, 2
    %v7024 = vpop.permute.xlu0 %7023
    %7025 = vrot.lane.b32.xlu0 %v6828, 2
    %v7026 = vpop.permute.xlu0 %7025
    %7027 = vrot.lane.b32.xlu0 %v6830, 2
    %v7028 = vpop.permute.xlu0 %7027
    %7029 = vrot.lane.b32.xlu0 %v6832, 2
    %v7030 = vpop.permute.xlu0 %7029
    %7031 = vrot.lane.b32.xlu0 %v6834, 2
    %v7032 = vpop.permute.xlu0 %7031
    %7033 = vrot.lane.b32.xlu0 %v6836, 2
    %v7034 = vpop.permute.xlu0 %7033
    %7035 = vrot.lane.b32.xlu0 %v6838, 2
    %v7036 = vpop.permute.xlu0 %7035
    %7037 = vrot.lane.b32.xlu0 %v6840, 2
    %v7038 = vpop.permute.xlu0 %7037
    %7039 = vrot.lane.b32.xlu0 %v6842, 2
    %v7040 = vpop.permute.xlu0 %7039
    %7041 = vrot.lane.b32.xlu0 %v6844, 2
    %v7042 = vpop.permute.xlu0 %7041
    %7043 = vrot.lane.b32.xlu0 %v6846, 2
    %v7044 = vpop.permute.xlu0 %7043
    %7045 = vrot.lane.b32.xlu0 %v6848, 2
    %v7046 = vpop.permute.xlu0 %7045
    %7047 = vrot.lane.b32.xlu0 %v6850, 2
    %v7048 = vpop.permute.xlu0 %7047
    %7049 = vrot.lane.b32.xlu0 %v6852, 2
    %v7050 = vpop.permute.xlu0 %7049
    %7051 = vrot.lane.b32.xlu0 %v6854, 2
    %v7052 = vpop.permute.xlu0 %7051
    %7053 = vrot.lane.b32.xlu0 %v6856, 2
    %v7054 = vpop.permute.xlu0 %7053
    %7055 = vrot.lane.b32.xlu0 %v6858, 2
    %v7056 = vpop.permute.xlu0 %7055
    %7057 = vrot.lane.b32.xlu0 %v6860, 2
    %v7058 = vpop.permute.xlu0 %7057
    %7059 = vrot.lane.b32.xlu0 %v6862, 2
    %v7060 = vpop.permute.xlu0 %7059
    %7061 = vrot.lane.b32.xlu0 %v6864, 2
    %v7062 = vpop.permute.xlu0 %7061
    %7063 = vrot.lane.b32.xlu0 %v6866, 2
    %v7064 = vpop.permute.xlu0 %7063
    %7065 = vrot.lane.b32.xlu0 %v6868, 2
    %v7066 = vpop.permute.xlu0 %7065
    %7067 = vrot.lane.b32.xlu0 %v6870, 2
    %v7068 = vpop.permute.xlu0 %7067
    %7069 = vrot.lane.b32.xlu0 %v6872, 2
    %v7070 = vpop.permute.xlu0 %7069
    %7071 = vrot.lane.b32.xlu0 %v6874, 2
    %v7072 = vpop.permute.xlu0 %7071
    %7073 = vrot.lane.b32.xlu0 %v6876, 2
    %v7074 = vpop.permute.xlu0 %7073
    %7075 = vrot.lane.b32.xlu0 %v6878, 2
    %v7076 = vpop.permute.xlu0 %7075
    %7077 = vrot.lane.b32.xlu0 %v6880, 2
    %v7078 = vpop.permute.xlu0 %7077
    %7079 = vrot.lane.b32.xlu0 %v6882, 2
    %v7080 = vpop.permute.xlu0 %7079
    %7081 = vrot.lane.b32.xlu0 %v6884, 2
    %v7082 = vpop.permute.xlu0 %7081
    %7083 = vrot.lane.b32.xlu0 %v6886, 2
    %v7084 = vpop.permute.xlu0 %7083
    %7085 = vrot.lane.b32.xlu0 %v6888, 2
    %v7086 = vpop.permute.xlu0 %7085
    %7087 = vrot.lane.b32.xlu0 %v6890, 2
    %v7088 = vpop.permute.xlu0 %7087
    %7089 = vrot.lane.b32.xlu0 %v6892, 2
    %v7090 = vpop.permute.xlu0 %7089
    %7091 = vrot.lane.b32.xlu0 %v6894, 2
    %v7092 = vpop.permute.xlu0 %7091
    %7093 = vrot.lane.b32.xlu0 %v6896, 2
    %v7094 = vpop.permute.xlu0 %7093
    %7095 = vrot.lane.b32.xlu0 %v6898, 2
    %v7096 = vpop.permute.xlu0 %7095
    %7097 = vrot.lane.b32.xlu0 %v6900, 2
    %v7098 = vpop.permute.xlu0 %7097
    %7099 = vrot.lane.b32.xlu0 %v6902, 2
    %v7100 = vpop.permute.xlu0 %7099
    %7101 = vrot.lane.b32.xlu0 %v6904, 2
    %v7102 = vpop.permute.xlu0 %7101
    %7103 = vrot.lane.b32.xlu0 %v6906, 2
    %v7104 = vpop.permute.xlu0 %7103
    %7105 = vrot.lane.b32.xlu0 %v6908, 2
    %v7106 = vpop.permute.xlu0 %7105
    %7107 = vrot.lane.b32.xlu0 %v6910, 2
    %v7108 = vpop.permute.xlu0 %7107
    %7109 = vrot.lane.b32.xlu0 %v6912, 2
    %v7110 = vpop.permute.xlu0 %7109
    %7111 = vrot.lane.b32.xlu0 %v6914, 2
    %v7112 = vpop.permute.xlu0 %7111
    %7113 = vrot.lane.b32.xlu0 %v6916, 2
    %v7114 = vpop.permute.xlu0 %7113
    %7115 = vrot.lane.b32.xlu0 %v6918, 2
    %v7116 = vpop.permute.xlu0 %7115
    %v7117 = vsel %vm3372, %v6920, %v6922
    %v7118 = vsel %vm3372, %v6922, %v6924
    %v7119 = vsel %vm3372, %v6926, %v6928
    %v7120 = vsel %vm3372, %v6928, %v6930
    %v7121 = vsel %vm3372, %v6932, %v6934
    %v7122 = vsel %vm3372, %v6934, %v6936
    %v7123 = vsel %vm3372, %v6938, %v6940
    %v7124 = vsel %vm3372, %v6940, %v6942
    %v7125 = vsel %vm3372, %v6944, %v6946
    %v7126 = vsel %vm3372, %v6946, %v6948
    %v7127 = vsel %vm3372, %v6950, %v6952
    %v7128 = vsel %vm3372, %v6952, %v6954
    %v7129 = vsel %vm3372, %v6956, %v6958
    %v7130 = vsel %vm3372, %v6958, %v6960
    %v7131 = vsel %vm3372, %v6962, %v6964
    %v7132 = vsel %vm3372, %v6964, %v6966
    %v7133 = vsel %vm3372, %v6968, %v6970
    %v7134 = vsel %vm3372, %v6970, %v6972
    %v7135 = vsel %vm3372, %v6974, %v6976
    %v7136 = vsel %vm3372, %v6976, %v6978
    %v7137 = vsel %vm3372, %v6980, %v6982
    %v7138 = vsel %vm3372, %v6982, %v6984
    %v7139 = vsel %vm3372, %v6986, %v6988
    %v7140 = vsel %vm3372, %v6988, %v6990
    %v7141 = vsel %vm3372, %v6992, %v6994
    %v7142 = vsel %vm3372, %v6994, %v6996
    %v7143 = vsel %vm3372, %v6998, %v7000
    %v7144 = vsel %vm3372, %v7000, %v7002
    %v7145 = vsel %vm3372, %v7004, %v7006
    %v7146 = vsel %vm3372, %v7006, %v7008
    %v7147 = vsel %vm3372, %v7010, %v7012
    %v7148 = vsel %vm3372, %v7012, %v7014
    %v7149 = vsel %vm3372, %v7016, %v7018
    %v7150 = vsel %vm3372, %v7018, %v7020
    %v7151 = vsel %vm3372, %v7022, %v7024
    %v7152 = vsel %vm3372, %v7024, %v7026
    %v7153 = vsel %vm3372, %v7028, %v7030
    %v7154 = vsel %vm3372, %v7030, %v7032
    %v7155 = vsel %vm3372, %v7034, %v7036
    %v7156 = vsel %vm3372, %v7036, %v7038
    %v7157 = vsel %vm3372, %v7040, %v7042
    %v7158 = vsel %vm3372, %v7042, %v7044
    %v7159 = vsel %vm3372, %v7046, %v7048
    %v7160 = vsel %vm3372, %v7048, %v7050
    %v7161 = vsel %vm3372, %v7052, %v7054
    %v7162 = vsel %vm3372, %v7054, %v7056
    %v7163 = vsel %vm3372, %v7058, %v7060
    %v7164 = vsel %vm3372, %v7060, %v7062
    %v7165 = vsel %vm3372, %v7064, %v7066
    %v7166 = vsel %vm3372, %v7066, %v7068
    %v7167 = vsel %vm3372, %v7070, %v7072
    %v7168 = vsel %vm3372, %v7072, %v7074
    %v7169 = vsel %vm3372, %v7076, %v7078
    %v7170 = vsel %vm3372, %v7078, %v7080
    %v7171 = vsel %vm3372, %v7082, %v7084
    %v7172 = vsel %vm3372, %v7084, %v7086
    %v7173 = vsel %vm3372, %v7088, %v7090
    %v7174 = vsel %vm3372, %v7090, %v7092
    %v7175 = vsel %vm3372, %v7094, %v7096
    %v7176 = vsel %vm3372, %v7096, %v7098
    %v7177 = vsel %vm3372, %v7100, %v7102
    %v7178 = vsel %vm3372, %v7102, %v7104
    %v7179 = vsel %vm3372, %v7106, %v7108
    %v7180 = vsel %vm3372, %v7108, %v7110
    %v7181 = vsel %vm3372, %v7112, %v7114
    %v7182 = vsel %vm3372, %v7114, %v7116
    %v7282 = vadd.f32 %v6415, %v6920
    %v7283 = vadd.f32 %v6416, %v7117
    %v7284 = vadd.f32 %v6417, %v7118
    %v7285 = vadd.f32 %v6418, %v6926
    %v7286 = vadd.f32 %v6419, %v7119
    %v7287 = vadd.f32 %v6420, %v7120
    %v7288 = vadd.f32 %v6421, %v6932
    %v7289 = vadd.f32 %v6422, %v7121
    %v7290 = vadd.f32 %v6423, %v7122
    %v7291 = vadd.f32 %v6424, %v6938
    %v7292 = vadd.f32 %v6425, %v7123
    %v7293 = vadd.f32 %v6426, %v7124
    %v7294 = vadd.f32 %v6427, %v6944
    %v7295 = vadd.f32 %v6428, %v7125
    %v7296 = vadd.f32 %v6429, %v7126
    %v7297 = vadd.f32 %v6430, %v6950
    %v7298 = vadd.f32 %v6431, %v7127
    %v7299 = vadd.f32 %v6432, %v7128
    %v7300 = vadd.f32 %v6433, %v6956
    %v7301 = vadd.f32 %v6434, %v7129
    %v7302 = vadd.f32 %v6435, %v7130
    %v7303 = vadd.f32 %v6436, %v6962
    %v7304 = vadd.f32 %v6437, %v7131
    %v7305 = vadd.f32 %v6438, %v7132
    %v7306 = vadd.f32 %v6439, %v6968
    %v7307 = vadd.f32 %v6440, %v7133
    %v7308 = vadd.f32 %v6441, %v7134
    %v7309 = vadd.f32 %v6442, %v6974
    %v7310 = vadd.f32 %v6443, %v7135
    %v7311 = vadd.f32 %v6444, %v7136
    %v7312 = vadd.f32 %v6445, %v6980
    %v7313 = vadd.f32 %v6446, %v7137
    %v7314 = vadd.f32 %v6447, %v7138
    %v7315 = vadd.f32 %v6448, %v6986
    %v7316 = vadd.f32 %v6449, %v7139
    %v7317 = vadd.f32 %v6450, %v7140
    %v7318 = vadd.f32 %v6451, %v6992
    %v7319 = vadd.f32 %v6452, %v7141
    %v7320 = vadd.f32 %v6453, %v7142
    %v7321 = vadd.f32 %v6454, %v6998
    %v7322 = vadd.f32 %v6455, %v7143
    %v7323 = vadd.f32 %v6456, %v7144
    %v7324 = vadd.f32 %v6457, %v7004
    %v7325 = vadd.f32 %v6458, %v7145
    %v7326 = vadd.f32 %v6459, %v7146
    %v7327 = vadd.f32 %v6460, %v7010
    %v7328 = vadd.f32 %v6461, %v7147
    %v7329 = vadd.f32 %v6462, %v7148
    %v7330 = vadd.f32 %v6463, %v7016
    %v7331 = vadd.f32 %v6464, %v7149
    %v7332 = vadd.f32 %v6465, %v7150
    %v7333 = vadd.f32 %v6466, %v7022
    %v7334 = vadd.f32 %v6467, %v7151
    %v7335 = vadd.f32 %v6468, %v7152
    %v7336 = vadd.f32 %v6469, %v7028
    %v7337 = vadd.f32 %v6470, %v7153
    %v7338 = vadd.f32 %v6471, %v7154
    %v7339 = vadd.f32 %v6472, %v7034
    %v7340 = vadd.f32 %v6473, %v7155
    %v7341 = vadd.f32 %v6474, %v7156
    %v7342 = vadd.f32 %v6475, %v7040
    %v7343 = vadd.f32 %v6476, %v7157
    %v7344 = vadd.f32 %v6477, %v7158
    %v7345 = vadd.f32 %v6478, %v7046
    %v7346 = vadd.f32 %v6479, %v7159
    %v7347 = vadd.f32 %v6480, %v7160
    %v7348 = vadd.f32 %v6481, %v7052
    %v7349 = vadd.f32 %v6482, %v7161
    %v7350 = vadd.f32 %v6483, %v7162
    %v7351 = vadd.f32 %v6484, %v7058
    %v7352 = vadd.f32 %v6485, %v7163
    %v7353 = vadd.f32 %v6486, %v7164
    %v7354 = vadd.f32 %v6487, %v7064
    %v7355 = vadd.f32 %v6488, %v7165
    %v7356 = vadd.f32 %v6489, %v7166
    %v7357 = vadd.f32 %v6490, %v7070
    %v7358 = vadd.f32 %v6491, %v7167
    %v7359 = vadd.f32 %v6492, %v7168
    %v7360 = vadd.f32 %v6493, %v7076
    %v7361 = vadd.f32 %v6494, %v7169
    %v7362 = vadd.f32 %v6495, %v7170
    %v7363 = vadd.f32 %v6496, %v7082
    %v7364 = vadd.f32 %v6497, %v7171
    %v7365 = vadd.f32 %v6498, %v7172
    %v7366 = vadd.f32 %v6499, %v7088
    %v7367 = vadd.f32 %v6500, %v7173
    %v7368 = vadd.f32 %v6501, %v7174
    %v7369 = vadd.f32 %v6502, %v7094
    %v7370 = vadd.f32 %v6503, %v7175
    %v7371 = vadd.f32 %v6504, %v7176
    %v7372 = vadd.f32 %v6505, %v7100
    %v7373 = vadd.f32 %v6506, %v7177
    %v7374 = vadd.f32 %v6507, %v7178
    %v7375 = vadd.f32 %v6508, %v7106
    %v7376 = vadd.f32 %v6509, %v7179
    %v7377 = vadd.f32 %v6510, %v7180
    %v7378 = vadd.f32 %v6511, %v7112
    %v7379 = vadd.f32 %v6512, %v7181
    %v7380 = vadd.f32 %v6513, %v7182
    %vm7381 = vcmp.gt.f32.partialorder %v7282, 100.0
    %vm7382 = vcmp.gt.f32.partialorder %v7283, 100.0
    %vm7383 = vcmp.gt.f32.partialorder %v7284, 100.0
    %vm7384 = vcmp.gt.f32.partialorder %v7285, 100.0
    %vm7385 = vcmp.gt.f32.partialorder %v7286, 100.0
    %vm7386 = vcmp.gt.f32.partialorder %v7287, 100.0
    %vm7387 = vcmp.gt.f32.partialorder %v7288, 100.0
    %vm7388 = vcmp.gt.f32.partialorder %v7289, 100.0
    %vm7389 = vcmp.gt.f32.partialorder %v7290, 100.0
    %vm7390 = vcmp.gt.f32.partialorder %v7291, 100.0
    %vm7391 = vcmp.gt.f32.partialorder %v7292, 100.0
    %vm7392 = vcmp.gt.f32.partialorder %v7293, 100.0
    %vm7393 = vcmp.gt.f32.partialorder %v7294, 100.0
    %vm7394 = vcmp.gt.f32.partialorder %v7295, 100.0
    %vm7395 = vcmp.gt.f32.partialorder %v7296, 100.0
    %vm7396 = vcmp.gt.f32.partialorder %v7297, 100.0
    %vm7397 = vcmp.gt.f32.partialorder %v7298, 100.0
    %vm7398 = vcmp.gt.f32.partialorder %v7299, 100.0
    %vm7399 = vcmp.gt.f32.partialorder %v7300, 100.0
    %vm7400 = vcmp.gt.f32.partialorder %v7301, 100.0
    %vm7401 = vcmp.gt.f32.partialorder %v7302, 100.0
    %vm7402 = vcmp.gt.f32.partialorder %v7303, 100.0
    %vm7403 = vcmp.gt.f32.partialorder %v7304, 100.0
    %vm7404 = vcmp.gt.f32.partialorder %v7305, 100.0
    %vm7405 = vcmp.gt.f32.partialorder %v7306, 100.0
    %vm7406 = vcmp.gt.f32.partialorder %v7307, 100.0
    %vm7407 = vcmp.gt.f32.partialorder %v7308, 100.0
    %vm7408 = vcmp.gt.f32.partialorder %v7309, 100.0
    %vm7409 = vcmp.gt.f32.partialorder %v7310, 100.0
    %vm7410 = vcmp.gt.f32.partialorder %v7311, 100.0
    %vm7411 = vcmp.gt.f32.partialorder %v7312, 100.0
    %vm7412 = vcmp.gt.f32.partialorder %v7313, 100.0
    %vm7413 = vcmp.gt.f32.partialorder %v7314, 100.0
    %vm7414 = vcmp.gt.f32.partialorder %v7315, 100.0
    %vm7415 = vcmp.gt.f32.partialorder %v7316, 100.0
    %vm7416 = vcmp.gt.f32.partialorder %v7317, 100.0
    %vm7417 = vcmp.gt.f32.partialorder %v7318, 100.0
    %vm7418 = vcmp.gt.f32.partialorder %v7319, 100.0
    %vm7419 = vcmp.gt.f32.partialorder %v7320, 100.0
    %vm7420 = vcmp.gt.f32.partialorder %v7321, 100.0
    %vm7421 = vcmp.gt.f32.partialorder %v7322, 100.0
    %vm7422 = vcmp.gt.f32.partialorder %v7323, 100.0
    %vm7423 = vcmp.gt.f32.partialorder %v7324, 100.0
    %vm7424 = vcmp.gt.f32.partialorder %v7325, 100.0
    %vm7425 = vcmp.gt.f32.partialorder %v7326, 100.0
    %vm7426 = vcmp.gt.f32.partialorder %v7327, 100.0
    %vm7427 = vcmp.gt.f32.partialorder %v7328, 100.0
    %vm7428 = vcmp.gt.f32.partialorder %v7329, 100.0
    %vm7429 = vcmp.gt.f32.partialorder %v7330, 100.0
    %vm7430 = vcmp.gt.f32.partialorder %v7331, 100.0
    %vm7431 = vcmp.gt.f32.partialorder %v7332, 100.0
    %vm7432 = vcmp.gt.f32.partialorder %v7333, 100.0
    %vm7433 = vcmp.gt.f32.partialorder %v7334, 100.0
    %vm7434 = vcmp.gt.f32.partialorder %v7335, 100.0
    %vm7435 = vcmp.gt.f32.partialorder %v7336, 100.0
    %vm7436 = vcmp.gt.f32.partialorder %v7337, 100.0
    %vm7437 = vcmp.gt.f32.partialorder %v7338, 100.0
    %vm7438 = vcmp.gt.f32.partialorder %v7339, 100.0
    %vm7439 = vcmp.gt.f32.partialorder %v7340, 100.0
    %vm7440 = vcmp.gt.f32.partialorder %v7341, 100.0
    %vm7441 = vcmp.gt.f32.partialorder %v7342, 100.0
    %vm7442 = vcmp.gt.f32.partialorder %v7343, 100.0
    %vm7443 = vcmp.gt.f32.partialorder %v7344, 100.0
    %vm7444 = vcmp.gt.f32.partialorder %v7345, 100.0
    %vm7445 = vcmp.gt.f32.partialorder %v7346, 100.0
    %vm7446 = vcmp.gt.f32.partialorder %v7347, 100.0
    %vm7447 = vcmp.gt.f32.partialorder %v7348, 100.0
    %vm7448 = vcmp.gt.f32.partialorder %v7349, 100.0
    %vm7449 = vcmp.gt.f32.partialorder %v7350, 100.0
    %vm7450 = vcmp.gt.f32.partialorder %v7351, 100.0
    %vm7451 = vcmp.gt.f32.partialorder %v7352, 100.0
    %vm7452 = vcmp.gt.f32.partialorder %v7353, 100.0
    %vm7453 = vcmp.gt.f32.partialorder %v7354, 100.0
    %vm7454 = vcmp.gt.f32.partialorder %v7355, 100.0
    %vm7455 = vcmp.gt.f32.partialorder %v7356, 100.0
    %vm7456 = vcmp.gt.f32.partialorder %v7357, 100.0
    %vm7457 = vcmp.gt.f32.partialorder %v7358, 100.0
    %vm7458 = vcmp.gt.f32.partialorder %v7359, 100.0
    %vm7459 = vcmp.gt.f32.partialorder %v7360, 100.0
    %vm7460 = vcmp.gt.f32.partialorder %v7361, 100.0
    %vm7461 = vcmp.gt.f32.partialorder %v7362, 100.0
    %vm7462 = vcmp.gt.f32.partialorder %v7363, 100.0
    %vm7463 = vcmp.gt.f32.partialorder %v7364, 100.0
    %vm7464 = vcmp.gt.f32.partialorder %v7365, 100.0
    %vm7465 = vcmp.gt.f32.partialorder %v7366, 100.0
    %vm7466 = vcmp.gt.f32.partialorder %v7367, 100.0
    %vm7467 = vcmp.gt.f32.partialorder %v7368, 100.0
    %vm7468 = vcmp.gt.f32.partialorder %v7369, 100.0
    %vm7469 = vcmp.gt.f32.partialorder %v7370, 100.0
    %vm7470 = vcmp.gt.f32.partialorder %v7371, 100.0
    %vm7471 = vcmp.gt.f32.partialorder %v7372, 100.0
    %vm7472 = vcmp.gt.f32.partialorder %v7373, 100.0
    %vm7473 = vcmp.gt.f32.partialorder %v7374, 100.0
    %vm7474 = vcmp.gt.f32.partialorder %v7375, 100.0
    %vm7475 = vcmp.gt.f32.partialorder %v7376, 100.0
    %vm7476 = vcmp.gt.f32.partialorder %v7377, 100.0
    %vm7477 = vcmp.gt.f32.partialorder %v7378, 100.0
    %vm7478 = vcmp.gt.f32.partialorder %v7379, 100.0
    %vm7479 = vcmp.gt.f32.partialorder %v7380, 100.0
    %v7480 = vsel %vm7381, 255, 0
    %v7481 = vsel %vm7382, 255, 0
    %v7482 = vsel %vm7383, 255, 0
    %v7483 = vsel %vm7384, 255, 0
    %v7484 = vsel %vm7385, 255, 0
    %v7485 = vsel %vm7386, 255, 0
    %v7486 = vsel %vm7387, 255, 0
    %v7487 = vsel %vm7388, 255, 0
    %v7488 = vsel %vm7389, 255, 0
    %v7489 = vsel %vm7390, 255, 0
    %v7490 = vsel %vm7391, 255, 0
    %v7491 = vsel %vm7392, 255, 0
    %v7492 = vsel %vm7393, 255, 0
    %v7493 = vsel %vm7394, 255, 0
    %v7494 = vsel %vm7395, 255, 0
    %v7495 = vsel %vm7396, 255, 0
    %v7496 = vsel %vm7397, 255, 0
    %v7497 = vsel %vm7398, 255, 0
    %v7498 = vsel %vm7399, 255, 0
    %v7499 = vsel %vm7400, 255, 0
    %v7500 = vsel %vm7401, 255, 0
    %v7501 = vsel %vm7402, 255, 0
    %v7502 = vsel %vm7403, 255, 0
    %v7503 = vsel %vm7404, 255, 0
    %v7504 = vsel %vm7405, 255, 0
    %v7505 = vsel %vm7406, 255, 0
    %v7506 = vsel %vm7407, 255, 0
    %v7507 = vsel %vm7408, 255, 0
    %v7508 = vsel %vm7409, 255, 0
    %v7509 = vsel %vm7410, 255, 0
    %v7510 = vsel %vm7411, 255, 0
    %v7511 = vsel %vm7412, 255, 0
    %v7512 = vsel %vm7413, 255, 0
    %v7513 = vsel %vm7414, 255, 0
    %v7514 = vsel %vm7415, 255, 0
    %v7515 = vsel %vm7416, 255, 0
    %v7516 = vsel %vm7417, 255, 0
    %v7517 = vsel %vm7418, 255, 0
    %v7518 = vsel %vm7419, 255, 0
    %v7519 = vsel %vm7420, 255, 0
    %v7520 = vsel %vm7421, 255, 0
    %v7521 = vsel %vm7422, 255, 0
    %v7522 = vsel %vm7423, 255, 0
    %v7523 = vsel %vm7424, 255, 0
    %v7524 = vsel %vm7425, 255, 0
    %v7525 = vsel %vm7426, 255, 0
    %v7526 = vsel %vm7427, 255, 0
    %v7527 = vsel %vm7428, 255, 0
    %v7528 = vsel %vm7429, 255, 0
    %v7529 = vsel %vm7430, 255, 0
    %v7530 = vsel %vm7431, 255, 0
    %v7531 = vsel %vm7432, 255, 0
    %v7532 = vsel %vm7433, 255, 0
    %v7533 = vsel %vm7434, 255, 0
    %v7534 = vsel %vm7435, 255, 0
    %v7535 = vsel %vm7436, 255, 0
    %v7536 = vsel %vm7437, 255, 0
    %v7537 = vsel %vm7438, 255, 0
    %v7538 = vsel %vm7439, 255, 0
    %v7539 = vsel %vm7440, 255, 0
    %v7540 = vsel %vm7441, 255, 0
    %v7541 = vsel %vm7442, 255, 0
    %v7542 = vsel %vm7443, 255, 0
    %v7543 = vsel %vm7444, 255, 0
    %v7544 = vsel %vm7445, 255, 0
    %v7545 = vsel %vm7446, 255, 0
    %v7546 = vsel %vm7447, 255, 0
    %v7547 = vsel %vm7448, 255, 0
    %v7548 = vsel %vm7449, 255, 0
    %v7549 = vsel %vm7450, 255, 0
    %v7550 = vsel %vm7451, 255, 0
    %v7551 = vsel %vm7452, 255, 0
    %v7552 = vsel %vm7453, 255, 0
    %v7553 = vsel %vm7454, 255, 0
    %v7554 = vsel %vm7455, 255, 0
    %v7555 = vsel %vm7456, 255, 0
    %v7556 = vsel %vm7457, 255, 0
    %v7557 = vsel %vm7458, 255, 0
    %v7558 = vsel %vm7459, 255, 0
    %v7559 = vsel %vm7460, 255, 0
    %v7560 = vsel %vm7461, 255, 0
    %v7561 = vsel %vm7462, 255, 0
    %v7562 = vsel %vm7463, 255, 0
    %v7563 = vsel %vm7464, 255, 0
    %v7564 = vsel %vm7465, 255, 0
    %v7565 = vsel %vm7466, 255, 0
    %v7566 = vsel %vm7467, 255, 0
    %v7567 = vsel %vm7468, 255, 0
    %v7568 = vsel %vm7469, 255, 0
    %v7569 = vsel %vm7470, 255, 0
    %v7570 = vsel %vm7471, 255, 0
    %v7571 = vsel %vm7472, 255, 0
    %v7572 = vsel %vm7473, 255, 0
    %v7573 = vsel %vm7474, 255, 0
    %v7574 = vsel %vm7475, 255, 0
    %v7575 = vsel %vm7476, 255, 0
    %v7576 = vsel %vm7477, 255, 0
    %v7577 = vsel %vm7478, 255, 0
    %v7578 = vsel %vm7479, 255, 0
    %v7579 = vpack.c.b16 %v7483, %v7480
    %v7580 = vpack.c.b16 %v7489, %v7486
    %v7581 = vpack.c.b8 %v7580, %v7579
    %v7582 = vpack.c.b16 %v7484, %v7481
    %v7583 = vpack.c.b16 %v7490, %v7487
    %v7584 = vpack.c.b8 %v7583, %v7582
    %v7585 = vpack.c.b16 %v7485, %v7482
    %v7586 = vpack.c.b16 %v7491, %v7488
    %v7587 = vpack.c.b8 %v7586, %v7585
    %v7588 = vpack.c.b16 %v7495, %v7492
    %v7589 = vpack.c.b16 %v7501, %v7498
    %v7590 = vpack.c.b8 %v7589, %v7588
    %v7591 = vpack.c.b16 %v7496, %v7493
    %v7592 = vpack.c.b16 %v7502, %v7499
    %v7593 = vpack.c.b8 %v7592, %v7591
    %v7594 = vpack.c.b16 %v7497, %v7494
    %v7595 = vpack.c.b16 %v7503, %v7500
    %v7596 = vpack.c.b8 %v7595, %v7594
    %v7597 = vpack.c.b16 %v7507, %v7504
    %v7598 = vpack.c.b16 %v7513, %v7510
    %v7599 = vpack.c.b8 %v7598, %v7597
    %v7600 = vpack.c.b16 %v7508, %v7505
    %v7601 = vpack.c.b16 %v7514, %v7511
    %v7602 = vpack.c.b8 %v7601, %v7600
    %v7603 = vpack.c.b16 %v7509, %v7506
    %v7604 = vpack.c.b16 %v7515, %v7512
    %v7605 = vpack.c.b8 %v7604, %v7603
    %v7606 = vpack.c.b16 %v7519, %v7516
    %v7607 = vpack.c.b16 %v7525, %v7522
    %v7608 = vpack.c.b8 %v7607, %v7606
    %v7609 = vpack.c.b16 %v7520, %v7517
    %v7610 = vpack.c.b16 %v7526, %v7523
    %v7611 = vpack.c.b8 %v7610, %v7609
    %v7612 = vpack.c.b16 %v7521, %v7518
    %v7613 = vpack.c.b16 %v7527, %v7524
    %v7614 = vpack.c.b8 %v7613, %v7612
    %v7615 = vpack.c.b16 %v7531, %v7528
    %v7616 = vpack.c.b16 %v7537, %v7534
    %v7617 = vpack.c.b8 %v7616, %v7615
    %v7618 = vpack.c.b16 %v7532, %v7529
    %v7619 = vpack.c.b16 %v7538, %v7535
    %v7620 = vpack.c.b8 %v7619, %v7618
    %v7621 = vpack.c.b16 %v7533, %v7530
    %v7622 = vpack.c.b16 %v7539, %v7536
    %v7623 = vpack.c.b8 %v7622, %v7621
    %v7624 = vpack.c.b16 %v7543, %v7540
    %v7625 = vpack.c.b16 %v7549, %v7546
    %v7626 = vpack.c.b8 %v7625, %v7624
    %v7627 = vpack.c.b16 %v7544, %v7541
    %v7628 = vpack.c.b16 %v7550, %v7547
    %v7629 = vpack.c.b8 %v7628, %v7627
    %v7630 = vpack.c.b16 %v7545, %v7542
    %v7631 = vpack.c.b16 %v7551, %v7548
    %v7632 = vpack.c.b8 %v7631, %v7630
    %v7633 = vpack.c.b16 %v7555, %v7552
    %v7634 = vpack.c.b16 %v7561, %v7558
    %v7635 = vpack.c.b8 %v7634, %v7633
    %v7636 = vpack.c.b16 %v7556, %v7553
    %v7637 = vpack.c.b16 %v7562, %v7559
    %v7638 = vpack.c.b8 %v7637, %v7636
    %v7639 = vpack.c.b16 %v7557, %v7554
    %v7640 = vpack.c.b16 %v7563, %v7560
    %v7641 = vpack.c.b8 %v7640, %v7639
    %v7642 = vpack.c.b16 %v7567, %v7564
    %v7643 = vpack.c.b16 %v7573, %v7570
    %v7644 = vpack.c.b8 %v7643, %v7642
    %v7645 = vpack.c.b16 %v7568, %v7565
    %v7646 = vpack.c.b16 %v7574, %v7571
    %v7647 = vpack.c.b8 %v7646, %v7645
    %v7648 = vpack.c.b16 %v7569, %v7566
    %v7649 = vpack.c.b16 %v7575, %v7572
    %v7650 = vpack.c.b8 %v7649, %v7648
    %v7651 = vpack.c.b16 %v7576, %v7576
    %v7652 = vpack.c.b8 %v7651, %v7651
    %v7653 = vpack.c.b16 %v7577, %v7577
    %v7654 = vpack.c.b8 %v7653, %v7653
    %v7655 = vpack.c.b16 %v7578, %v7578
    %v7656 = vpack.c.b8 %v7655, %v7655
    %vm7657 = vsmask.f32 7680
    %v7659 = vshrl.u32 %v7581, 8
    %v7661 = vshll.u32 %v7581, 24
    %v7663 = vrot.slane %v7661, 1
    %v7664 = vor.u32 %v7659, %v7663
    %v7666 = vshll.u32 %v7590, 24
    %v7668 = vrot.slane %v7666, 1
    %v7669 = vsel %vm7657, %v7664, %v7668
    %v7671 = vshrl.u32 %v7584, 8
    %v7673 = vshll.u32 %v7584, 24
    %v7675 = vrot.slane %v7673, 1
    %v7676 = vor.u32 %v7671, %v7675
    %v7678 = vshll.u32 %v7593, 24
    %v7680 = vrot.slane %v7678, 1
    %v7681 = vsel %vm7657, %v7676, %v7680
    %v7683 = vshrl.u32 %v7587, 8
    %v7685 = vshll.u32 %v7587, 24
    %v7687 = vrot.slane %v7685, 1
    %v7688 = vor.u32 %v7683, %v7687
    %v7690 = vshll.u32 %v7596, 24
    %v7692 = vrot.slane %v7690, 1
    %v7693 = vsel %vm7657, %v7688, %v7692
    %v7694 = vshrl.u32 %v7590, 8
    %v7696 = vor.u32 %v7694, %v7668
    %v7698 = vshll.u32 %v7599, 24
    %v7700 = vrot.slane %v7698, 1
    %v7701 = vsel %vm7657, %v7696, %v7700
    %v7702 = vshrl.u32 %v7593, 8
    %v7704 = vor.u32 %v7702, %v7680
    %v7706 = vshll.u32 %v7602, 24
    %v7708 = vrot.slane %v7706, 1
    %v7709 = vsel %vm7657, %v7704, %v7708
    %v7710 = vshrl.u32 %v7596, 8
    %v7712 = vor.u32 %v7710, %v7692
    %v7714 = vshll.u32 %v7605, 24
    %v7716 = vrot.slane %v7714, 1
    %v7717 = vsel %vm7657, %v7712, %v7716
    %v7718 = vshrl.u32 %v7599, 8
    %v7720 = vor.u32 %v7718, %v7700
    %v7722 = vshll.u32 %v7608, 24
    %v7724 = vrot.slane %v7722, 1
    %v7725 = vsel %vm7657, %v7720, %v7724
    %v7726 = vshrl.u32 %v7602, 8
    %v7728 = vor.u32 %v7726, %v7708
    %v7730 = vshll.u32 %v7611, 24
    %v7732 = vrot.slane %v7730, 1
    %v7733 = vsel %vm7657, %v7728, %v7732
    %v7734 = vshrl.u32 %v7605, 8
    %v7736 = vor.u32 %v7734, %v7716
    %v7738 = vshll.u32 %v7614, 24
    %v7740 = vrot.slane %v7738, 1
    %v7741 = vsel %vm7657, %v7736, %v7740
    %v7742 = vshrl.u32 %v7608, 8
    %v7744 = vor.u32 %v7742, %v7724
    %v7746 = vshll.u32 %v7617, 24
    %v7748 = vrot.slane %v7746, 1
    %v7749 = vsel %vm7657, %v7744, %v7748
    %v7750 = vshrl.u32 %v7611, 8
    %v7752 = vor.u32 %v7750, %v7732
    %v7754 = vshll.u32 %v7620, 24
    %v7756 = vrot.slane %v7754, 1
    %v7757 = vsel %vm7657, %v7752, %v7756
    %v7758 = vshrl.u32 %v7614, 8
    %v7760 = vor.u32 %v7758, %v7740
    %v7762 = vshll.u32 %v7623, 24
    %v7764 = vrot.slane %v7762, 1
    %v7765 = vsel %vm7657, %v7760, %v7764
    %v7766 = vshrl.u32 %v7617, 8
    %v7768 = vor.u32 %v7766, %v7748
    %v7770 = vshll.u32 %v7626, 24
    %v7772 = vrot.slane %v7770, 1
    %v7773 = vsel %vm7657, %v7768, %v7772
    %v7774 = vshrl.u32 %v7620, 8
    %v7776 = vor.u32 %v7774, %v7756
    %v7778 = vshll.u32 %v7629, 24
    %v7780 = vrot.slane %v7778, 1
    %v7781 = vsel %vm7657, %v7776, %v7780
    %v7782 = vshrl.u32 %v7623, 8
    %v7784 = vor.u32 %v7782, %v7764
    %v7786 = vshll.u32 %v7632, 24
    %v7788 = vrot.slane %v7786, 1
    %v7789 = vsel %vm7657, %v7784, %v7788
    %v7790 = vshrl.u32 %v7626, 8
    %v7792 = vor.u32 %v7790, %v7772
    %v7794 = vshll.u32 %v7635, 24
    %v7796 = vrot.slane %v7794, 1
    %v7797 = vsel %vm7657, %v7792, %v7796
    %v7798 = vshrl.u32 %v7629, 8
    %v7800 = vor.u32 %v7798, %v7780
    %v7802 = vshll.u32 %v7638, 24
    %v7804 = vrot.slane %v7802, 1
    %v7805 = vsel %vm7657, %v7800, %v7804
    %v7806 = vshrl.u32 %v7632, 8
    %v7808 = vor.u32 %v7806, %v7788
    %v7810 = vshll.u32 %v7641, 24
    %v7812 = vrot.slane %v7810, 1
    %v7813 = vsel %vm7657, %v7808, %v7812
    %v7814 = vshrl.u32 %v7635, 8
    %v7816 = vor.u32 %v7814, %v7796
    %v7818 = vshll.u32 %v7644, 24
    %v7820 = vrot.slane %v7818, 1
    %v7821 = vsel %vm7657, %v7816, %v7820
    %v7822 = vshrl.u32 %v7638, 8
    %v7824 = vor.u32 %v7822, %v7804
    %v7826 = vshll.u32 %v7647, 24
    %v7828 = vrot.slane %v7826, 1
    %v7829 = vsel %vm7657, %v7824, %v7828
    %v7830 = vshrl.u32 %v7641, 8
    %v7832 = vor.u32 %v7830, %v7812
    %v7834 = vshll.u32 %v7650, 24
    %v7836 = vrot.slane %v7834, 1
    %v7837 = vsel %vm7657, %v7832, %v7836
    %v7838 = vshrl.u32 %v7644, 8
    %v7840 = vor.u32 %v7838, %v7820
    %v7842 = vshll.u32 %v7652, 24
    %v7844 = vrot.slane %v7842, 1
    %v7845 = vsel %vm7657, %v7840, %v7844
    %v7846 = vshrl.u32 %v7647, 8
    %v7848 = vor.u32 %v7846, %v7828
    %v7850 = vshll.u32 %v7654, 24
    %v7852 = vrot.slane %v7850, 1
    %v7853 = vsel %vm7657, %v7848, %v7852
    %v7854 = vshrl.u32 %v7650, 8
    %v7856 = vor.u32 %v7854, %v7836
    %v7858 = vshll.u32 %v7656, 24
    %v7860 = vrot.slane %v7858, 1
    %v7861 = vsel %vm7657, %v7856, %v7860
    %7862 = vrot.lane.b32.xlu0 %v7669, 125
    %v7863 = vpop.permute.xlu0 %7862
    %7864 = vrot.lane.b32.xlu0 %v7681, 125
    %v7865 = vpop.permute.xlu0 %7864
    %7866 = vrot.lane.b32.xlu0 %v7693, 125
    %v7867 = vpop.permute.xlu0 %7866
    %7868 = vrot.lane.b32.xlu0 %v7701, 125
    %v7869 = vpop.permute.xlu0 %7868
    %7870 = vrot.lane.b32.xlu0 %v7709, 125
    %v7871 = vpop.permute.xlu0 %7870
    %7872 = vrot.lane.b32.xlu0 %v7717, 125
    %v7873 = vpop.permute.xlu0 %7872
    %7874 = vrot.lane.b32.xlu0 %v7725, 125
    %v7875 = vpop.permute.xlu0 %7874
    %7876 = vrot.lane.b32.xlu0 %v7733, 125
    %v7877 = vpop.permute.xlu0 %7876
    %7878 = vrot.lane.b32.xlu0 %v7741, 125
    %v7879 = vpop.permute.xlu0 %7878
    %7880 = vrot.lane.b32.xlu0 %v7749, 125
    %v7881 = vpop.permute.xlu0 %7880
    %7882 = vrot.lane.b32.xlu0 %v7757, 125
    %v7883 = vpop.permute.xlu0 %7882
    %7884 = vrot.lane.b32.xlu0 %v7765, 125
    %v7885 = vpop.permute.xlu0 %7884
    %7886 = vrot.lane.b32.xlu0 %v7773, 125
    %v7887 = vpop.permute.xlu0 %7886
    %7888 = vrot.lane.b32.xlu0 %v7781, 125
    %v7889 = vpop.permute.xlu0 %7888
    %7890 = vrot.lane.b32.xlu0 %v7789, 125
    %v7891 = vpop.permute.xlu0 %7890
    %7892 = vrot.lane.b32.xlu0 %v7797, 125
    %v7893 = vpop.permute.xlu0 %7892
    %7894 = vrot.lane.b32.xlu0 %v7805, 125
    %v7895 = vpop.permute.xlu0 %7894
    %7896 = vrot.lane.b32.xlu0 %v7813, 125
    %v7897 = vpop.permute.xlu0 %7896
    %7898 = vrot.lane.b32.xlu0 %v7821, 125
    %v7899 = vpop.permute.xlu0 %7898
    %7900 = vrot.lane.b32.xlu0 %v7829, 125
    %v7901 = vpop.permute.xlu0 %7900
    %7902 = vrot.lane.b32.xlu0 %v7837, 125
    %v7903 = vpop.permute.xlu0 %7902
    %7904 = vrot.lane.b32.xlu0 %v7845, 125
    %v7905 = vpop.permute.xlu0 %7904
    %7906 = vrot.lane.b32.xlu0 %v7853, 125
    %v7907 = vpop.permute.xlu0 %7906
    %7908 = vrot.lane.b32.xlu0 %v7861, 125
    %v7909 = vpop.permute.xlu0 %7908
    %vm7910 = vcmask 1022976
    %v7911 = vsel %vm7910, %v7863, %v7865
    %v7912 = vsel %vm7910, %v7865, %v7867
    %v7913 = vsel %vm7910, %v7869, %v7871
    %v7914 = vsel %vm7910, %v7871, %v7873
    %v7915 = vsel %vm7910, %v7875, %v7877
    %v7916 = vsel %vm7910, %v7877, %v7879
    %v7917 = vsel %vm7910, %v7881, %v7883
    %v7918 = vsel %vm7910, %v7883, %v7885
    %v7919 = vsel %vm7910, %v7887, %v7889
    %v7920 = vsel %vm7910, %v7889, %v7891
    %v7921 = vsel %vm7910, %v7893, %v7895
    %v7922 = vsel %vm7910, %v7895, %v7897
    %v7923 = vsel %vm7910, %v7899, %v7901
    %v7924 = vsel %vm7910, %v7901, %v7903
    %v7925 = vsel %vm7910, %v7905, %v7907
    %v7926 = vsel %vm7910, %v7907, %v7909
    %7927 = vst [vmem:[#allocation2] sm:$0xff] %v7911
    %7928 = vst [vmem:[#allocation2 + $0x8] sm:$0xff] %v7912
    %7929 = vst [vmem:[#allocation2 + $0x10] sm:$0xff] %v7913
    %7930 = vst [vmem:[#allocation2 + $0x18] sm:$0xff] %v7914
    %7931 = vst [vmem:[#allocation2 + $0x20] sm:$0xff] %v7915
    %7932 = vst [vmem:[#allocation2 + $0x28] sm:$0xff] %v7916
    %7933 = vst [vmem:[#allocation2 + $0x30] sm:$0xff] %v7917
    %7934 = vst [vmem:[#allocation2 + $0x38] sm:$0xff] %v7918
    %7935 = vst [vmem:[#allocation2 + $0x40] sm:$0xff] %v7919
    %7936 = vst [vmem:[#allocation2 + $0x48] sm:$0xff] %v7920
    %7937 = vst [vmem:[#allocation2 + $0x50] sm:$0xff] %v7921
    %7938 = vst [vmem:[#allocation2 + $0x58] sm:$0xff] %v7922
    %7939 = vst [vmem:[#allocation2 + $0x60] sm:$0xff] %v7923
    %7940 = vst [vmem:[#allocation2 + $0x68] sm:$0xff] %v7924
    %7941 = vst [vmem:[#allocation2 + $0x70] sm:$0xff] %v7925
    %7942 = vst [vmem:[#allocation2 + $0x78] sm:$0xff] %v7926
    // Predicated region
    $region10: #{patchify_forward.1} parent=1 // pred_check
      _
    $region11: #{patchify_forward.1} parent=1 // pred_check_branch
      %7944 = sbr.rel (0) target = $region13
    $region12: #{patchify_forward.1} parent=1 // pred_region
      %s7946 = ssub.s32 2048, 2048
      %7947 = vsyncadd [#allocation3], %s7946
      %s7948 = sshll.u32 [#allocation2], 4
      %s7949 = int_to_ptr.vmem [resolvable:$true] %s7948
      %7954 = dma.vmem_to_hbm [thread:$0]  %s7949, 2048, %s2, [#allocation3], 256, 256, 16
    $region13: #{patchify_forward.1} parent=1 // pred_fallthru
      _
    // Predicated region
    $region14: #{patchify_forward.1} parent=1 // pred_check
      _
    $region15: #{patchify_forward.1} parent=1 // pred_check_branch
      %7956 = sbr.rel (0) target = $region17
    $region16: #{patchify_forward.1} parent=1 // pred_region
      %7957 = dma.done [#allocation3], 2048
    $region17: #{patchify_forward.1} parent=1 // pred_fallthru
      _
    %7958 = vsyncpa [#allocation3], 1

</llo_original>
